<compile_context>
chip_gen: v7x
topology: tpu7x:2x2x1
jax: 0.10.0
libtpu: 0.0.40
codegen_flags: <defaults>
</compile_context>

<pallas_src>
import jax
import jax.numpy as jnp
from jax.experimental import pallas as pl
from jax.experimental.pallas import tpu as pltpu

DIMS = (784, 520, 320, 240, 120, 10)
NUM_CLASSES = DIMS[-1]
NEG_INF = -1e30


def _round_up(n, m):
    return ((n + m - 1) // m) * m


# Lane-padded (multiple-of-128) widths for each layer's *output*; the first
# layer's contraction dim stays at 784 (it is the full array dim -> no pad).
PAD_OUT = tuple(_round_up(d, 128) for d in DIMS[1:])   # (640, 384, 256, 128, 128)
PAD_IN = (DIMS[0],) + PAD_OUT[:-1]                     # (784, 640, 384, 256, 128)


def mlp_kernel(x_ref,
               w1_ref, b1_ref, w2_ref, b2_ref, w3_ref, b3_ref,
               w4_ref, b4_ref, w5_ref, b5_ref,
               o_ref):
    # In-kernel f32 -> bf16 cast of the input tile (VPU work hidden under the
    # MXU-bound layer-1 matmul; avoids a wrapper-side HBM pad+cast pass).
    h = x_ref[...].astype(jnp.bfloat16)

    # Hidden layers: Linear (bf16 MXU, f32 accumulate) + bias + ReLU in f32.
    for w_ref, b_ref in ((w1_ref, b1_ref), (w2_ref, b2_ref),
                         (w3_ref, b3_ref), (w4_ref, b4_ref)):
        acc = jnp.dot(h, w_ref[...], preferred_element_type=jnp.float32)
        acc = acc + b_ref[...]
        h = jnp.maximum(acc, 0.0).astype(jnp.bfloat16)

    # Output layer (padded to 128 lanes). Padded W5 columns are zero and the
    # padded b5 lanes are pre-set to -1e30 in the wrapper, so this single add
    # also masks the padded logit columns -- no iota / where needed.
    logits = jnp.dot(h, w5_ref[...], preferred_element_type=jnp.float32)
    logits = logits + b5_ref[...]

    # log_softmax along the lane axis (f32). Max over the full padded width is
    # safe: at least one real logit (> -1e30) always exists.
    m = jnp.max(logits, axis=-1, keepdims=True)
    shifted = logits - m
    lse = jnp.log(jnp.sum(jnp.exp(shifted), axis=-1, keepdims=True))
    o_ref[...] = (shifted - lse).astype(o_ref.dtype)


def init_params(key):
    """Deterministic PyTorch-nn.Linear-style init: U(-1/sqrt(fan_in), 1/sqrt(fan_in))."""
    params = []
    for i in range(5):
        fan_in, fan_out = DIMS[i], DIMS[i + 1]
        key, kw, kb = jax.random.split(key, 3)
        bound = 1.0 / jnp.sqrt(float(fan_in))
        w = jax.random.uniform(kw, (fan_in, fan_out), jnp.float32, -bound, bound)
        b = jax.random.uniform(kb, (1, fan_out), jnp.float32, -bound, bound)
        params.extend([w, b])
    return params


def _choose_tile_m(batch):
    """Adaptive batch tile: tiny batches pad only to the 16-row sublane minimum;
    large batches use big (multiple-of-128) tiles so >=2 grid steps exist for
    v7x's two TensorCores and the ~0.35us/step pipeline overhead amortizes."""
    if batch <= 256:
        return max(16, _round_up(batch, 16))
    if batch >= 1024:
        return 512
    return 256


@jax.jit
def neural_net_forward(x, params):
    # x.view(-1, 784)
    x2d = x.reshape(-1, DIMS[0]).astype(jnp.float32)
    B = x2d.shape[0]
    tile_m = _choose_tile_m(B)
    num_tiles = pl.cdiv(B, tile_m)
    b_pad = num_tiles * tile_m

    # Only batch-pad x (f32, K=784 stays unpadded; bf16 cast happens in-kernel).
    x_p = jnp.pad(x2d, ((0, b_pad - B), (0, 0)))

    # Zero-pad weights/biases to lane-aligned shapes (exact for Linear+ReLU).
    # The last bias' padded lanes are set to -1e30 so the padded logit columns
    # are masked by the bias add itself.
    padded_params = []
    for i in range(5):
        w, b = params[2 * i], params[2 * i + 1]
        w_p = jnp.pad(w, ((0, PAD_IN[i] - DIMS[i]),
                          (0, PAD_OUT[i] - DIMS[i + 1]))).astype(jnp.bfloat16)
        pad_val = NEG_INF if i == 4 else 0.0
        b_p = jnp.pad(b, ((0, 0), (0, PAD_OUT[i] - DIMS[i + 1])),
                      constant_values=pad_val).astype(jnp.float32)
        padded_params.extend([w_p, b_p])

    # Full-array blocks for weights/biases (same block every grid step -> VMEM resident).
    weight_specs = [pl.BlockSpec(p.shape, lambda i: (0, 0)) for p in padded_params]

    out = pl.pallas_call(
        mlp_kernel,
        out_shape=jax.ShapeDtypeStruct((b_pad, PAD_OUT[-1]), jnp.float32),
        grid_spec=pltpu.PrefetchScalarGridSpec(
            num_scalar_prefetch=0,
            grid=(num_tiles,),
            in_specs=[pl.BlockSpec((tile_m, DIMS[0]), lambda i: (i, 0))]
                     + weight_specs,
            out_specs=pl.BlockSpec((tile_m, PAD_OUT[-1]), lambda i: (i, 0)),
        ),
        compiler_params=pltpu.CompilerParams(
            dimension_semantics=("parallel",),
            vmem_limit_bytes=32 * 1024 * 1024),
    )(x_p, *padded_params)

    # Strip batch padding and the padded logit lanes.
    return out[:B, :NUM_CLASSES]


def reference_forward(x, params):
    h = x.reshape(-1, DIMS[0]).astype(jnp.float32)
    for i in range(4):
        h = jnp.maximum(h @ params[2 * i] + params[2 * i + 1], 0.0)
    logits = h @ params[8] + params[9]
    return jax.nn.log_softmax(logits, axis=1)


if __name__ == "__main__":
    key = jax.random.PRNGKey(0)
    kp, kx = jax.random.split(key)

    params = init_params(kp)
    # MNIST-style input: (batch, 1, 28, 28) -> view(-1, 784)
    x = jax.random.normal(kx, (8, 1, 28, 28), jnp.float32)

    out = neural_net_forward(x, params)
    out = jax.block_until_ready(out)

    ref = reference_forward(x, params)
    assert out.shape == (8, 10)
    # bf16 matmul inputs (f32 accumulation) -> loosened tolerance vs f32 ref.
    assert jnp.allclose(out, ref, atol=5e-2, rtol=5e-2), "mismatch vs JAX reference"

    print("KERNEL_OK")
</pallas_src>

<mosaic_0001>
module attributes {stable_mosaic.version = 11 : i64} {
  func.func @mlp_kernel(%arg0: i32, %arg1: memref<16x784xf32, #tpu.memory_space<vmem>>, %arg2: memref<784x640xbf16, #tpu.memory_space<vmem>>, %arg3: memref<1x640xf32, #tpu.memory_space<vmem>>, %arg4: memref<640x384xbf16, #tpu.memory_space<vmem>>, %arg5: memref<1x384xf32, #tpu.memory_space<vmem>>, %arg6: memref<384x256xbf16, #tpu.memory_space<vmem>>, %arg7: memref<1x256xf32, #tpu.memory_space<vmem>>, %arg8: memref<256x128xbf16, #tpu.memory_space<vmem>>, %arg9: memref<1x128xf32, #tpu.memory_space<vmem>>, %arg10: memref<128x128xbf16, #tpu.memory_space<vmem>>, %arg11: memref<1x128xf32, #tpu.memory_space<vmem>>, %arg12: memref<16x128xf32, #tpu.memory_space<vmem>>) attributes {dimension_semantics = [#tpu.dimension_semantics<parallel>], iteration_bounds = array<i64: 1>, scalar_prefetch = 0 : i64, scratch_operands = 0 : i64, tpu.core_type = #tpu.core_type<tc>, window_params = [{transform_indices = @transform_0, window_bounds = array<i64: 16, 784>}, {pipeline_mode = #tpu.pipeline_mode<synchronous>, transform_indices = @transform_1, window_bounds = array<i64: 784, 640>}, {pipeline_mode = #tpu.pipeline_mode<synchronous>, transform_indices = @transform_2, window_bounds = array<i64: 1, 640>}, {pipeline_mode = #tpu.pipeline_mode<synchronous>, transform_indices = @transform_3, window_bounds = array<i64: 640, 384>}, {pipeline_mode = #tpu.pipeline_mode<synchronous>, transform_indices = @transform_4, window_bounds = array<i64: 1, 384>}, {pipeline_mode = #tpu.pipeline_mode<synchronous>, transform_indices = @transform_5, window_bounds = array<i64: 384, 256>}, {pipeline_mode = #tpu.pipeline_mode<synchronous>, transform_indices = @transform_6, window_bounds = array<i64: 1, 256>}, {pipeline_mode = #tpu.pipeline_mode<synchronous>, transform_indices = @transform_7, window_bounds = array<i64: 256, 128>}, {pipeline_mode = #tpu.pipeline_mode<synchronous>, transform_indices = @transform_8, window_bounds = array<i64: 1, 128>}, {pipeline_mode = #tpu.pipeline_mode<synchronous>, transform_indices = @transform_9, window_bounds = array<i64: 128, 128>}, {pipeline_mode = #tpu.pipeline_mode<synchronous>, transform_indices = @transform_10, window_bounds = array<i64: 1, 128>}, {transform_indices = @transform_11, window_bounds = array<i64: 16, 128>}]} {
    %c0 = arith.constant 0 : index
    %c0_0 = arith.constant 0 : index
    %0 = vector.load %arg1[%c0, %c0_0] : memref<16x784xf32, #tpu.memory_space<vmem>>, vector<16x784xf32>
    %1 = arith.truncf %0 : vector<16x784xf32> to vector<16x784xbf16>
    %c0_1 = arith.constant 0 : index
    %c0_2 = arith.constant 0 : index
    %2 = vector.load %arg2[%c0_1, %c0_2] : memref<784x640xbf16, #tpu.memory_space<vmem>>, vector<784x640xbf16>
    %cst = arith.constant dense<0.000000e+00> : vector<16x640xf32>
    %3 = tpu.matmul %1, %2, %cst {dimension_numbers = #tpu.dot_dimension_numbers<[1], [0], [0], [1], [0, 0, 1, 1], [], []>} : vector<16x784xbf16>, vector<784x640xbf16>, vector<16x640xf32> -> vector<16x640xf32>
    %c0_3 = arith.constant 0 : index
    %c0_4 = arith.constant 0 : index
    %4 = vector.load %arg3[%c0_3, %c0_4] : memref<1x640xf32, #tpu.memory_space<vmem>>, vector<1x640xf32>
    %5 = vector.broadcast %4 : vector<1x640xf32> to vector<16x640xf32>
    %6 = arith.addf %3, %5 : vector<16x640xf32>
    %cst_5 = arith.constant 0.000000e+00 : f32
    %7 = vector.broadcast %cst_5 : f32 to vector<16x640xf32>
    %8 = arith.maximumf %6, %7 : vector<16x640xf32>
    %9 = arith.truncf %8 : vector<16x640xf32> to vector<16x640xbf16>
    %c0_6 = arith.constant 0 : index
    %c0_7 = arith.constant 0 : index
    %10 = vector.load %arg4[%c0_6, %c0_7] : memref<640x384xbf16, #tpu.memory_space<vmem>>, vector<640x384xbf16>
    %cst_8 = arith.constant dense<0.000000e+00> : vector<16x384xf32>
    %11 = tpu.matmul %9, %10, %cst_8 {dimension_numbers = #tpu.dot_dimension_numbers<[1], [0], [0], [1], [0, 0, 1, 1], [], []>} : vector<16x640xbf16>, vector<640x384xbf16>, vector<16x384xf32> -> vector<16x384xf32>
    %c0_9 = arith.constant 0 : index
    %c0_10 = arith.constant 0 : index
    %12 = vector.load %arg5[%c0_9, %c0_10] : memref<1x384xf32, #tpu.memory_space<vmem>>, vector<1x384xf32>
    %13 = vector.broadcast %12 : vector<1x384xf32> to vector<16x384xf32>
    %14 = arith.addf %11, %13 : vector<16x384xf32>
    %cst_11 = arith.constant 0.000000e+00 : f32
    %15 = vector.broadcast %cst_11 : f32 to vector<16x384xf32>
    %16 = arith.maximumf %14, %15 : vector<16x384xf32>
    %17 = arith.truncf %16 : vector<16x384xf32> to vector<16x384xbf16>
    %c0_12 = arith.constant 0 : index
    %c0_13 = arith.constant 0 : index
    %18 = vector.load %arg6[%c0_12, %c0_13] : memref<384x256xbf16, #tpu.memory_space<vmem>>, vector<384x256xbf16>
    %cst_14 = arith.constant dense<0.000000e+00> : vector<16x256xf32>
    %19 = tpu.matmul %17, %18, %cst_14 {dimension_numbers = #tpu.dot_dimension_numbers<[1], [0], [0], [1], [0, 0, 1, 1], [], []>} : vector<16x384xbf16>, vector<384x256xbf16>, vector<16x256xf32> -> vector<16x256xf32>
    %c0_15 = arith.constant 0 : index
    %c0_16 = arith.constant 0 : index
    %20 = vector.load %arg7[%c0_15, %c0_16] : memref<1x256xf32, #tpu.memory_space<vmem>>, vector<1x256xf32>
    %21 = vector.broadcast %20 : vector<1x256xf32> to vector<16x256xf32>
    %22 = arith.addf %19, %21 : vector<16x256xf32>
    %cst_17 = arith.constant 0.000000e+00 : f32
    %23 = vector.broadcast %cst_17 : f32 to vector<16x256xf32>
    %24 = arith.maximumf %22, %23 : vector<16x256xf32>
    %25 = arith.truncf %24 : vector<16x256xf32> to vector<16x256xbf16>
    %c0_18 = arith.constant 0 : index
    %c0_19 = arith.constant 0 : index
    %26 = vector.load %arg8[%c0_18, %c0_19] : memref<256x128xbf16, #tpu.memory_space<vmem>>, vector<256x128xbf16>
    %cst_20 = arith.constant dense<0.000000e+00> : vector<16x128xf32>
    %27 = tpu.matmul %25, %26, %cst_20 {dimension_numbers = #tpu.dot_dimension_numbers<[1], [0], [0], [1], [0, 0, 1, 1], [], []>} : vector<16x256xbf16>, vector<256x128xbf16>, vector<16x128xf32> -> vector<16x128xf32>
    %c0_21 = arith.constant 0 : index
    %c0_22 = arith.constant 0 : index
    %28 = vector.load %arg9[%c0_21, %c0_22] : memref<1x128xf32, #tpu.memory_space<vmem>>, vector<1x128xf32>
    %29 = vector.broadcast %28 : vector<1x128xf32> to vector<16x128xf32>
    %30 = arith.addf %27, %29 : vector<16x128xf32>
    %cst_23 = arith.constant 0.000000e+00 : f32
    %31 = vector.broadcast %cst_23 : f32 to vector<16x128xf32>
    %32 = arith.maximumf %30, %31 : vector<16x128xf32>
    %33 = arith.truncf %32 : vector<16x128xf32> to vector<16x128xbf16>
    %c0_24 = arith.constant 0 : index
    %c0_25 = arith.constant 0 : index
    %34 = vector.load %arg10[%c0_24, %c0_25] : memref<128x128xbf16, #tpu.memory_space<vmem>>, vector<128x128xbf16>
    %cst_26 = arith.constant dense<0.000000e+00> : vector<16x128xf32>
    %35 = tpu.matmul %33, %34, %cst_26 {dimension_numbers = #tpu.dot_dimension_numbers<[1], [0], [0], [1], [0, 0, 1, 1], [], []>} : vector<16x128xbf16>, vector<128x128xbf16>, vector<16x128xf32> -> vector<16x128xf32>
    %c0_27 = arith.constant 0 : index
    %c0_28 = arith.constant 0 : index
    %36 = vector.load %arg11[%c0_27, %c0_28] : memref<1x128xf32, #tpu.memory_space<vmem>>, vector<1x128xf32>
    %37 = vector.broadcast %36 : vector<1x128xf32> to vector<16x128xf32>
    %38 = arith.addf %35, %37 : vector<16x128xf32>
    %cst_29 = arith.constant dense<0xFF800000> : vector<16xf32>
    %39 = vector.multi_reduction <maximumf>, %38, %cst_29 [1] : vector<16x128xf32> to vector<16xf32>
    %40 = vector.shape_cast %39 : vector<16xf32> to vector<16x1xf32>
    %41 = vector.broadcast %40 : vector<16x1xf32> to vector<16x128xf32>
    %42 = arith.subf %38, %41 : vector<16x128xf32>
    %43 = math.exp %42 : vector<16x128xf32>
    %cst_30 = arith.constant dense<0.000000e+00> : vector<16xf32>
    %44 = vector.multi_reduction <add>, %43, %cst_30 [1] : vector<16x128xf32> to vector<16xf32>
    %45 = vector.shape_cast %44 : vector<16xf32> to vector<16x1xf32>
    %46 = math.log %45 : vector<16x1xf32>
    %47 = vector.broadcast %46 : vector<16x1xf32> to vector<16x128xf32>
    %48 = arith.subf %42, %47 : vector<16x128xf32>
    %c0_31 = arith.constant 0 : index
    %c0_32 = arith.constant 0 : index
    %49 = vector.load %arg12[%c0_31, %c0_32] : memref<16x128xf32, #tpu.memory_space<vmem>>, vector<16x128xf32>
    tpu.vector_store %arg12[%c0_31, %c0_32], %48 {strides = array<i32>} : memref<16x128xf32, #tpu.memory_space<vmem>>, vector<16x128xf32>,
    return
  }
  func.func @transform_0(%arg0: i32) -> (i32, i32) {
    %c0_i32 = arith.constant 0 : i32
    %c0_i32_0 = arith.constant 0 : i32
    return %arg0, %c0_i32 : i32, i32
  }
  func.func @transform_1(%arg0: i32) -> (i32, i32) {
    %c0_i32 = arith.constant 0 : i32
    %c0_i32_0 = arith.constant 0 : i32
    %c0_i32_1 = arith.constant 0 : i32
    return %c0_i32, %c0_i32_0 : i32, i32
  }
  func.func @transform_2(%arg0: i32) -> (i32, i32) {
    %c0_i32 = arith.constant 0 : i32
    %c0_i32_0 = arith.constant 0 : i32
    %c0_i32_1 = arith.constant 0 : i32
    return %c0_i32, %c0_i32_0 : i32, i32
  }
  func.func @transform_3(%arg0: i32) -> (i32, i32) {
    %c0_i32 = arith.constant 0 : i32
    %c0_i32_0 = arith.constant 0 : i32
    %c0_i32_1 = arith.constant 0 : i32
    return %c0_i32, %c0_i32_0 : i32, i32
  }
  func.func @transform_4(%arg0: i32) -> (i32, i32) {
    %c0_i32 = arith.constant 0 : i32
    %c0_i32_0 = arith.constant 0 : i32
    %c0_i32_1 = arith.constant 0 : i32
    return %c0_i32, %c0_i32_0 : i32, i32
  }
  func.func @transform_5(%arg0: i32) -> (i32, i32) {
    %c0_i32 = arith.constant 0 : i32
    %c0_i32_0 = arith.constant 0 : i32
    %c0_i32_1 = arith.constant 0 : i32
    return %c0_i32, %c0_i32_0 : i32, i32
  }
  func.func @transform_6(%arg0: i32) -> (i32, i32) {
    %c0_i32 = arith.constant 0 : i32
    %c0_i32_0 = arith.constant 0 : i32
    %c0_i32_1 = arith.constant 0 : i32
    return %c0_i32, %c0_i32_0 : i32, i32
  }
  func.func @transform_7(%arg0: i32) -> (i32, i32) {
    %c0_i32 = arith.constant 0 : i32
    %c0_i32_0 = arith.constant 0 : i32
    %c0_i32_1 = arith.constant 0 : i32
    return %c0_i32, %c0_i32_0 : i32, i32
  }
  func.func @transform_8(%arg0: i32) -> (i32, i32) {
    %c0_i32 = arith.constant 0 : i32
    %c0_i32_0 = arith.constant 0 : i32
    %c0_i32_1 = arith.constant 0 : i32
    return %c0_i32, %c0_i32_0 : i32, i32
  }
  func.func @transform_9(%arg0: i32) -> (i32, i32) {
    %c0_i32 = arith.constant 0 : i32
    %c0_i32_0 = arith.constant 0 : i32
    %c0_i32_1 = arith.constant 0 : i32
    return %c0_i32, %c0_i32_0 : i32, i32
  }
  func.func @transform_10(%arg0: i32) -> (i32, i32) {
    %c0_i32 = arith.constant 0 : i32
    %c0_i32_0 = arith.constant 0 : i32
    %c0_i32_1 = arith.constant 0 : i32
    return %c0_i32, %c0_i32_0 : i32, i32
  }
  func.func @transform_11(%arg0: i32) -> (i32, i32) {
    %c0_i32 = arith.constant 0 : i32
    %c0_i32_0 = arith.constant 0 : i32
    return %arg0, %c0_i32 : i32, i32
  }
}

</mosaic_0001>

<llo_original>
// kernel: neural_net_forward.1
$region0: #{neural_net_forward.1}
  #allocation0 [shape = 'u32[]', space=smem, size = 0x4, offset = 0x4, fixed_abs, tag = 'smem constant byte address 0x4 - core index']
  #allocation1 [shape = 'u32[144,128]{1,0:T(1,128)}', space=vmem, size = 0x12000, scoped, tag = 'internal scratch']
  %s0 = inlined_call_operand.vmem [shape: f32[16,784], index: 0, kind: input, shape index: {}]
  %s1 = inlined_call_operand.vmem [shape: bf16[784,640], index: 1, kind: input, shape index: {}]
  %s2 = inlined_call_operand.vmem [shape: f32[1,640], index: 2, kind: input, shape index: {}]
  %s3 = inlined_call_operand.vmem [shape: bf16[640,384], index: 3, kind: input, shape index: {}]
  %s4 = inlined_call_operand.vmem [shape: f32[1,384], index: 4, kind: input, shape index: {}]
  %s5 = inlined_call_operand.vmem [shape: bf16[384,256], index: 5, kind: input, shape index: {}]
  %s6 = inlined_call_operand.vmem [shape: f32[1,256], index: 6, kind: input, shape index: {}]
  %s7 = inlined_call_operand.vmem [shape: bf16[256,128], index: 7, kind: input, shape index: {}]
  %s8 = inlined_call_operand.vmem [shape: f32[1,128], index: 8, kind: input, shape index: {}]
  %s9 = inlined_call_operand.vmem [shape: bf16[128,128], index: 9, kind: input, shape index: {}]
  %s10 = inlined_call_operand.vmem [shape: f32[1,128], index: 10, kind: input, shape index: {}]
  %s11 = inlined_call_operand.vmem [shape: f32[16,128], index: 11, kind: output, shape index: {}]
  %s12 = sld [smem:[#allocation0]]
  $region54: #{neural_net_forward.1} parent=0
    _
  %s14 = ssub.s32 1, %s12
  %s15 = scalar_select 0, %s14, %s12
  // Predicated region
  $region2: #{neural_net_forward.1} parent=0 // pred_check
    _
  $region3: #{neural_net_forward.1} parent=0 // pred_check_branch
    %17 = sbr.rel (0) target = $region5
  $region4: #{neural_net_forward.1} parent=0 // pred_region
    _
  $region5: #{neural_net_forward.1} parent=0 // pred_fallthru
    _
  // Predicated region
  $region6: #{neural_net_forward.1} parent=0 // pred_check
    _
  $region7: #{neural_net_forward.1} parent=0 // pred_check_branch
    %19 = sbr.rel (0) target = $region9
  $region8: #{neural_net_forward.1} parent=0 // pred_region
    _
  $region9: #{neural_net_forward.1} parent=0 // pred_fallthru
    _
  // Predicated region
  $region10: #{neural_net_forward.1} parent=0 // pred_check
    _
  $region11: #{neural_net_forward.1} parent=0 // pred_check_branch
    %21 = sbr.rel (0) target = $region13
  $region12: #{neural_net_forward.1} parent=0 // pred_region
    _
  $region13: #{neural_net_forward.1} parent=0 // pred_fallthru
    _
  // Predicated region
  $region14: #{neural_net_forward.1} parent=0 // pred_check
    _
  $region15: #{neural_net_forward.1} parent=0 // pred_check_branch
    %23 = sbr.rel (0) target = $region17
  $region16: #{neural_net_forward.1} parent=0 // pred_region
    _
  $region17: #{neural_net_forward.1} parent=0 // pred_fallthru
    _
  // Predicated region
  $region18: #{neural_net_forward.1} parent=0 // pred_check
    _
  $region19: #{neural_net_forward.1} parent=0 // pred_check_branch
    %25 = sbr.rel (0) target = $region21
  $region20: #{neural_net_forward.1} parent=0 // pred_region
    _
  $region21: #{neural_net_forward.1} parent=0 // pred_fallthru
    _
  // Predicated region
  $region22: #{neural_net_forward.1} parent=0 // pred_check
    _
  $region23: #{neural_net_forward.1} parent=0 // pred_check_branch
    %27 = sbr.rel (0) target = $region25
  $region24: #{neural_net_forward.1} parent=0 // pred_region
    _
  $region25: #{neural_net_forward.1} parent=0 // pred_fallthru
    _
  // Predicated region
  $region26: #{neural_net_forward.1} parent=0 // pred_check
    _
  $region27: #{neural_net_forward.1} parent=0 // pred_check_branch
    %29 = sbr.rel (0) target = $region29
  $region28: #{neural_net_forward.1} parent=0 // pred_region
    _
  $region29: #{neural_net_forward.1} parent=0 // pred_fallthru
    _
  // Predicated region
  $region30: #{neural_net_forward.1} parent=0 // pred_check
    _
  $region31: #{neural_net_forward.1} parent=0 // pred_check_branch
    %31 = sbr.rel (0) target = $region33
  $region32: #{neural_net_forward.1} parent=0 // pred_region
    _
  $region33: #{neural_net_forward.1} parent=0 // pred_fallthru
    _
  // Predicated region
  $region34: #{neural_net_forward.1} parent=0 // pred_check
    _
  $region35: #{neural_net_forward.1} parent=0 // pred_check_branch
    %33 = sbr.rel (0) target = $region37
  $region36: #{neural_net_forward.1} parent=0 // pred_region
    _
  $region37: #{neural_net_forward.1} parent=0 // pred_fallthru
    _
  // Predicated region
  $region38: #{neural_net_forward.1} parent=0 // pred_check
    _
  $region39: #{neural_net_forward.1} parent=0 // pred_check_branch
    %35 = sbr.rel (0) target = $region41
  $region40: #{neural_net_forward.1} parent=0 // pred_region
    _
  $region41: #{neural_net_forward.1} parent=0 // pred_fallthru
    _
  // Predicated region
  $region42: #{neural_net_forward.1} parent=0 // pred_check
    _
  $region43: #{neural_net_forward.1} parent=0 // pred_check_branch
    %37 = sbr.rel (0) target = $region45
  $region44: #{neural_net_forward.1} parent=0 // pred_region
    _
  $region45: #{neural_net_forward.1} parent=0 // pred_fallthru
    _
  %v39 = vld [vmem:[%s0] sm:$0xff]
  %v40 = vld [vmem:[%s0 + $0x8] sm:$0xff]
  %v41 = vld [vmem:[%s0 + $0x10] sm:$0xff]
  %v42 = vld [vmem:[%s0 + $0x18] sm:$0xff]
  %v43 = vld [vmem:[%s0 + $0x20] sm:$0xff]
  %v44 = vld [vmem:[%s0 + $0x28] sm:$0xff]
  %v45 = vld [vmem:[%s0 + $0x30] sm:$0xff]
  %v46 = vld [vmem:[%s0 + $0x38] sm:$0xff]
  %v47 = vld [vmem:[%s0 + $0x40] sm:$0xff]
  %v48 = vld [vmem:[%s0 + $0x48] sm:$0xff]
  %v49 = vld [vmem:[%s0 + $0x50] sm:$0xff]
  %v50 = vld [vmem:[%s0 + $0x58] sm:$0xff]
  %v51 = vld [vmem:[%s0 + $0x60] sm:$0xff]
  %v52 = vld [vmem:[%s0 + $0x68] sm:$0xff]
  %v53 = vpack.c.bf16 %v46, %v39
  %v54 = vpack.c.bf16 %v47, %v40
  %v55 = vpack.c.bf16 %v48, %v41
  %v56 = vpack.c.bf16 %v49, %v42
  %v57 = vpack.c.bf16 %v50, %v43
  %v58 = vpack.c.bf16 %v51, %v44
  %v59 = vpack.c.bf16 %v52, %v45
  %v60 = vld [vmem:[%s1] sm:$0xff]
  %v61 = vld [vmem:[%s1 + $0x8] sm:$0xff]
  %v62 = vld [vmem:[%s1 + $0x10] sm:$0xf]
  %v63 = vld [vmem:[%s1 + $0x14] sm:$0xff]
  %v64 = vld [vmem:[%s1 + $0x1c] sm:$0xff]
  %v65 = vld [vmem:[%s1 + $0x24] sm:$0xf]
  %v66 = vld [vmem:[%s1 + $0x28] sm:$0xff]
  %v67 = vld [vmem:[%s1 + $0x30] sm:$0xff]
  %v68 = vld [vmem:[%s1 + $0x38] sm:$0xf]
  %v69 = vld [vmem:[%s1 + $0x3c] sm:$0xff]
  %v70 = vld [vmem:[%s1 + $0x44] sm:$0xff]
  %v71 = vld [vmem:[%s1 + $0x4c] sm:$0xf]
  %v72 = vld [vmem:[%s1 + $0x50] sm:$0xff]
  %v73 = vld [vmem:[%s1 + $0x58] sm:$0xff]
  %v74 = vld [vmem:[%s1 + $0x60] sm:$0xf]
  %v75 = vld [vmem:[%s1 + $0x64] sm:$0xff]
  %v76 = vld [vmem:[%s1 + $0x6c] sm:$0xff]
  %v77 = vld [vmem:[%s1 + $0x74] sm:$0xf]
  %v78 = vld [vmem:[%s1 + $0x78] sm:$0xff]
  %v79 = vld [vmem:[%s1 + $0x80] sm:$0xff]
  %v80 = vld [vmem:[%s1 + $0x88] sm:$0xf]
  %v81 = vld [vmem:[%s1 + $0x8c] sm:$0xff]
  %v82 = vld [vmem:[%s1 + $0x94] sm:$0xff]
  %v83 = vld [vmem:[%s1 + $0x9c] sm:$0xf]
  %v84 = vld [vmem:[%s1 + $0xa0] sm:$0xff]
  %v85 = vld [vmem:[%s1 + $0xa8] sm:$0xff]
  %v86 = vld [vmem:[%s1 + $0xb0] sm:$0xf]
  %v87 = vld [vmem:[%s1 + $0xb4] sm:$0xff]
  %v88 = vld [vmem:[%s1 + $0xbc] sm:$0xff]
  %v89 = vld [vmem:[%s1 + $0xc4] sm:$0xf]
  %v90 = vld [vmem:[%s1 + $0xc8] sm:$0xff]
  %v91 = vld [vmem:[%s1 + $0xd0] sm:$0xff]
  %v92 = vld [vmem:[%s1 + $0xd8] sm:$0xf]
  %v93 = vld [vmem:[%s1 + $0xdc] sm:$0xff]
  %v94 = vld [vmem:[%s1 + $0xe4] sm:$0xff]
  %v95 = vld [vmem:[%s1 + $0xec] sm:$0xf]
  %v96 = vld [vmem:[%s1 + $0xf0] sm:$0xff]
  %v97 = vld [vmem:[%s1 + $0xf8] sm:$0xff]
  %v98 = vld [vmem:[%s1 + $0x100] sm:$0xf]
  %v99 = vld [vmem:[%s1 + $0x104] sm:$0xff]
  %v100 = vld [vmem:[%s1 + $0x10c] sm:$0xff]
  %v101 = vld [vmem:[%s1 + $0x114] sm:$0xf]
  %v102 = vld [vmem:[%s1 + $0x118] sm:$0xff]
  %v103 = vld [vmem:[%s1 + $0x120] sm:$0xff]
  %v104 = vld [vmem:[%s1 + $0x128] sm:$0xf]
  %v105 = vld [vmem:[%s1 + $0x12c] sm:$0xff]
  %v106 = vld [vmem:[%s1 + $0x134] sm:$0xff]
  %v107 = vld [vmem:[%s1 + $0x13c] sm:$0xf]
  %v108 = vld [vmem:[%s1 + $0x140] sm:$0xff]
  %v109 = vld [vmem:[%s1 + $0x148] sm:$0xff]
  %v110 = vld [vmem:[%s1 + $0x150] sm:$0xf]
  %v111 = vld [vmem:[%s1 + $0x154] sm:$0xff]
  %v112 = vld [vmem:[%s1 + $0x15c] sm:$0xff]
  %v113 = vld [vmem:[%s1 + $0x164] sm:$0xf]
  %v114 = vld [vmem:[%s1 + $0x168] sm:$0xff]
  %v115 = vld [vmem:[%s1 + $0x170] sm:$0xff]
  %v116 = vld [vmem:[%s1 + $0x178] sm:$0xf]
  %v117 = vld [vmem:[%s1 + $0x17c] sm:$0xff]
  %v118 = vld [vmem:[%s1 + $0x184] sm:$0xff]
  %v119 = vld [vmem:[%s1 + $0x18c] sm:$0xf]
  %v120 = vld [vmem:[%s1 + $0x190] sm:$0xff]
  %v121 = vld [vmem:[%s1 + $0x198] sm:$0xff]
  %v122 = vld [vmem:[%s1 + $0x1a0] sm:$0xf]
  %v123 = vld [vmem:[%s1 + $0x1a4] sm:$0xff]
  %v124 = vld [vmem:[%s1 + $0x1ac] sm:$0xff]
  %v125 = vld [vmem:[%s1 + $0x1b4] sm:$0xf]
  %v126 = vld [vmem:[%s1 + $0x1b8] sm:$0xff]
  %v127 = vld [vmem:[%s1 + $0x1c0] sm:$0xff]
  %v128 = vld [vmem:[%s1 + $0x1c8] sm:$0xf]
  %v129 = vld [vmem:[%s1 + $0x1cc] sm:$0xff]
  %v130 = vld [vmem:[%s1 + $0x1d4] sm:$0xff]
  %v131 = vld [vmem:[%s1 + $0x1dc] sm:$0xf]
  %v132 = vld [vmem:[%s1 + $0x1e0] sm:$0xff]
  %v133 = vld [vmem:[%s1 + $0x1e8] sm:$0xff]
  %v134 = vld [vmem:[%s1 + $0x1f0] sm:$0xf]
  %v135 = vld [vmem:[%s1 + $0x1f4] sm:$0xff]
  %v136 = vld [vmem:[%s1 + $0x1fc] sm:$0xff]
  %v137 = vld [vmem:[%s1 + $0x204] sm:$0xf]
  %v138 = vld [vmem:[%s1 + $0x208] sm:$0xff]
  %v139 = vld [vmem:[%s1 + $0x210] sm:$0xff]
  %v140 = vld [vmem:[%s1 + $0x218] sm:$0xf]
  %v141 = vld [vmem:[%s1 + $0x21c] sm:$0xff]
  %v142 = vld [vmem:[%s1 + $0x224] sm:$0xff]
  %v143 = vld [vmem:[%s1 + $0x22c] sm:$0xf]
  %v144 = vld [vmem:[%s1 + $0x230] sm:$0xff]
  %v145 = vld [vmem:[%s1 + $0x238] sm:$0xff]
  %v146 = vld [vmem:[%s1 + $0x240] sm:$0xf]
  %v147 = vld [vmem:[%s1 + $0x244] sm:$0xff]
  %v148 = vld [vmem:[%s1 + $0x24c] sm:$0xff]
  %v149 = vld [vmem:[%s1 + $0x254] sm:$0xf]
  %v150 = vld [vmem:[%s1 + $0x258] sm:$0xff]
  %v151 = vld [vmem:[%s1 + $0x260] sm:$0xff]
  %v152 = vld [vmem:[%s1 + $0x268] sm:$0xf]
  %v153 = vld [vmem:[%s1 + $0x26c] sm:$0xff]
  %v154 = vld [vmem:[%s1 + $0x274] sm:$0xff]
  %v155 = vld [vmem:[%s1 + $0x27c] sm:$0xf]
  %v156 = vld [vmem:[%s1 + $0x280] sm:$0xff]
  %v157 = vld [vmem:[%s1 + $0x288] sm:$0xff]
  %v158 = vld [vmem:[%s1 + $0x290] sm:$0xf]
  %v159 = vld [vmem:[%s1 + $0x294] sm:$0xff]
  %v160 = vld [vmem:[%s1 + $0x29c] sm:$0xff]
  %v161 = vld [vmem:[%s1 + $0x2a4] sm:$0xf]
  %v162 = vld [vmem:[%s1 + $0x2a8] sm:$0xff]
  %v163 = vld [vmem:[%s1 + $0x2b0] sm:$0xff]
  %v164 = vld [vmem:[%s1 + $0x2b8] sm:$0xf]
  %v165 = vld [vmem:[%s1 + $0x2bc] sm:$0xff]
  %v166 = vld [vmem:[%s1 + $0x2c4] sm:$0xff]
  %v167 = vld [vmem:[%s1 + $0x2cc] sm:$0xf]
  %v168 = vld [vmem:[%s1 + $0x2d0] sm:$0xff]
  %v169 = vld [vmem:[%s1 + $0x2d8] sm:$0xff]
  %v170 = vld [vmem:[%s1 + $0x2e0] sm:$0xf]
  %v171 = vld [vmem:[%s1 + $0x2e4] sm:$0xff]
  %v172 = vld [vmem:[%s1 + $0x2ec] sm:$0xff]
  %v173 = vld [vmem:[%s1 + $0x2f4] sm:$0xf]
  %v174 = vld [vmem:[%s1 + $0x2f8] sm:$0xff]
  %v175 = vld [vmem:[%s1 + $0x300] sm:$0xff]
  %v176 = vld [vmem:[%s1 + $0x308] sm:$0xf]
  %v177 = vld [vmem:[%s1 + $0x30c] sm:$0xff]
  %v178 = vld [vmem:[%s1 + $0x314] sm:$0xff]
  %v179 = vld [vmem:[%s1 + $0x31c] sm:$0xf]
  %v180 = vld [vmem:[%s1 + $0x320] sm:$0xff]
  %v181 = vld [vmem:[%s1 + $0x328] sm:$0xff]
  %v182 = vld [vmem:[%s1 + $0x330] sm:$0xf]
  %v183 = vld [vmem:[%s1 + $0x334] sm:$0xff]
  %v184 = vld [vmem:[%s1 + $0x33c] sm:$0xff]
  %v185 = vld [vmem:[%s1 + $0x344] sm:$0xf]
  %v186 = vld [vmem:[%s1 + $0x348] sm:$0xff]
  %v187 = vld [vmem:[%s1 + $0x350] sm:$0xff]
  %v188 = vld [vmem:[%s1 + $0x358] sm:$0xf]
  %v189 = vld [vmem:[%s1 + $0x35c] sm:$0xff]
  %v190 = vld [vmem:[%s1 + $0x364] sm:$0xff]
  %v191 = vld [vmem:[%s1 + $0x36c] sm:$0xf]
  %v192 = vld [vmem:[%s1 + $0x370] sm:$0xff]
  %v193 = vld [vmem:[%s1 + $0x378] sm:$0xff]
  %v194 = vld [vmem:[%s1 + $0x380] sm:$0xf]
  %v195 = vld [vmem:[%s1 + $0x384] sm:$0xff]
  %v196 = vld [vmem:[%s1 + $0x38c] sm:$0xff]
  %v197 = vld [vmem:[%s1 + $0x394] sm:$0xf]
  %v198 = vld [vmem:[%s1 + $0x398] sm:$0xff]
  %v199 = vld [vmem:[%s1 + $0x3a0] sm:$0xff]
  %v200 = vld [vmem:[%s1 + $0x3a8] sm:$0xf]
  %v201 = vld [vmem:[%s1 + $0x3ac] sm:$0xff]
  %v202 = vld [vmem:[%s1 + $0x3b4] sm:$0xff]
  %v203 = vld [vmem:[%s1 + $0x3bc] sm:$0xf]
  %v204 = vld [vmem:[%s1 + $0x3c0] sm:$0xff]
  %v205 = vld [vmem:[%s1 + $0x3c8] sm:$0xff]
  %v206 = vld [vmem:[%s1 + $0x3d0] sm:$0xf]
  %v207 = vld [vmem:[%s1 + $0x3d4] sm:$0xff]
  %v208 = vld [vmem:[%s1 + $0x3dc] sm:$0xff]
  %v209 = vld [vmem:[%s1 + $0x3e4] sm:$0xf]
  %v210 = vld [vmem:[%s1 + $0x3e8] sm:$0xff]
  %v211 = vld [vmem:[%s1 + $0x3f0] sm:$0xff]
  %v212 = vld [vmem:[%s1 + $0x3f8] sm:$0xf]
  %v213 = vld [vmem:[%s1 + $0x3fc] sm:$0xff]
  %v214 = vld [vmem:[%s1 + $0x404] sm:$0xff]
  %v215 = vld [vmem:[%s1 + $0x40c] sm:$0xf]
  %v216 = vld [vmem:[%s1 + $0x410] sm:$0xff]
  %v217 = vld [vmem:[%s1 + $0x418] sm:$0xff]
  %v218 = vld [vmem:[%s1 + $0x420] sm:$0xf]
  %v219 = vld [vmem:[%s1 + $0x424] sm:$0xff]
  %v220 = vld [vmem:[%s1 + $0x42c] sm:$0xff]
  %v221 = vld [vmem:[%s1 + $0x434] sm:$0xf]
  %v222 = vld [vmem:[%s1 + $0x438] sm:$0xff]
  %v223 = vld [vmem:[%s1 + $0x440] sm:$0xff]
  %v224 = vld [vmem:[%s1 + $0x448] sm:$0xf]
  %v225 = vld [vmem:[%s1 + $0x44c] sm:$0xff]
  %v226 = vld [vmem:[%s1 + $0x454] sm:$0xff]
  %v227 = vld [vmem:[%s1 + $0x45c] sm:$0xf]
  %v228 = vld [vmem:[%s1 + $0x460] sm:$0xff]
  %v229 = vld [vmem:[%s1 + $0x468] sm:$0xff]
  %v230 = vld [vmem:[%s1 + $0x470] sm:$0xf]
  %v231 = vld [vmem:[%s1 + $0x474] sm:$0xff]
  %v232 = vld [vmem:[%s1 + $0x47c] sm:$0xff]
  %v233 = vld [vmem:[%s1 + $0x484] sm:$0xf]
  %v234 = vld [vmem:[%s1 + $0x488] sm:$0xff]
  %v235 = vld [vmem:[%s1 + $0x490] sm:$0xff]
  %v236 = vld [vmem:[%s1 + $0x498] sm:$0xf]
  %v237 = vld [vmem:[%s1 + $0x49c] sm:$0xff]
  %v238 = vld [vmem:[%s1 + $0x4a4] sm:$0xff]
  %v239 = vld [vmem:[%s1 + $0x4ac] sm:$0xf]
  %v240 = vld [vmem:[%s1 + $0x4b0] sm:$0xff]
  %v241 = vld [vmem:[%s1 + $0x4b8] sm:$0xff]
  %v242 = vld [vmem:[%s1 + $0x4c0] sm:$0xf]
  %v243 = vld [vmem:[%s1 + $0x4c4] sm:$0xff]
  %v244 = vld [vmem:[%s1 + $0x4cc] sm:$0xff]
  %v245 = vld [vmem:[%s1 + $0x4d4] sm:$0xf]
  %v246 = vld [vmem:[%s1 + $0x4d8] sm:$0xff]
  %v247 = vld [vmem:[%s1 + $0x4e0] sm:$0xff]
  %v248 = vld [vmem:[%s1 + $0x4e8] sm:$0xf]
  %v249 = vld [vmem:[%s1 + $0x4ec] sm:$0xff]
  %v250 = vld [vmem:[%s1 + $0x4f4] sm:$0xff]
  %v251 = vld [vmem:[%s1 + $0x4fc] sm:$0xf]
  %v252 = vld [vmem:[%s1 + $0x500] sm:$0xff]
  %v253 = vld [vmem:[%s1 + $0x508] sm:$0xff]
  %v254 = vld [vmem:[%s1 + $0x510] sm:$0xf]
  %v255 = vld [vmem:[%s1 + $0x514] sm:$0xff]
  %v256 = vld [vmem:[%s1 + $0x51c] sm:$0xff]
  %v257 = vld [vmem:[%s1 + $0x524] sm:$0xf]
  %v258 = vld [vmem:[%s1 + $0x528] sm:$0xff]
  %v259 = vld [vmem:[%s1 + $0x530] sm:$0xff]
  %v260 = vld [vmem:[%s1 + $0x538] sm:$0xf]
  %v261 = vld [vmem:[%s1 + $0x53c] sm:$0xff]
  %v262 = vld [vmem:[%s1 + $0x544] sm:$0xff]
  %v263 = vld [vmem:[%s1 + $0x54c] sm:$0xf]
  %v264 = vld [vmem:[%s1 + $0x550] sm:$0xff]
  %v265 = vld [vmem:[%s1 + $0x558] sm:$0xff]
  %v266 = vld [vmem:[%s1 + $0x560] sm:$0xf]
  %v267 = vld [vmem:[%s1 + $0x564] sm:$0xff]
  %v268 = vld [vmem:[%s1 + $0x56c] sm:$0xff]
  %v269 = vld [vmem:[%s1 + $0x574] sm:$0xf]
  %v270 = vld [vmem:[%s1 + $0x578] sm:$0xff]
  %v271 = vld [vmem:[%s1 + $0x580] sm:$0xff]
  %v272 = vld [vmem:[%s1 + $0x588] sm:$0xf]
  %v273 = vld [vmem:[%s1 + $0x58c] sm:$0xff]
  %v274 = vld [vmem:[%s1 + $0x594] sm:$0xff]
  %v275 = vld [vmem:[%s1 + $0x59c] sm:$0xf]
  %v276 = vld [vmem:[%s1 + $0x5a0] sm:$0xff]
  %v277 = vld [vmem:[%s1 + $0x5a8] sm:$0xff]
  %v278 = vld [vmem:[%s1 + $0x5b0] sm:$0xf]
  %v279 = vld [vmem:[%s1 + $0x5b4] sm:$0xff]
  %v280 = vld [vmem:[%s1 + $0x5bc] sm:$0xff]
  %v281 = vld [vmem:[%s1 + $0x5c4] sm:$0xf]
  %v282 = vld [vmem:[%s1 + $0x5c8] sm:$0xff]
  %v283 = vld [vmem:[%s1 + $0x5d0] sm:$0xff]
  %v284 = vld [vmem:[%s1 + $0x5d8] sm:$0xf]
  %v285 = vld [vmem:[%s1 + $0x5dc] sm:$0xff]
  %v286 = vld [vmem:[%s1 + $0x5e4] sm:$0xff]
  %v287 = vld [vmem:[%s1 + $0x5ec] sm:$0xf]
  %v288 = vld [vmem:[%s1 + $0x5f0] sm:$0xff]
  %v289 = vld [vmem:[%s1 + $0x5f8] sm:$0xff]
  %v290 = vld [vmem:[%s1 + $0x600] sm:$0xf]
  %v291 = vld [vmem:[%s1 + $0x604] sm:$0xff]
  %v292 = vld [vmem:[%s1 + $0x60c] sm:$0xff]
  %v293 = vld [vmem:[%s1 + $0x614] sm:$0xf]
  %v294 = vld [vmem:[%s1 + $0x618] sm:$0xff]
  %v295 = vld [vmem:[%s1 + $0x620] sm:$0xff]
  %v296 = vld [vmem:[%s1 + $0x628] sm:$0xf]
  %v297 = vld [vmem:[%s1 + $0x62c] sm:$0xff]
  %v298 = vld [vmem:[%s1 + $0x634] sm:$0xff]
  %v299 = vld [vmem:[%s1 + $0x63c] sm:$0xf]
  %v300 = vld [vmem:[%s1 + $0x640] sm:$0xff]
  %v301 = vld [vmem:[%s1 + $0x648] sm:$0xff]
  %v302 = vld [vmem:[%s1 + $0x650] sm:$0xf]
  %v303 = vld [vmem:[%s1 + $0x654] sm:$0xff]
  %v304 = vld [vmem:[%s1 + $0x65c] sm:$0xff]
  %v305 = vld [vmem:[%s1 + $0x664] sm:$0xf]
  %v306 = vld [vmem:[%s1 + $0x668] sm:$0xff]
  %v307 = vld [vmem:[%s1 + $0x670] sm:$0xff]
  %v308 = vld [vmem:[%s1 + $0x678] sm:$0xf]
  %v309 = vld [vmem:[%s1 + $0x67c] sm:$0xff]
  %v310 = vld [vmem:[%s1 + $0x684] sm:$0xff]
  %v311 = vld [vmem:[%s1 + $0x68c] sm:$0xf]
  %v312 = vld [vmem:[%s1 + $0x690] sm:$0xff]
  %v313 = vld [vmem:[%s1 + $0x698] sm:$0xff]
  %v314 = vld [vmem:[%s1 + $0x6a0] sm:$0xf]
  %v315 = vld [vmem:[%s1 + $0x6a4] sm:$0xff]
  %v316 = vld [vmem:[%s1 + $0x6ac] sm:$0xff]
  %v317 = vld [vmem:[%s1 + $0x6b4] sm:$0xf]
  %v318 = vld [vmem:[%s1 + $0x6b8] sm:$0xff]
  %v319 = vld [vmem:[%s1 + $0x6c0] sm:$0xff]
  %v320 = vld [vmem:[%s1 + $0x6c8] sm:$0xf]
  %v321 = vld [vmem:[%s1 + $0x6cc] sm:$0xff]
  %v322 = vld [vmem:[%s1 + $0x6d4] sm:$0xff]
  %v323 = vld [vmem:[%s1 + $0x6dc] sm:$0xf]
  %v324 = vld [vmem:[%s1 + $0x6e0] sm:$0xff]
  %v325 = vld [vmem:[%s1 + $0x6e8] sm:$0xff]
  %v326 = vld [vmem:[%s1 + $0x6f0] sm:$0xf]
  %v327 = vld [vmem:[%s1 + $0x6f4] sm:$0xff]
  %v328 = vld [vmem:[%s1 + $0x6fc] sm:$0xff]
  %v329 = vld [vmem:[%s1 + $0x704] sm:$0xf]
  %v330 = vld [vmem:[%s1 + $0x708] sm:$0xff]
  %v331 = vld [vmem:[%s1 + $0x710] sm:$0xff]
  %v332 = vld [vmem:[%s1 + $0x718] sm:$0xf]
  %v333 = vld [vmem:[%s1 + $0x71c] sm:$0xff]
  %v334 = vld [vmem:[%s1 + $0x724] sm:$0xff]
  %v335 = vld [vmem:[%s1 + $0x72c] sm:$0xf]
  %v336 = vld [vmem:[%s1 + $0x730] sm:$0xff]
  %v337 = vld [vmem:[%s1 + $0x738] sm:$0xff]
  %v338 = vld [vmem:[%s1 + $0x740] sm:$0xf]
  %v339 = vld [vmem:[%s1 + $0x744] sm:$0xff]
  %v340 = vld [vmem:[%s1 + $0x74c] sm:$0xff]
  %v341 = vld [vmem:[%s1 + $0x754] sm:$0xf]
  %v342 = vld [vmem:[%s1 + $0x758] sm:$0xff]
  %v343 = vld [vmem:[%s1 + $0x760] sm:$0xff]
  %v344 = vld [vmem:[%s1 + $0x768] sm:$0xf]
  %v345 = vld [vmem:[%s1 + $0x76c] sm:$0xff]
  %v346 = vld [vmem:[%s1 + $0x774] sm:$0xff]
  %v347 = vld [vmem:[%s1 + $0x77c] sm:$0xf]
  %v348 = vld [vmem:[%s1 + $0x780] sm:$0xff]
  %v349 = vld [vmem:[%s1 + $0x788] sm:$0xff]
  %v350 = vld [vmem:[%s1 + $0x790] sm:$0xf]
  %v351 = vld [vmem:[%s1 + $0x794] sm:$0xff]
  %v352 = vld [vmem:[%s1 + $0x79c] sm:$0xff]
  %v353 = vld [vmem:[%s1 + $0x7a4] sm:$0xf]
  %v354 = vld [vmem:[%s2] sm:$0x1f]
  %v356 = vlaneseq
  %v357 = vshrl.u32 %v356, 7
  %v358 = vsub.s32 0, %v357
  %v359 = vrot.slane %v354, %v358
  %v360 = vlaneseq
  %v361 = vshrl.u32 %v360, 7
  %v362 = vsub.s32 1, %v361
  %v363 = vrot.slane %v354, %v362
  %v364 = vlaneseq
  %v365 = vshrl.u32 %v364, 7
  %v366 = vsub.s32 2, %v365
  %v367 = vrot.slane %v354, %v366
  %v368 = vlaneseq
  %v369 = vshrl.u32 %v368, 7
  %v370 = vsub.s32 3, %v369
  %v371 = vrot.slane %v354, %v370
  %v372 = vlaneseq
  %v373 = vshrl.u32 %v372, 7
  %v374 = vsub.s32 4, %v373
  %v375 = vrot.slane %v354, %v374
  %v675 = vunpack.c.l.b16 %v60
  %v676 = vunpack.c.h.b16 %v60
  %v677 = vunpack.c.l.b16 %v61
  %v678 = vunpack.c.h.b16 %v61
  %v679 = vunpack.c.l.b16 %v62
  %v680 = vunpack.c.l.b16 %v63
  %v681 = vunpack.c.h.b16 %v63
  %v682 = vunpack.c.l.b16 %v64
  %v683 = vunpack.c.h.b16 %v64
  %v684 = vunpack.c.l.b16 %v65
  %v685 = vunpack.c.l.b16 %v66
  %v686 = vunpack.c.h.b16 %v66
  %v687 = vunpack.c.l.b16 %v67
  %v688 = vunpack.c.h.b16 %v67
  %v689 = vunpack.c.l.b16 %v68
  %v690 = vunpack.c.l.b16 %v69
  %v691 = vunpack.c.h.b16 %v69
  %v692 = vunpack.c.l.b16 %v70
  %v693 = vunpack.c.h.b16 %v70
  %v694 = vunpack.c.l.b16 %v71
  %v695 = vunpack.c.l.b16 %v72
  %v696 = vunpack.c.h.b16 %v72
  %v697 = vunpack.c.l.b16 %v73
  %v698 = vunpack.c.h.b16 %v73
  %v699 = vunpack.c.l.b16 %v74
  %v700 = vunpack.c.l.b16 %v75
  %v701 = vunpack.c.h.b16 %v75
  %v702 = vunpack.c.l.b16 %v76
  %v703 = vunpack.c.h.b16 %v76
  %v704 = vunpack.c.l.b16 %v77
  %v705 = vunpack.c.l.b16 %v78
  %v706 = vunpack.c.h.b16 %v78
  %v707 = vunpack.c.l.b16 %v79
  %v708 = vunpack.c.h.b16 %v79
  %v709 = vunpack.c.l.b16 %v80
  %v710 = vunpack.c.l.b16 %v81
  %v711 = vunpack.c.h.b16 %v81
  %v712 = vunpack.c.l.b16 %v82
  %v713 = vunpack.c.h.b16 %v82
  %v714 = vunpack.c.l.b16 %v83
  %v715 = vunpack.c.l.b16 %v84
  %v716 = vunpack.c.h.b16 %v84
  %v717 = vunpack.c.l.b16 %v85
  %v718 = vunpack.c.h.b16 %v85
  %v719 = vunpack.c.l.b16 %v86
  %v720 = vunpack.c.l.b16 %v87
  %v721 = vunpack.c.h.b16 %v87
  %v722 = vunpack.c.l.b16 %v88
  %v723 = vunpack.c.h.b16 %v88
  %v724 = vunpack.c.l.b16 %v89
  %v725 = vunpack.c.l.b16 %v90
  %v726 = vunpack.c.h.b16 %v90
  %v727 = vunpack.c.l.b16 %v91
  %v728 = vunpack.c.h.b16 %v91
  %v729 = vunpack.c.l.b16 %v92
  %v730 = vunpack.c.l.b16 %v93
  %v731 = vunpack.c.h.b16 %v93
  %v732 = vunpack.c.l.b16 %v94
  %v733 = vunpack.c.h.b16 %v94
  %v734 = vunpack.c.l.b16 %v95
  %v735 = vunpack.c.l.b16 %v96
  %v736 = vunpack.c.h.b16 %v96
  %v737 = vunpack.c.l.b16 %v97
  %v738 = vunpack.c.h.b16 %v97
  %v739 = vunpack.c.l.b16 %v98
  %v740 = vunpack.c.l.b16 %v99
  %v741 = vunpack.c.h.b16 %v99
  %v742 = vunpack.c.l.b16 %v100
  %v743 = vunpack.c.h.b16 %v100
  %v744 = vunpack.c.l.b16 %v101
  %v745 = vunpack.c.l.b16 %v102
  %v746 = vunpack.c.h.b16 %v102
  %v747 = vunpack.c.l.b16 %v103
  %v748 = vunpack.c.h.b16 %v103
  %v749 = vunpack.c.l.b16 %v104
  %v750 = vunpack.c.l.b16 %v105
  %v751 = vunpack.c.h.b16 %v105
  %v752 = vunpack.c.l.b16 %v106
  %v753 = vunpack.c.h.b16 %v106
  %v754 = vunpack.c.l.b16 %v107
  %v755 = vunpack.c.l.b16 %v108
  %v756 = vunpack.c.h.b16 %v108
  %v757 = vunpack.c.l.b16 %v109
  %v758 = vunpack.c.h.b16 %v109
  %v759 = vunpack.c.l.b16 %v110
  %v760 = vunpack.c.l.b16 %v111
  %v761 = vunpack.c.h.b16 %v111
  %v762 = vunpack.c.l.b16 %v112
  %v763 = vunpack.c.h.b16 %v112
  %v764 = vunpack.c.l.b16 %v113
  %v765 = vunpack.c.l.b16 %v114
  %v766 = vunpack.c.h.b16 %v114
  %v767 = vunpack.c.l.b16 %v115
  %v768 = vunpack.c.h.b16 %v115
  %v769 = vunpack.c.l.b16 %v116
  %v770 = vunpack.c.l.b16 %v117
  %v771 = vunpack.c.h.b16 %v117
  %v772 = vunpack.c.l.b16 %v118
  %v773 = vunpack.c.h.b16 %v118
  %v774 = vunpack.c.l.b16 %v119
  %v775 = vunpack.c.l.b16 %v120
  %v776 = vunpack.c.h.b16 %v120
  %v777 = vunpack.c.l.b16 %v121
  %v778 = vunpack.c.h.b16 %v121
  %v779 = vunpack.c.l.b16 %v122
  %v780 = vunpack.c.l.b16 %v123
  %v781 = vunpack.c.h.b16 %v123
  %v782 = vunpack.c.l.b16 %v124
  %v783 = vunpack.c.h.b16 %v124
  %v784 = vunpack.c.l.b16 %v125
  %v785 = vunpack.c.l.b16 %v126
  %v786 = vunpack.c.h.b16 %v126
  %v787 = vunpack.c.l.b16 %v127
  %v788 = vunpack.c.h.b16 %v127
  %v789 = vunpack.c.l.b16 %v128
  %v790 = vunpack.c.l.b16 %v129
  %v791 = vunpack.c.h.b16 %v129
  %v792 = vunpack.c.l.b16 %v130
  %v793 = vunpack.c.h.b16 %v130
  %v794 = vunpack.c.l.b16 %v131
  %v795 = vunpack.c.l.b16 %v132
  %v796 = vunpack.c.h.b16 %v132
  %v797 = vunpack.c.l.b16 %v133
  %v798 = vunpack.c.h.b16 %v133
  %v799 = vunpack.c.l.b16 %v134
  %v800 = vunpack.c.l.b16 %v135
  %v801 = vunpack.c.h.b16 %v135
  %v802 = vunpack.c.l.b16 %v136
  %v803 = vunpack.c.h.b16 %v136
  %v804 = vunpack.c.l.b16 %v137
  %v805 = vunpack.c.l.b16 %v138
  %v806 = vunpack.c.h.b16 %v138
  %v807 = vunpack.c.l.b16 %v139
  %v808 = vunpack.c.h.b16 %v139
  %v809 = vunpack.c.l.b16 %v140
  %v810 = vunpack.c.l.b16 %v141
  %v811 = vunpack.c.h.b16 %v141
  %v812 = vunpack.c.l.b16 %v142
  %v813 = vunpack.c.h.b16 %v142
  %v814 = vunpack.c.l.b16 %v143
  %v815 = vunpack.c.l.b16 %v144
  %v816 = vunpack.c.h.b16 %v144
  %v817 = vunpack.c.l.b16 %v145
  %v818 = vunpack.c.h.b16 %v145
  %v819 = vunpack.c.l.b16 %v146
  %v820 = vunpack.c.l.b16 %v147
  %v821 = vunpack.c.h.b16 %v147
  %v822 = vunpack.c.l.b16 %v148
  %v823 = vunpack.c.h.b16 %v148
  %v824 = vunpack.c.l.b16 %v149
  %v825 = vunpack.c.l.b16 %v150
  %v826 = vunpack.c.h.b16 %v150
  %v827 = vunpack.c.l.b16 %v151
  %v828 = vunpack.c.h.b16 %v151
  %v829 = vunpack.c.l.b16 %v152
  %v830 = vunpack.c.l.b16 %v153
  %v831 = vunpack.c.h.b16 %v153
  %v832 = vunpack.c.l.b16 %v154
  %v833 = vunpack.c.h.b16 %v154
  %v834 = vunpack.c.l.b16 %v155
  %v835 = vunpack.c.l.b16 %v156
  %v836 = vunpack.c.h.b16 %v156
  %v837 = vunpack.c.l.b16 %v157
  %v838 = vunpack.c.h.b16 %v157
  %v839 = vunpack.c.l.b16 %v158
  %v840 = vunpack.c.l.b16 %v159
  %v841 = vunpack.c.h.b16 %v159
  %v842 = vunpack.c.l.b16 %v160
  %v843 = vunpack.c.h.b16 %v160
  %v844 = vunpack.c.l.b16 %v161
  %v845 = vunpack.c.l.b16 %v162
  %v846 = vunpack.c.h.b16 %v162
  %v847 = vunpack.c.l.b16 %v163
  %v848 = vunpack.c.h.b16 %v163
  %v849 = vunpack.c.l.b16 %v164
  %v850 = vunpack.c.l.b16 %v165
  %v851 = vunpack.c.h.b16 %v165
  %v852 = vunpack.c.l.b16 %v166
  %v853 = vunpack.c.h.b16 %v166
  %v854 = vunpack.c.l.b16 %v167
  %v855 = vunpack.c.l.b16 %v168
  %v856 = vunpack.c.h.b16 %v168
  %v857 = vunpack.c.l.b16 %v169
  %v858 = vunpack.c.h.b16 %v169
  %v859 = vunpack.c.l.b16 %v170
  %v860 = vunpack.c.l.b16 %v171
  %v861 = vunpack.c.h.b16 %v171
  %v862 = vunpack.c.l.b16 %v172
  %v863 = vunpack.c.h.b16 %v172
  %v864 = vunpack.c.l.b16 %v173
  %v865 = vunpack.c.l.b16 %v174
  %v866 = vunpack.c.h.b16 %v174
  %v867 = vunpack.c.l.b16 %v175
  %v868 = vunpack.c.h.b16 %v175
  %v869 = vunpack.c.l.b16 %v176
  %v870 = vunpack.c.l.b16 %v177
  %v871 = vunpack.c.h.b16 %v177
  %v872 = vunpack.c.l.b16 %v178
  %v873 = vunpack.c.h.b16 %v178
  %v874 = vunpack.c.l.b16 %v179
  %v875 = vunpack.c.l.b16 %v180
  %v876 = vunpack.c.h.b16 %v180
  %v877 = vunpack.c.l.b16 %v181
  %v878 = vunpack.c.h.b16 %v181
  %v879 = vunpack.c.l.b16 %v182
  %v880 = vunpack.c.l.b16 %v183
  %v881 = vunpack.c.h.b16 %v183
  %v882 = vunpack.c.l.b16 %v184
  %v883 = vunpack.c.h.b16 %v184
  %v884 = vunpack.c.l.b16 %v185
  %v885 = vunpack.c.l.b16 %v186
  %v886 = vunpack.c.h.b16 %v186
  %v887 = vunpack.c.l.b16 %v187
  %v888 = vunpack.c.h.b16 %v187
  %v889 = vunpack.c.l.b16 %v188
  %v890 = vunpack.c.l.b16 %v189
  %v891 = vunpack.c.h.b16 %v189
  %v892 = vunpack.c.l.b16 %v190
  %v893 = vunpack.c.h.b16 %v190
  %v894 = vunpack.c.l.b16 %v191
  %v895 = vunpack.c.l.b16 %v192
  %v896 = vunpack.c.h.b16 %v192
  %v897 = vunpack.c.l.b16 %v193
  %v898 = vunpack.c.h.b16 %v193
  %v899 = vunpack.c.l.b16 %v194
  %v900 = vunpack.c.l.b16 %v195
  %v901 = vunpack.c.h.b16 %v195
  %v902 = vunpack.c.l.b16 %v196
  %v903 = vunpack.c.h.b16 %v196
  %v904 = vunpack.c.l.b16 %v197
  %v905 = vunpack.c.l.b16 %v198
  %v906 = vunpack.c.h.b16 %v198
  %v907 = vunpack.c.l.b16 %v199
  %v908 = vunpack.c.h.b16 %v199
  %v909 = vunpack.c.l.b16 %v200
  %v910 = vunpack.c.l.b16 %v201
  %v911 = vunpack.c.h.b16 %v201
  %v912 = vunpack.c.l.b16 %v202
  %v913 = vunpack.c.h.b16 %v202
  %v914 = vunpack.c.l.b16 %v203
  %v915 = vunpack.c.l.b16 %v204
  %v916 = vunpack.c.h.b16 %v204
  %v917 = vunpack.c.l.b16 %v205
  %v918 = vunpack.c.h.b16 %v205
  %v919 = vunpack.c.l.b16 %v206
  %v920 = vunpack.c.l.b16 %v207
  %v921 = vunpack.c.h.b16 %v207
  %v922 = vunpack.c.l.b16 %v208
  %v923 = vunpack.c.h.b16 %v208
  %v924 = vunpack.c.l.b16 %v209
  %v925 = vunpack.c.l.b16 %v210
  %v926 = vunpack.c.h.b16 %v210
  %v927 = vunpack.c.l.b16 %v211
  %v928 = vunpack.c.h.b16 %v211
  %v929 = vunpack.c.l.b16 %v212
  %v930 = vunpack.c.l.b16 %v213
  %v931 = vunpack.c.h.b16 %v213
  %v932 = vunpack.c.l.b16 %v214
  %v933 = vunpack.c.h.b16 %v214
  %v934 = vunpack.c.l.b16 %v215
  %v935 = vunpack.c.l.b16 %v216
  %v936 = vunpack.c.h.b16 %v216
  %v937 = vunpack.c.l.b16 %v217
  %v938 = vunpack.c.h.b16 %v217
  %v939 = vunpack.c.l.b16 %v218
  %v940 = vunpack.c.l.b16 %v219
  %v941 = vunpack.c.h.b16 %v219
  %v942 = vunpack.c.l.b16 %v220
  %v943 = vunpack.c.h.b16 %v220
  %v944 = vunpack.c.l.b16 %v221
  %v945 = vunpack.c.l.b16 %v222
  %v946 = vunpack.c.h.b16 %v222
  %v947 = vunpack.c.l.b16 %v223
  %v948 = vunpack.c.h.b16 %v223
  %v949 = vunpack.c.l.b16 %v224
  %v950 = vunpack.c.l.b16 %v225
  %v951 = vunpack.c.h.b16 %v225
  %v952 = vunpack.c.l.b16 %v226
  %v953 = vunpack.c.h.b16 %v226
  %v954 = vunpack.c.l.b16 %v227
  %v955 = vunpack.c.l.b16 %v228
  %v956 = vunpack.c.h.b16 %v228
  %v957 = vunpack.c.l.b16 %v229
  %v958 = vunpack.c.h.b16 %v229
  %v959 = vunpack.c.l.b16 %v230
  %v960 = vunpack.c.l.b16 %v231
  %v961 = vunpack.c.h.b16 %v231
  %v962 = vunpack.c.l.b16 %v232
  %v963 = vunpack.c.h.b16 %v232
  %v964 = vunpack.c.l.b16 %v233
  %v965 = vunpack.c.l.b16 %v234
  %v966 = vunpack.c.h.b16 %v234
  %v967 = vunpack.c.l.b16 %v235
  %v968 = vunpack.c.h.b16 %v235
  %v969 = vunpack.c.l.b16 %v236
  %v970 = vunpack.c.l.b16 %v237
  %v971 = vunpack.c.h.b16 %v237
  %v972 = vunpack.c.l.b16 %v238
  %v973 = vunpack.c.h.b16 %v238
  %v974 = vunpack.c.l.b16 %v239
  %v975 = vunpack.c.l.b16 %v240
  %v976 = vunpack.c.h.b16 %v240
  %v977 = vunpack.c.l.b16 %v241
  %v978 = vunpack.c.h.b16 %v241
  %v979 = vunpack.c.l.b16 %v242
  %v980 = vunpack.c.l.b16 %v243
  %v981 = vunpack.c.h.b16 %v243
  %v982 = vunpack.c.l.b16 %v244
  %v983 = vunpack.c.h.b16 %v244
  %v984 = vunpack.c.l.b16 %v245
  %v985 = vunpack.c.l.b16 %v246
  %v986 = vunpack.c.h.b16 %v246
  %v987 = vunpack.c.l.b16 %v247
  %v988 = vunpack.c.h.b16 %v247
  %v989 = vunpack.c.l.b16 %v248
  %v990 = vunpack.c.l.b16 %v249
  %v991 = vunpack.c.h.b16 %v249
  %v992 = vunpack.c.l.b16 %v250
  %v993 = vunpack.c.h.b16 %v250
  %v994 = vunpack.c.l.b16 %v251
  %v995 = vunpack.c.l.b16 %v252
  %v996 = vunpack.c.h.b16 %v252
  %v997 = vunpack.c.l.b16 %v253
  %v998 = vunpack.c.h.b16 %v253
  %v999 = vunpack.c.l.b16 %v254
  %v1000 = vunpack.c.l.b16 %v255
  %v1001 = vunpack.c.h.b16 %v255
  %v1002 = vunpack.c.l.b16 %v256
  %v1003 = vunpack.c.h.b16 %v256
  %v1004 = vunpack.c.l.b16 %v257
  %v1005 = vunpack.c.l.b16 %v258
  %v1006 = vunpack.c.h.b16 %v258
  %v1007 = vunpack.c.l.b16 %v259
  %v1008 = vunpack.c.h.b16 %v259
  %v1009 = vunpack.c.l.b16 %v260
  %v1010 = vunpack.c.l.b16 %v261
  %v1011 = vunpack.c.h.b16 %v261
  %v1012 = vunpack.c.l.b16 %v262
  %v1013 = vunpack.c.h.b16 %v262
  %v1014 = vunpack.c.l.b16 %v263
  %v1015 = vunpack.c.l.b16 %v264
  %v1016 = vunpack.c.h.b16 %v264
  %v1017 = vunpack.c.l.b16 %v265
  %v1018 = vunpack.c.h.b16 %v265
  %v1019 = vunpack.c.l.b16 %v266
  %v1020 = vunpack.c.l.b16 %v267
  %v1021 = vunpack.c.h.b16 %v267
  %v1022 = vunpack.c.l.b16 %v268
  %v1023 = vunpack.c.h.b16 %v268
  %v1024 = vunpack.c.l.b16 %v269
  %v1025 = vunpack.c.l.b16 %v270
  %v1026 = vunpack.c.h.b16 %v270
  %v1027 = vunpack.c.l.b16 %v271
  %v1028 = vunpack.c.h.b16 %v271
  %v1029 = vunpack.c.l.b16 %v272
  %v1030 = vunpack.c.l.b16 %v273
  %v1031 = vunpack.c.h.b16 %v273
  %v1032 = vunpack.c.l.b16 %v274
  %v1033 = vunpack.c.h.b16 %v274
  %v1034 = vunpack.c.l.b16 %v275
  %v1035 = vunpack.c.l.b16 %v276
  %v1036 = vunpack.c.h.b16 %v276
  %v1037 = vunpack.c.l.b16 %v277
  %v1038 = vunpack.c.h.b16 %v277
  %v1039 = vunpack.c.l.b16 %v278
  %v1040 = vunpack.c.l.b16 %v279
  %v1041 = vunpack.c.h.b16 %v279
  %v1042 = vunpack.c.l.b16 %v280
  %v1043 = vunpack.c.h.b16 %v280
  %v1044 = vunpack.c.l.b16 %v281
  %v1045 = vunpack.c.l.b16 %v282
  %v1046 = vunpack.c.h.b16 %v282
  %v1047 = vunpack.c.l.b16 %v283
  %v1048 = vunpack.c.h.b16 %v283
  %v1049 = vunpack.c.l.b16 %v284
  %v1050 = vunpack.c.l.b16 %v285
  %v1051 = vunpack.c.h.b16 %v285
  %v1052 = vunpack.c.l.b16 %v286
  %v1053 = vunpack.c.h.b16 %v286
  %v1054 = vunpack.c.l.b16 %v287
  %v1055 = vunpack.c.l.b16 %v288
  %v1056 = vunpack.c.h.b16 %v288
  %v1057 = vunpack.c.l.b16 %v289
  %v1058 = vunpack.c.h.b16 %v289
  %v1059 = vunpack.c.l.b16 %v290
  %v1060 = vunpack.c.l.b16 %v291
  %v1061 = vunpack.c.h.b16 %v291
  %v1062 = vunpack.c.l.b16 %v292
  %v1063 = vunpack.c.h.b16 %v292
  %v1064 = vunpack.c.l.b16 %v293
  %v1065 = vunpack.c.l.b16 %v294
  %v1066 = vunpack.c.h.b16 %v294
  %v1067 = vunpack.c.l.b16 %v295
  %v1068 = vunpack.c.h.b16 %v295
  %v1069 = vunpack.c.l.b16 %v296
  %v1070 = vunpack.c.l.b16 %v297
  %v1071 = vunpack.c.h.b16 %v297
  %v1072 = vunpack.c.l.b16 %v298
  %v1073 = vunpack.c.h.b16 %v298
  %v1074 = vunpack.c.l.b16 %v299
  %v1075 = vunpack.c.l.b16 %v300
  %v1076 = vunpack.c.h.b16 %v300
  %v1077 = vunpack.c.l.b16 %v301
  %v1078 = vunpack.c.h.b16 %v301
  %v1079 = vunpack.c.l.b16 %v302
  %v1080 = vunpack.c.l.b16 %v303
  %v1081 = vunpack.c.h.b16 %v303
  %v1082 = vunpack.c.l.b16 %v304
  %v1083 = vunpack.c.h.b16 %v304
  %v1084 = vunpack.c.l.b16 %v305
  %v1085 = vunpack.c.l.b16 %v306
  %v1086 = vunpack.c.h.b16 %v306
  %v1087 = vunpack.c.l.b16 %v307
  %v1088 = vunpack.c.h.b16 %v307
  %v1089 = vunpack.c.l.b16 %v308
  %v1090 = vunpack.c.l.b16 %v309
  %v1091 = vunpack.c.h.b16 %v309
  %v1092 = vunpack.c.l.b16 %v310
  %v1093 = vunpack.c.h.b16 %v310
  %v1094 = vunpack.c.l.b16 %v311
  %v1095 = vunpack.c.l.b16 %v312
  %v1096 = vunpack.c.h.b16 %v312
  %v1097 = vunpack.c.l.b16 %v313
  %v1098 = vunpack.c.h.b16 %v313
  %v1099 = vunpack.c.l.b16 %v314
  %v1100 = vunpack.c.l.b16 %v315
  %v1101 = vunpack.c.h.b16 %v315
  %v1102 = vunpack.c.l.b16 %v316
  %v1103 = vunpack.c.h.b16 %v316
  %v1104 = vunpack.c.l.b16 %v317
  %v1105 = vunpack.c.l.b16 %v318
  %v1106 = vunpack.c.h.b16 %v318
  %v1107 = vunpack.c.l.b16 %v319
  %v1108 = vunpack.c.h.b16 %v319
  %v1109 = vunpack.c.l.b16 %v320
  %v1110 = vunpack.c.l.b16 %v321
  %v1111 = vunpack.c.h.b16 %v321
  %v1112 = vunpack.c.l.b16 %v322
  %v1113 = vunpack.c.h.b16 %v322
  %v1114 = vunpack.c.l.b16 %v323
  %v1115 = vunpack.c.l.b16 %v324
  %v1116 = vunpack.c.h.b16 %v324
  %v1117 = vunpack.c.l.b16 %v325
  %v1118 = vunpack.c.h.b16 %v325
  %v1119 = vunpack.c.l.b16 %v326
  %v1120 = vunpack.c.l.b16 %v327
  %v1121 = vunpack.c.h.b16 %v327
  %v1122 = vunpack.c.l.b16 %v328
  %v1123 = vunpack.c.h.b16 %v328
  %v1124 = vunpack.c.l.b16 %v329
  %v1125 = vunpack.c.l.b16 %v330
  %v1126 = vunpack.c.h.b16 %v330
  %v1127 = vunpack.c.l.b16 %v331
  %v1128 = vunpack.c.h.b16 %v331
  %v1129 = vunpack.c.l.b16 %v332
  %v1130 = vunpack.c.l.b16 %v333
  %v1131 = vunpack.c.h.b16 %v333
  %v1132 = vunpack.c.l.b16 %v334
  %v1133 = vunpack.c.h.b16 %v334
  %v1134 = vunpack.c.l.b16 %v335
  %v1135 = vunpack.c.l.b16 %v336
  %v1136 = vunpack.c.h.b16 %v336
  %v1137 = vunpack.c.l.b16 %v337
  %v1138 = vunpack.c.h.b16 %v337
  %v1139 = vunpack.c.l.b16 %v338
  %v1140 = vunpack.c.l.b16 %v339
  %v1141 = vunpack.c.h.b16 %v339
  %v1142 = vunpack.c.l.b16 %v340
  %v1143 = vunpack.c.h.b16 %v340
  %v1144 = vunpack.c.l.b16 %v341
  %v1145 = vunpack.c.l.b16 %v342
  %v1146 = vunpack.c.h.b16 %v342
  %v1147 = vunpack.c.l.b16 %v343
  %v1148 = vunpack.c.h.b16 %v343
  %v1149 = vunpack.c.l.b16 %v344
  %v1150 = vunpack.c.l.b16 %v345
  %v1151 = vunpack.c.h.b16 %v345
  %v1152 = vunpack.c.l.b16 %v346
  %v1153 = vunpack.c.h.b16 %v346
  %v1154 = vunpack.c.l.b16 %v347
  %v1155 = vunpack.c.l.b16 %v348
  %v1156 = vunpack.c.h.b16 %v348
  %v1157 = vunpack.c.l.b16 %v349
  %v1158 = vunpack.c.h.b16 %v349
  %v1159 = vunpack.c.l.b16 %v350
  %v1160 = vunpack.c.l.b16 %v351
  %v1161 = vunpack.c.h.b16 %v351
  %v1162 = vunpack.c.l.b16 %v352
  %v1163 = vunpack.c.h.b16 %v352
  %v1164 = vunpack.c.l.b16 %v353
  %v1165 = vpack.c.b16 %v680, %v675
  %v1166 = vpack.c.b16 %v681, %v676
  %v1167 = vpack.c.b16 %v682, %v677
  %v1168 = vpack.c.b16 %v683, %v678
  %v1169 = vpack.c.b16 %v684, %v679
  %v1170 = vpack.c.b16 %v690, %v685
  %v1171 = vpack.c.b16 %v691, %v686
  %v1172 = vpack.c.b16 %v692, %v687
  %v1173 = vpack.c.b16 %v693, %v688
  %v1174 = vpack.c.b16 %v694, %v689
  %v1175 = vpack.c.b16 %v700, %v695
  %v1176 = vpack.c.b16 %v701, %v696
  %v1177 = vpack.c.b16 %v702, %v697
  %v1178 = vpack.c.b16 %v703, %v698
  %v1179 = vpack.c.b16 %v704, %v699
  %v1180 = vpack.c.b16 %v710, %v705
  %v1181 = vpack.c.b16 %v711, %v706
  %v1182 = vpack.c.b16 %v712, %v707
  %v1183 = vpack.c.b16 %v713, %v708
  %v1184 = vpack.c.b16 %v714, %v709
  %v1185 = vpack.c.b16 %v720, %v715
  %v1186 = vpack.c.b16 %v721, %v716
  %v1187 = vpack.c.b16 %v722, %v717
  %v1188 = vpack.c.b16 %v723, %v718
  %v1189 = vpack.c.b16 %v724, %v719
  %v1190 = vpack.c.b16 %v730, %v725
  %v1191 = vpack.c.b16 %v731, %v726
  %v1192 = vpack.c.b16 %v732, %v727
  %v1193 = vpack.c.b16 %v733, %v728
  %v1194 = vpack.c.b16 %v734, %v729
  %v1195 = vpack.c.b16 %v740, %v735
  %v1196 = vpack.c.b16 %v741, %v736
  %v1197 = vpack.c.b16 %v742, %v737
  %v1198 = vpack.c.b16 %v743, %v738
  %v1199 = vpack.c.b16 %v744, %v739
  %v1200 = vpack.c.b16 %v750, %v745
  %v1201 = vpack.c.b16 %v751, %v746
  %v1202 = vpack.c.b16 %v752, %v747
  %v1203 = vpack.c.b16 %v753, %v748
  %v1204 = vpack.c.b16 %v754, %v749
  %v1205 = vpack.c.b16 %v760, %v755
  %v1206 = vpack.c.b16 %v761, %v756
  %v1207 = vpack.c.b16 %v762, %v757
  %v1208 = vpack.c.b16 %v763, %v758
  %v1209 = vpack.c.b16 %v764, %v759
  %v1210 = vpack.c.b16 %v770, %v765
  %v1211 = vpack.c.b16 %v771, %v766
  %v1212 = vpack.c.b16 %v772, %v767
  %v1213 = vpack.c.b16 %v773, %v768
  %v1214 = vpack.c.b16 %v774, %v769
  %v1215 = vpack.c.b16 %v780, %v775
  %v1216 = vpack.c.b16 %v781, %v776
  %v1217 = vpack.c.b16 %v782, %v777
  %v1218 = vpack.c.b16 %v783, %v778
  %v1219 = vpack.c.b16 %v784, %v779
  %v1220 = vpack.c.b16 %v790, %v785
  %v1221 = vpack.c.b16 %v791, %v786
  %v1222 = vpack.c.b16 %v792, %v787
  %v1223 = vpack.c.b16 %v793, %v788
  %v1224 = vpack.c.b16 %v794, %v789
  %v1225 = vpack.c.b16 %v800, %v795
  %v1226 = vpack.c.b16 %v801, %v796
  %v1227 = vpack.c.b16 %v802, %v797
  %v1228 = vpack.c.b16 %v803, %v798
  %v1229 = vpack.c.b16 %v804, %v799
  %v1230 = vpack.c.b16 %v810, %v805
  %v1231 = vpack.c.b16 %v811, %v806
  %v1232 = vpack.c.b16 %v812, %v807
  %v1233 = vpack.c.b16 %v813, %v808
  %v1234 = vpack.c.b16 %v814, %v809
  %v1235 = vpack.c.b16 %v820, %v815
  %v1236 = vpack.c.b16 %v821, %v816
  %v1237 = vpack.c.b16 %v822, %v817
  %v1238 = vpack.c.b16 %v823, %v818
  %v1239 = vpack.c.b16 %v824, %v819
  %v1240 = vpack.c.b16 %v830, %v825
  %v1241 = vpack.c.b16 %v831, %v826
  %v1242 = vpack.c.b16 %v832, %v827
  %v1243 = vpack.c.b16 %v833, %v828
  %v1244 = vpack.c.b16 %v834, %v829
  %v1245 = vpack.c.b16 %v840, %v835
  %v1246 = vpack.c.b16 %v841, %v836
  %v1247 = vpack.c.b16 %v842, %v837
  %v1248 = vpack.c.b16 %v843, %v838
  %v1249 = vpack.c.b16 %v844, %v839
  %v1250 = vpack.c.b16 %v850, %v845
  %v1251 = vpack.c.b16 %v851, %v846
  %v1252 = vpack.c.b16 %v852, %v847
  %v1253 = vpack.c.b16 %v853, %v848
  %v1254 = vpack.c.b16 %v854, %v849
  %v1255 = vpack.c.b16 %v860, %v855
  %v1256 = vpack.c.b16 %v861, %v856
  %v1257 = vpack.c.b16 %v862, %v857
  %v1258 = vpack.c.b16 %v863, %v858
  %v1259 = vpack.c.b16 %v864, %v859
  %v1260 = vpack.c.b16 %v870, %v865
  %v1261 = vpack.c.b16 %v871, %v866
  %v1262 = vpack.c.b16 %v872, %v867
  %v1263 = vpack.c.b16 %v873, %v868
  %v1264 = vpack.c.b16 %v874, %v869
  %v1265 = vpack.c.b16 %v880, %v875
  %v1266 = vpack.c.b16 %v881, %v876
  %v1267 = vpack.c.b16 %v882, %v877
  %v1268 = vpack.c.b16 %v883, %v878
  %v1269 = vpack.c.b16 %v884, %v879
  %v1270 = vpack.c.b16 %v890, %v885
  %v1271 = vpack.c.b16 %v891, %v886
  %v1272 = vpack.c.b16 %v892, %v887
  %v1273 = vpack.c.b16 %v893, %v888
  %v1274 = vpack.c.b16 %v894, %v889
  %v1275 = vpack.c.b16 %v900, %v895
  %v1276 = vpack.c.b16 %v901, %v896
  %v1277 = vpack.c.b16 %v902, %v897
  %v1278 = vpack.c.b16 %v903, %v898
  %v1279 = vpack.c.b16 %v904, %v899
  %v1280 = vpack.c.b16 %v910, %v905
  %v1281 = vpack.c.b16 %v911, %v906
  %v1282 = vpack.c.b16 %v912, %v907
  %v1283 = vpack.c.b16 %v913, %v908
  %v1284 = vpack.c.b16 %v914, %v909
  %v1285 = vpack.c.b16 %v920, %v915
  %v1286 = vpack.c.b16 %v921, %v916
  %v1287 = vpack.c.b16 %v922, %v917
  %v1288 = vpack.c.b16 %v923, %v918
  %v1289 = vpack.c.b16 %v924, %v919
  %v1290 = vpack.c.b16 %v930, %v925
  %v1291 = vpack.c.b16 %v931, %v926
  %v1292 = vpack.c.b16 %v932, %v927
  %v1293 = vpack.c.b16 %v933, %v928
  %v1294 = vpack.c.b16 %v934, %v929
  %v1295 = vpack.c.b16 %v940, %v935
  %v1296 = vpack.c.b16 %v941, %v936
  %v1297 = vpack.c.b16 %v942, %v937
  %v1298 = vpack.c.b16 %v943, %v938
  %v1299 = vpack.c.b16 %v944, %v939
  %v1300 = vpack.c.b16 %v950, %v945
  %v1301 = vpack.c.b16 %v951, %v946
  %v1302 = vpack.c.b16 %v952, %v947
  %v1303 = vpack.c.b16 %v953, %v948
  %v1304 = vpack.c.b16 %v954, %v949
  %v1305 = vpack.c.b16 %v960, %v955
  %v1306 = vpack.c.b16 %v961, %v956
  %v1307 = vpack.c.b16 %v962, %v957
  %v1308 = vpack.c.b16 %v963, %v958
  %v1309 = vpack.c.b16 %v964, %v959
  %v1310 = vpack.c.b16 %v970, %v965
  %v1311 = vpack.c.b16 %v971, %v966
  %v1312 = vpack.c.b16 %v972, %v967
  %v1313 = vpack.c.b16 %v973, %v968
  %v1314 = vpack.c.b16 %v974, %v969
  %v1315 = vpack.c.b16 %v980, %v975
  %v1316 = vpack.c.b16 %v981, %v976
  %v1317 = vpack.c.b16 %v982, %v977
  %v1318 = vpack.c.b16 %v983, %v978
  %v1319 = vpack.c.b16 %v984, %v979
  %v1320 = vpack.c.b16 %v990, %v985
  %v1321 = vpack.c.b16 %v991, %v986
  %v1322 = vpack.c.b16 %v992, %v987
  %v1323 = vpack.c.b16 %v993, %v988
  %v1324 = vpack.c.b16 %v994, %v989
  %v1325 = vpack.c.b16 %v1000, %v995
  %v1326 = vpack.c.b16 %v1001, %v996
  %v1327 = vpack.c.b16 %v1002, %v997
  %v1328 = vpack.c.b16 %v1003, %v998
  %v1329 = vpack.c.b16 %v1004, %v999
  %v1330 = vpack.c.b16 %v1010, %v1005
  %v1331 = vpack.c.b16 %v1011, %v1006
  %v1332 = vpack.c.b16 %v1012, %v1007
  %v1333 = vpack.c.b16 %v1013, %v1008
  %v1334 = vpack.c.b16 %v1014, %v1009
  %v1335 = vpack.c.b16 %v1020, %v1015
  %v1336 = vpack.c.b16 %v1021, %v1016
  %v1337 = vpack.c.b16 %v1022, %v1017
  %v1338 = vpack.c.b16 %v1023, %v1018
  %v1339 = vpack.c.b16 %v1024, %v1019
  %v1340 = vpack.c.b16 %v1030, %v1025
  %v1341 = vpack.c.b16 %v1031, %v1026
  %v1342 = vpack.c.b16 %v1032, %v1027
  %v1343 = vpack.c.b16 %v1033, %v1028
  %v1344 = vpack.c.b16 %v1034, %v1029
  %v1345 = vpack.c.b16 %v1040, %v1035
  %v1346 = vpack.c.b16 %v1041, %v1036
  %v1347 = vpack.c.b16 %v1042, %v1037
  %v1348 = vpack.c.b16 %v1043, %v1038
  %v1349 = vpack.c.b16 %v1044, %v1039
  %v1350 = vpack.c.b16 %v1050, %v1045
  %v1351 = vpack.c.b16 %v1051, %v1046
  %v1352 = vpack.c.b16 %v1052, %v1047
  %v1353 = vpack.c.b16 %v1053, %v1048
  %v1354 = vpack.c.b16 %v1054, %v1049
  %v1355 = vpack.c.b16 %v1060, %v1055
  %v1356 = vpack.c.b16 %v1061, %v1056
  %v1357 = vpack.c.b16 %v1062, %v1057
  %v1358 = vpack.c.b16 %v1063, %v1058
  %v1359 = vpack.c.b16 %v1064, %v1059
  %v1360 = vpack.c.b16 %v1070, %v1065
  %v1361 = vpack.c.b16 %v1071, %v1066
  %v1362 = vpack.c.b16 %v1072, %v1067
  %v1363 = vpack.c.b16 %v1073, %v1068
  %v1364 = vpack.c.b16 %v1074, %v1069
  %v1365 = vpack.c.b16 %v1080, %v1075
  %v1366 = vpack.c.b16 %v1081, %v1076
  %v1367 = vpack.c.b16 %v1082, %v1077
  %v1368 = vpack.c.b16 %v1083, %v1078
  %v1369 = vpack.c.b16 %v1084, %v1079
  %v1370 = vpack.c.b16 %v1090, %v1085
  %v1371 = vpack.c.b16 %v1091, %v1086
  %v1372 = vpack.c.b16 %v1092, %v1087
  %v1373 = vpack.c.b16 %v1093, %v1088
  %v1374 = vpack.c.b16 %v1094, %v1089
  %v1375 = vpack.c.b16 %v1100, %v1095
  %v1376 = vpack.c.b16 %v1101, %v1096
  %v1377 = vpack.c.b16 %v1102, %v1097
  %v1378 = vpack.c.b16 %v1103, %v1098
  %v1379 = vpack.c.b16 %v1104, %v1099
  %v1380 = vpack.c.b16 %v1110, %v1105
  %v1381 = vpack.c.b16 %v1111, %v1106
  %v1382 = vpack.c.b16 %v1112, %v1107
  %v1383 = vpack.c.b16 %v1113, %v1108
  %v1384 = vpack.c.b16 %v1114, %v1109
  %v1385 = vpack.c.b16 %v1120, %v1115
  %v1386 = vpack.c.b16 %v1121, %v1116
  %v1387 = vpack.c.b16 %v1122, %v1117
  %v1388 = vpack.c.b16 %v1123, %v1118
  %v1389 = vpack.c.b16 %v1124, %v1119
  %v1390 = vpack.c.b16 %v1130, %v1125
  %v1391 = vpack.c.b16 %v1131, %v1126
  %v1392 = vpack.c.b16 %v1132, %v1127
  %v1393 = vpack.c.b16 %v1133, %v1128
  %v1394 = vpack.c.b16 %v1134, %v1129
  %v1395 = vpack.c.b16 %v1140, %v1135
  %v1396 = vpack.c.b16 %v1141, %v1136
  %v1397 = vpack.c.b16 %v1142, %v1137
  %v1398 = vpack.c.b16 %v1143, %v1138
  %v1399 = vpack.c.b16 %v1144, %v1139
  %v1400 = vpack.c.b16 %v1150, %v1145
  %v1401 = vpack.c.b16 %v1151, %v1146
  %v1402 = vpack.c.b16 %v1152, %v1147
  %v1403 = vpack.c.b16 %v1153, %v1148
  %v1404 = vpack.c.b16 %v1154, %v1149
  %v1405 = vpack.c.b16 %v1160, %v1155
  %v1406 = vpack.c.b16 %v1161, %v1156
  %v1407 = vpack.c.b16 %v1162, %v1157
  %v1408 = vpack.c.b16 %v1163, %v1158
  %v1409 = vpack.c.b16 %v1164, %v1159
  %vm1655 = vcmask 130048
  %v1657 = vsel %vm1655, %v59, 0
  %1659 = vmatprep.subr.bf16.mxu0 %v1166
  %1660 = vmatpush1.bf16.msra.mxu0 %v1165
  %1661 = vmatprep.subr.bf16.mxu0 %v1171
  %1662 = vmatpush1.bf16.msra.mxu0 %v1170
  %1663 = vmatprep.subr.bf16.mxu0 %v1176
  %1664 = vmatpush1.bf16.msra.mxu0 %v1175
  %1665 = vmatprep.subr.bf16.mxu0 %v1181
  %1666 = vmatpush1.bf16.msra.mxu0 %v1180
  %1667 = vmatprep.subr.bf16.mxu0 %v1186
  %1668 = vmatpush1.bf16.msra.mxu0 %v1185
  %1669 = vmatprep.subr.bf16.mxu0 %v1191
  %1670 = vmatpush1.bf16.msra.mxu0 %v1190
  %1671 = vmatprep.subr.bf16.mxu0 %v1196
  %1672 = vmatpush1.bf16.msra.mxu0 %v1195
  %1673 = vmatprep.subr.bf16.mxu0 %v1201
  %1674 = vmatpush1.bf16.msra.mxu0 %v1200
  %1675 = vmatprep.subr.bf16.mxu0 %v1206
  %1676 = vmatpush1.bf16.msra.mxu0 %v1205
  %1677 = vmatprep.subr.bf16.mxu0 %v1211
  %1678 = vmatpush1.bf16.msra.mxu0 %v1210
  %1679 = vmatprep.subr.bf16.mxu0 %v1216
  %1680 = vmatpush1.bf16.msra.mxu0 %v1215
  %1681 = vmatprep.subr.bf16.mxu0 %v1221
  %1682 = vmatpush1.bf16.msra.mxu0 %v1220
  %1683 = vmatprep.subr.bf16.mxu0 %v1226
  %1684 = vmatpush1.bf16.msra.mxu0 %v1225
  %1685 = vmatprep.subr.bf16.mxu0 %v1231
  %1686 = vmatpush1.bf16.msra.mxu0 %v1230
  %1687 = vmatprep.subr.bf16.mxu0 %v1236
  %1688 = vmatpush1.bf16.msra.mxu0 %v1235
  %1689 = vmatprep.subr.bf16.mxu0 %v1241
  %1690 = vmatpush1.bf16.msra.mxu0 %v1240
  %1691 = vmatprep.mubr.bf16.mxu0 %v54
  %1692 = vmatmul.mubr.bf16.gmra.mrb[0].mxu0 %v53
  %v1693 = vpop.f32.mrb[0].mxu0
  %v1694 = vadd.f32 %v359, %v1693
  %v1695 = vpop.f32.mrb[0].mxu0
  %v1696 = vadd.f32 %v363, %v1695
  %v1697 = vpop.f32.mrb[0].mxu0
  %v1698 = vadd.f32 %v359, %v1697
  %v1699 = vpop.f32.mrb[0].mxu0
  %v1700 = vadd.f32 %v363, %v1699
  %1701 = vdwg.mxu0
  %1702 = vmatprep.subr.bf16.mxu0 %v1246
  %1703 = vmatpush1.bf16.msra.mxu0 %v1245
  %1704 = vmatprep.subr.bf16.mxu0 %v1251
  %1705 = vmatpush1.bf16.msra.mxu0 %v1250
  %1706 = vmatprep.subr.bf16.mxu0 %v1256
  %1707 = vmatpush1.bf16.msra.mxu0 %v1255
  %1708 = vmatprep.subr.bf16.mxu0 %v1261
  %1709 = vmatpush1.bf16.msra.mxu0 %v1260
  %1710 = vmatprep.subr.bf16.mxu0 %v1266
  %1711 = vmatpush1.bf16.msra.mxu0 %v1265
  %1712 = vmatprep.subr.bf16.mxu0 %v1271
  %1713 = vmatpush1.bf16.msra.mxu0 %v1270
  %1714 = vmatprep.subr.bf16.mxu0 %v1276
  %1715 = vmatpush1.bf16.msra.mxu0 %v1275
  %1716 = vmatprep.subr.bf16.mxu0 %v1281
  %1717 = vmatpush1.bf16.msra.mxu0 %v1280
  %1718 = vmatprep.subr.bf16.mxu0 %v1286
  %1719 = vmatpush1.bf16.msra.mxu0 %v1285
  %1720 = vmatprep.subr.bf16.mxu0 %v1291
  %1721 = vmatpush1.bf16.msra.mxu0 %v1290
  %1722 = vmatprep.subr.bf16.mxu0 %v1296
  %1723 = vmatpush1.bf16.msra.mxu0 %v1295
  %1724 = vmatprep.subr.bf16.mxu0 %v1301
  %1725 = vmatpush1.bf16.msra.mxu0 %v1300
  %1726 = vmatprep.subr.bf16.mxu0 %v1306
  %1727 = vmatpush1.bf16.msra.mxu0 %v1305
  %1728 = vmatprep.subr.bf16.mxu0 %v1311
  %1729 = vmatpush1.bf16.msra.mxu0 %v1310
  %1730 = vmatprep.subr.bf16.mxu0 %v1316
  %1731 = vmatpush1.bf16.msra.mxu0 %v1315
  %1732 = vmatprep.subr.bf16.mxu0 %v1321
  %1733 = vmatpush1.bf16.msra.mxu0 %v1320
  %1734 = vmatprep.mubr.bf16.mxu0 %v56
  %1735 = vmatmul.mubr.bf16.gmra.mrb[0].mxu0 %v55
  %v1736 = vpop.f32.mrb[0].mxu0
  %v1737 = vadd.f32 %v1694, %v1736
  %v1738 = vpop.f32.mrb[0].mxu0
  %v1739 = vadd.f32 %v1696, %v1738
  %v1740 = vpop.f32.mrb[0].mxu0
  %v1741 = vadd.f32 %v1698, %v1740
  %v1742 = vpop.f32.mrb[0].mxu0
  %v1743 = vadd.f32 %v1700, %v1742
  %1744 = vdwg.mxu0
  %1745 = vmatprep.subr.bf16.mxu0 %v1326
  %1746 = vmatpush1.bf16.msra.mxu0 %v1325
  %1747 = vmatprep.subr.bf16.mxu0 %v1331
  %1748 = vmatpush1.bf16.msra.mxu0 %v1330
  %1749 = vmatprep.subr.bf16.mxu0 %v1336
  %1750 = vmatpush1.bf16.msra.mxu0 %v1335
  %1751 = vmatprep.subr.bf16.mxu0 %v1341
  %1752 = vmatpush1.bf16.msra.mxu0 %v1340
  %1753 = vmatprep.subr.bf16.mxu0 %v1346
  %1754 = vmatpush1.bf16.msra.mxu0 %v1345
  %1755 = vmatprep.subr.bf16.mxu0 %v1351
  %1756 = vmatpush1.bf16.msra.mxu0 %v1350
  %1757 = vmatprep.subr.bf16.mxu0 %v1356
  %1758 = vmatpush1.bf16.msra.mxu0 %v1355
  %1759 = vmatprep.subr.bf16.mxu0 %v1361
  %1760 = vmatpush1.bf16.msra.mxu0 %v1360
  %1761 = vmatprep.subr.bf16.mxu0 %v1366
  %1762 = vmatpush1.bf16.msra.mxu0 %v1365
  %1763 = vmatprep.subr.bf16.mxu0 %v1371
  %1764 = vmatpush1.bf16.msra.mxu0 %v1370
  %1765 = vmatprep.subr.bf16.mxu0 %v1376
  %1766 = vmatpush1.bf16.msra.mxu0 %v1375
  %1767 = vmatprep.subr.bf16.mxu0 %v1381
  %1768 = vmatpush1.bf16.msra.mxu0 %v1380
  %1769 = vmatprep.subr.bf16.mxu0 %v1386
  %1770 = vmatpush1.bf16.msra.mxu0 %v1385
  %1771 = vmatprep.subr.bf16.mxu0 %v1391
  %1772 = vmatpush1.bf16.msra.mxu0 %v1390
  %1773 = vmatprep.subr.bf16.mxu0 %v1396
  %1774 = vmatpush1.bf16.msra.mxu0 %v1395
  %1775 = vmatprep.subr.bf16.mxu0 %v1401
  %1776 = vmatpush1.bf16.msra.mxu0 %v1400
  %1777 = vmatprep.mubr.bf16.mxu0 %v58
  %1778 = vmatmul.mubr.bf16.gmra.mrb[0].mxu0 %v57
  %v1779 = vpop.f32.mrb[0].mxu0
  %v1780 = vadd.f32 %v1737, %v1779
  %v1781 = vpop.f32.mrb[0].mxu0
  %v1782 = vadd.f32 %v1739, %v1781
  %v1783 = vpop.f32.mrb[0].mxu0
  %v1784 = vadd.f32 %v1741, %v1783
  %v1785 = vpop.f32.mrb[0].mxu0
  %v1786 = vadd.f32 %v1743, %v1785
  %1787 = vdwg.mxu0
  %1788 = vmatprep.subr.bf16.mxu0 %v1406
  %1789 = vmatpush1.bf16.msra.mxu0 %v1405
  %1790 = vmatprep.subr.bf16.mxu0 0
  %1791 = vmatpush1.bf16.msra.mxu0 0
  %1792 = vmatprep.subr.bf16.mxu0 0
  %1793 = vmatpush1.bf16.msra.mxu0 0
  %1794 = vmatprep.subr.bf16.mxu0 0
  %1795 = vmatpush1.bf16.msra.mxu0 0
  %1796 = vmatprep.subr.bf16.mxu0 0
  %1797 = vmatpush1.bf16.msra.mxu0 0
  %1798 = vmatprep.subr.bf16.mxu0 0
  %1799 = vmatpush1.bf16.msra.mxu0 0
  %1800 = vmatprep.subr.bf16.mxu0 0
  %1801 = vmatpush1.bf16.msra.mxu0 0
  %1802 = vmatprep.subr.bf16.mxu0 0
  %1803 = vmatpush1.bf16.msra.mxu0 0
  %1804 = vmatprep.subr.bf16.mxu0 0
  %1805 = vmatpush1.bf16.msra.mxu0 0
  %1806 = vmatprep.subr.bf16.mxu0 0
  %1807 = vmatpush1.bf16.msra.mxu0 0
  %1808 = vmatprep.subr.bf16.mxu0 0
  %1809 = vmatpush1.bf16.msra.mxu0 0
  %1810 = vmatprep.subr.bf16.mxu0 0
  %1811 = vmatpush1.bf16.msra.mxu0 0
  %1812 = vmatprep.subr.bf16.mxu0 0
  %1813 = vmatpush1.bf16.msra.mxu0 0
  %1814 = vmatprep.subr.bf16.mxu0 0
  %1815 = vmatpush1.bf16.msra.mxu0 0
  %1816 = vmatprep.subr.bf16.mxu0 0
  %1817 = vmatpush1.bf16.msra.mxu0 0
  %1818 = vmatprep.subr.bf16.mxu0 0
  %1819 = vmatpush1.bf16.msra.mxu0 0
  %1820 = vmatprep.mubr.bf16.mxu0 0
  %1821 = vmatmul.mubr.bf16.gmra.mrb[0].mxu0 %v1657
  %v1822 = vpop.f32.mrb[0].mxu0
  %v1823 = vadd.f32 %v1780, %v1822
  %v1824 = vpop.f32.mrb[0].mxu0
  %v1825 = vadd.f32 %v1782, %v1824
  %v1826 = vpop.f32.mrb[0].mxu0
  %v1827 = vadd.f32 %v1784, %v1826
  %v1828 = vpop.f32.mrb[0].mxu0
  %v1829 = vadd.f32 %v1786, %v1828
  %1830 = vdwg.mxu0
  %1831 = vmatprep.subr.bf16.mxu0 %v1168
  %1832 = vmatpush1.bf16.msra.mxu0 %v1167
  %1833 = vmatprep.subr.bf16.mxu0 %v1173
  %1834 = vmatpush1.bf16.msra.mxu0 %v1172
  %1835 = vmatprep.subr.bf16.mxu0 %v1178
  %1836 = vmatpush1.bf16.msra.mxu0 %v1177
  %1837 = vmatprep.subr.bf16.mxu0 %v1183
  %1838 = vmatpush1.bf16.msra.mxu0 %v1182
  %1839 = vmatprep.subr.bf16.mxu0 %v1188
  %1840 = vmatpush1.bf16.msra.mxu0 %v1187
  %1841 = vmatprep.subr.bf16.mxu0 %v1193
  %1842 = vmatpush1.bf16.msra.mxu0 %v1192
  %1843 = vmatprep.subr.bf16.mxu0 %v1198
  %1844 = vmatpush1.bf16.msra.mxu0 %v1197
  %1845 = vmatprep.subr.bf16.mxu0 %v1203
  %1846 = vmatpush1.bf16.msra.mxu0 %v1202
  %1847 = vmatprep.subr.bf16.mxu0 %v1208
  %1848 = vmatpush1.bf16.msra.mxu0 %v1207
  %1849 = vmatprep.subr.bf16.mxu0 %v1213
  %1850 = vmatpush1.bf16.msra.mxu0 %v1212
  %1851 = vmatprep.subr.bf16.mxu0 %v1218
  %1852 = vmatpush1.bf16.msra.mxu0 %v1217
  %1853 = vmatprep.subr.bf16.mxu0 %v1223
  %1854 = vmatpush1.bf16.msra.mxu0 %v1222
  %1855 = vmatprep.subr.bf16.mxu0 %v1228
  %1856 = vmatpush1.bf16.msra.mxu0 %v1227
  %1857 = vmatprep.subr.bf16.mxu0 %v1233
  %1858 = vmatpush1.bf16.msra.mxu0 %v1232
  %1859 = vmatprep.subr.bf16.mxu0 %v1238
  %1860 = vmatpush1.bf16.msra.mxu0 %v1237
  %1861 = vmatprep.subr.bf16.mxu0 %v1243
  %1862 = vmatpush1.bf16.msra.mxu0 %v1242
  %1863 = vmatprep.mubr.bf16.mxu0 %v54
  %1864 = vmatmul.mubr.bf16.gmra.mrb[0].mxu0 %v53
  %v1865 = vpop.f32.mrb[0].mxu0
  %v1866 = vadd.f32 %v367, %v1865
  %v1867 = vpop.f32.mrb[0].mxu0
  %v1868 = vadd.f32 %v371, %v1867
  %v1869 = vpop.f32.mrb[0].mxu0
  %v1870 = vadd.f32 %v367, %v1869
  %v1871 = vpop.f32.mrb[0].mxu0
  %v1872 = vadd.f32 %v371, %v1871
  %1873 = vdwg.mxu0
  %1874 = vmatprep.subr.bf16.mxu0 %v1248
  %1875 = vmatpush1.bf16.msra.mxu0 %v1247
  %1876 = vmatprep.subr.bf16.mxu0 %v1253
  %1877 = vmatpush1.bf16.msra.mxu0 %v1252
  %1878 = vmatprep.subr.bf16.mxu0 %v1258
  %1879 = vmatpush1.bf16.msra.mxu0 %v1257
  %1880 = vmatprep.subr.bf16.mxu0 %v1263
  %1881 = vmatpush1.bf16.msra.mxu0 %v1262
  %1882 = vmatprep.subr.bf16.mxu0 %v1268
  %1883 = vmatpush1.bf16.msra.mxu0 %v1267
  %1884 = vmatprep.subr.bf16.mxu0 %v1273
  %1885 = vmatpush1.bf16.msra.mxu0 %v1272
  %1886 = vmatprep.subr.bf16.mxu0 %v1278
  %1887 = vmatpush1.bf16.msra.mxu0 %v1277
  %1888 = vmatprep.subr.bf16.mxu0 %v1283
  %1889 = vmatpush1.bf16.msra.mxu0 %v1282
  %1890 = vmatprep.subr.bf16.mxu0 %v1288
  %1891 = vmatpush1.bf16.msra.mxu0 %v1287
  %1892 = vmatprep.subr.bf16.mxu0 %v1293
  %1893 = vmatpush1.bf16.msra.mxu0 %v1292
  %1894 = vmatprep.subr.bf16.mxu0 %v1298
  %1895 = vmatpush1.bf16.msra.mxu0 %v1297
  %1896 = vmatprep.subr.bf16.mxu0 %v1303
  %1897 = vmatpush1.bf16.msra.mxu0 %v1302
  %1898 = vmatprep.subr.bf16.mxu0 %v1308
  %1899 = vmatpush1.bf16.msra.mxu0 %v1307
  %1900 = vmatprep.subr.bf16.mxu0 %v1313
  %1901 = vmatpush1.bf16.msra.mxu0 %v1312
  %1902 = vmatprep.subr.bf16.mxu0 %v1318
  %1903 = vmatpush1.bf16.msra.mxu0 %v1317
  %1904 = vmatprep.subr.bf16.mxu0 %v1323
  %1905 = vmatpush1.bf16.msra.mxu0 %v1322
  %1906 = vmatprep.mubr.bf16.mxu0 %v56
  %1907 = vmatmul.mubr.bf16.gmra.mrb[0].mxu0 %v55
  %v1908 = vpop.f32.mrb[0].mxu0
  %v1909 = vadd.f32 %v1866, %v1908
  %v1910 = vpop.f32.mrb[0].mxu0
  %v1911 = vadd.f32 %v1868, %v1910
  %v1912 = vpop.f32.mrb[0].mxu0
  %v1913 = vadd.f32 %v1870, %v1912
  %v1914 = vpop.f32.mrb[0].mxu0
  %v1915 = vadd.f32 %v1872, %v1914
  %1916 = vdwg.mxu0
  %1917 = vmatprep.subr.bf16.mxu0 %v1328
  %1918 = vmatpush1.bf16.msra.mxu0 %v1327
  %1919 = vmatprep.subr.bf16.mxu0 %v1333
  %1920 = vmatpush1.bf16.msra.mxu0 %v1332
  %1921 = vmatprep.subr.bf16.mxu0 %v1338
  %1922 = vmatpush1.bf16.msra.mxu0 %v1337
  %1923 = vmatprep.subr.bf16.mxu0 %v1343
  %1924 = vmatpush1.bf16.msra.mxu0 %v1342
  %1925 = vmatprep.subr.bf16.mxu0 %v1348
  %1926 = vmatpush1.bf16.msra.mxu0 %v1347
  %1927 = vmatprep.subr.bf16.mxu0 %v1353
  %1928 = vmatpush1.bf16.msra.mxu0 %v1352
  %1929 = vmatprep.subr.bf16.mxu0 %v1358
  %1930 = vmatpush1.bf16.msra.mxu0 %v1357
  %1931 = vmatprep.subr.bf16.mxu0 %v1363
  %1932 = vmatpush1.bf16.msra.mxu0 %v1362
  %1933 = vmatprep.subr.bf16.mxu0 %v1368
  %1934 = vmatpush1.bf16.msra.mxu0 %v1367
  %1935 = vmatprep.subr.bf16.mxu0 %v1373
  %1936 = vmatpush1.bf16.msra.mxu0 %v1372
  %1937 = vmatprep.subr.bf16.mxu0 %v1378
  %1938 = vmatpush1.bf16.msra.mxu0 %v1377
  %1939 = vmatprep.subr.bf16.mxu0 %v1383
  %1940 = vmatpush1.bf16.msra.mxu0 %v1382
  %1941 = vmatprep.subr.bf16.mxu0 %v1388
  %1942 = vmatpush1.bf16.msra.mxu0 %v1387
  %1943 = vmatprep.subr.bf16.mxu0 %v1393
  %1944 = vmatpush1.bf16.msra.mxu0 %v1392
  %1945 = vmatprep.subr.bf16.mxu0 %v1398
  %1946 = vmatpush1.bf16.msra.mxu0 %v1397
  %1947 = vmatprep.subr.bf16.mxu0 %v1403
  %1948 = vmatpush1.bf16.msra.mxu0 %v1402
  %1949 = vmatprep.mubr.bf16.mxu0 %v58
  %1950 = vmatmul.mubr.bf16.gmra.mrb[0].mxu0 %v57
  %v1951 = vpop.f32.mrb[0].mxu0
  %v1952 = vadd.f32 %v1909, %v1951
  %v1953 = vpop.f32.mrb[0].mxu0
  %v1954 = vadd.f32 %v1911, %v1953
  %v1955 = vpop.f32.mrb[0].mxu0
  %v1956 = vadd.f32 %v1913, %v1955
  %v1957 = vpop.f32.mrb[0].mxu0
  %v1958 = vadd.f32 %v1915, %v1957
  %1959 = vdwg.mxu0
  %1960 = vmatprep.subr.bf16.mxu0 %v1408
  %1961 = vmatpush1.bf16.msra.mxu0 %v1407
  %1962 = vmatprep.subr.bf16.mxu0 0
  %1963 = vmatpush1.bf16.msra.mxu0 0
  %1964 = vmatprep.subr.bf16.mxu0 0
  %1965 = vmatpush1.bf16.msra.mxu0 0
  %1966 = vmatprep.subr.bf16.mxu0 0
  %1967 = vmatpush1.bf16.msra.mxu0 0
  %1968 = vmatprep.subr.bf16.mxu0 0
  %1969 = vmatpush1.bf16.msra.mxu0 0
  %1970 = vmatprep.subr.bf16.mxu0 0
  %1971 = vmatpush1.bf16.msra.mxu0 0
  %1972 = vmatprep.subr.bf16.mxu0 0
  %1973 = vmatpush1.bf16.msra.mxu0 0
  %1974 = vmatprep.subr.bf16.mxu0 0
  %1975 = vmatpush1.bf16.msra.mxu0 0
  %1976 = vmatprep.subr.bf16.mxu0 0
  %1977 = vmatpush1.bf16.msra.mxu0 0
  %1978 = vmatprep.subr.bf16.mxu0 0
  %1979 = vmatpush1.bf16.msra.mxu0 0
  %1980 = vmatprep.subr.bf16.mxu0 0
  %1981 = vmatpush1.bf16.msra.mxu0 0
  %1982 = vmatprep.subr.bf16.mxu0 0
  %1983 = vmatpush1.bf16.msra.mxu0 0
  %1984 = vmatprep.subr.bf16.mxu0 0
  %1985 = vmatpush1.bf16.msra.mxu0 0
  %1986 = vmatprep.subr.bf16.mxu0 0
  %1987 = vmatpush1.bf16.msra.mxu0 0
  %1988 = vmatprep.subr.bf16.mxu0 0
  %1989 = vmatpush1.bf16.msra.mxu0 0
  %1990 = vmatprep.subr.bf16.mxu0 0
  %1991 = vmatpush1.bf16.msra.mxu0 0
  %1992 = vmatprep.mubr.bf16.mxu0 0
  %1993 = vmatmul.mubr.bf16.gmra.mrb[0].mxu0 %v1657
  %v1994 = vpop.f32.mrb[0].mxu0
  %v1995 = vadd.f32 %v1952, %v1994
  %v1996 = vpop.f32.mrb[0].mxu0
  %v1997 = vadd.f32 %v1954, %v1996
  %v1998 = vpop.f32.mrb[0].mxu0
  %v1999 = vadd.f32 %v1956, %v1998
  %v2000 = vpop.f32.mrb[0].mxu0
  %v2001 = vadd.f32 %v1958, %v2000
  %2002 = vdwg.mxu0
  %2003 = vmatprep.subr.bf16.mxu0 0
  %2004 = vmatpush1.bf16.msra.mxu0 %v1169
  %2005 = vmatprep.subr.bf16.mxu0 0
  %2006 = vmatpush1.bf16.msra.mxu0 %v1174
  %2007 = vmatprep.subr.bf16.mxu0 0
  %2008 = vmatpush1.bf16.msra.mxu0 %v1179
  %2009 = vmatprep.subr.bf16.mxu0 0
  %2010 = vmatpush1.bf16.msra.mxu0 %v1184
  %2011 = vmatprep.subr.bf16.mxu0 0
  %2012 = vmatpush1.bf16.msra.mxu0 %v1189
  %2013 = vmatprep.subr.bf16.mxu0 0
  %2014 = vmatpush1.bf16.msra.mxu0 %v1194
  %2015 = vmatprep.subr.bf16.mxu0 0
  %2016 = vmatpush1.bf16.msra.mxu0 %v1199
  %2017 = vmatprep.subr.bf16.mxu0 0
  %2018 = vmatpush1.bf16.msra.mxu0 %v1204
  %2019 = vmatprep.subr.bf16.mxu0 0
  %2020 = vmatpush1.bf16.msra.mxu0 %v1209
  %2021 = vmatprep.subr.bf16.mxu0 0
  %2022 = vmatpush1.bf16.msra.mxu0 %v1214
  %2023 = vmatprep.subr.bf16.mxu0 0
  %2024 = vmatpush1.bf16.msra.mxu0 %v1219
  %2025 = vmatprep.subr.bf16.mxu0 0
  %2026 = vmatpush1.bf16.msra.mxu0 %v1224
  %2027 = vmatprep.subr.bf16.mxu0 0
  %2028 = vmatpush1.bf16.msra.mxu0 %v1229
  %2029 = vmatprep.subr.bf16.mxu0 0
  %2030 = vmatpush1.bf16.msra.mxu0 %v1234
  %2031 = vmatprep.subr.bf16.mxu0 0
  %2032 = vmatpush1.bf16.msra.mxu0 %v1239
  %2033 = vmatprep.subr.bf16.mxu0 0
  %2034 = vmatpush1.bf16.msra.mxu0 %v1244
  %2035 = vmatprep.mubr.bf16.mxu0 %v54
  %2036 = vmatmul.mubr.bf16.gmra.mrb[0].mxu0 %v53
  %v2037 = vpop.f32.mrb[0].mxu0
  %v2038 = vadd.f32 %v375, %v2037
  %v2039 = vpop.f32.mrb[0].mxu0
  %v2040 = vpop.f32.mrb[0].mxu0
  %v2041 = vadd.f32 %v375, %v2040
  %v2042 = vpop.f32.mrb[0].mxu0
  %2043 = vdwg.mxu0
  %2044 = vmatprep.subr.bf16.mxu0 0
  %2045 = vmatpush1.bf16.msra.mxu0 %v1249
  %2046 = vmatprep.subr.bf16.mxu0 0
  %2047 = vmatpush1.bf16.msra.mxu0 %v1254
  %2048 = vmatprep.subr.bf16.mxu0 0
  %2049 = vmatpush1.bf16.msra.mxu0 %v1259
  %2050 = vmatprep.subr.bf16.mxu0 0
  %2051 = vmatpush1.bf16.msra.mxu0 %v1264
  %2052 = vmatprep.subr.bf16.mxu0 0
  %2053 = vmatpush1.bf16.msra.mxu0 %v1269
  %2054 = vmatprep.subr.bf16.mxu0 0
  %2055 = vmatpush1.bf16.msra.mxu0 %v1274
  %2056 = vmatprep.subr.bf16.mxu0 0
  %2057 = vmatpush1.bf16.msra.mxu0 %v1279
  %2058 = vmatprep.subr.bf16.mxu0 0
  %2059 = vmatpush1.bf16.msra.mxu0 %v1284
  %2060 = vmatprep.subr.bf16.mxu0 0
  %2061 = vmatpush1.bf16.msra.mxu0 %v1289
  %2062 = vmatprep.subr.bf16.mxu0 0
  %2063 = vmatpush1.bf16.msra.mxu0 %v1294
  %2064 = vmatprep.subr.bf16.mxu0 0
  %2065 = vmatpush1.bf16.msra.mxu0 %v1299
  %2066 = vmatprep.subr.bf16.mxu0 0
  %2067 = vmatpush1.bf16.msra.mxu0 %v1304
  %2068 = vmatprep.subr.bf16.mxu0 0
  %2069 = vmatpush1.bf16.msra.mxu0 %v1309
  %2070 = vmatprep.subr.bf16.mxu0 0
  %2071 = vmatpush1.bf16.msra.mxu0 %v1314
  %2072 = vmatprep.subr.bf16.mxu0 0
  %2073 = vmatpush1.bf16.msra.mxu0 %v1319
  %2074 = vmatprep.subr.bf16.mxu0 0
  %2075 = vmatpush1.bf16.msra.mxu0 %v1324
  %2076 = vmatprep.mubr.bf16.mxu0 %v56
  %2077 = vmatmul.mubr.bf16.gmra.mrb[0].mxu0 %v55
  %v2078 = vpop.f32.mrb[0].mxu0
  %v2079 = vadd.f32 %v2038, %v2078
  %v2080 = vpop.f32.mrb[0].mxu0
  %v2081 = vpop.f32.mrb[0].mxu0
  %v2082 = vadd.f32 %v2041, %v2081
  %v2083 = vpop.f32.mrb[0].mxu0
  %2084 = vdwg.mxu0
  %2085 = vmatprep.subr.bf16.mxu0 0
  %2086 = vmatpush1.bf16.msra.mxu0 %v1329
  %2087 = vmatprep.subr.bf16.mxu0 0
  %2088 = vmatpush1.bf16.msra.mxu0 %v1334
  %2089 = vmatprep.subr.bf16.mxu0 0
  %2090 = vmatpush1.bf16.msra.mxu0 %v1339
  %2091 = vmatprep.subr.bf16.mxu0 0
  %2092 = vmatpush1.bf16.msra.mxu0 %v1344
  %2093 = vmatprep.subr.bf16.mxu0 0
  %2094 = vmatpush1.bf16.msra.mxu0 %v1349
  %2095 = vmatprep.subr.bf16.mxu0 0
  %2096 = vmatpush1.bf16.msra.mxu0 %v1354
  %2097 = vmatprep.subr.bf16.mxu0 0
  %2098 = vmatpush1.bf16.msra.mxu0 %v1359
  %2099 = vmatprep.subr.bf16.mxu0 0
  %2100 = vmatpush1.bf16.msra.mxu0 %v1364
  %2101 = vmatprep.subr.bf16.mxu0 0
  %2102 = vmatpush1.bf16.msra.mxu0 %v1369
  %2103 = vmatprep.subr.bf16.mxu0 0
  %2104 = vmatpush1.bf16.msra.mxu0 %v1374
  %2105 = vmatprep.subr.bf16.mxu0 0
  %2106 = vmatpush1.bf16.msra.mxu0 %v1379
  %2107 = vmatprep.subr.bf16.mxu0 0
  %2108 = vmatpush1.bf16.msra.mxu0 %v1384
  %2109 = vmatprep.subr.bf16.mxu0 0
  %2110 = vmatpush1.bf16.msra.mxu0 %v1389
  %2111 = vmatprep.subr.bf16.mxu0 0
  %2112 = vmatpush1.bf16.msra.mxu0 %v1394
  %2113 = vmatprep.subr.bf16.mxu0 0
  %2114 = vmatpush1.bf16.msra.mxu0 %v1399
  %2115 = vmatprep.subr.bf16.mxu0 0
  %2116 = vmatpush1.bf16.msra.mxu0 %v1404
  %2117 = vmatprep.mubr.bf16.mxu0 %v58
  %2118 = vmatmul.mubr.bf16.gmra.mrb[0].mxu0 %v57
  %v2119 = vpop.f32.mrb[0].mxu0
  %v2120 = vadd.f32 %v2079, %v2119
  %v2121 = vpop.f32.mrb[0].mxu0
  %v2122 = vpop.f32.mrb[0].mxu0
  %v2123 = vadd.f32 %v2082, %v2122
  %v2124 = vpop.f32.mrb[0].mxu0
  %2125 = vdwg.mxu0
  %2126 = vmatprep.subr.bf16.mxu0 0
  %2127 = vmatpush1.bf16.msra.mxu0 %v1409
  %2128 = vmatprep.subr.bf16.mxu0 0
  %2129 = vmatpush1.bf16.msra.mxu0 0
  %2130 = vmatprep.subr.bf16.mxu0 0
  %2131 = vmatpush1.bf16.msra.mxu0 0
  %2132 = vmatprep.subr.bf16.mxu0 0
  %2133 = vmatpush1.bf16.msra.mxu0 0
  %2134 = vmatprep.subr.bf16.mxu0 0
  %2135 = vmatpush1.bf16.msra.mxu0 0
  %2136 = vmatprep.subr.bf16.mxu0 0
  %2137 = vmatpush1.bf16.msra.mxu0 0
  %2138 = vmatprep.subr.bf16.mxu0 0
  %2139 = vmatpush1.bf16.msra.mxu0 0
  %2140 = vmatprep.subr.bf16.mxu0 0
  %2141 = vmatpush1.bf16.msra.mxu0 0
  %2142 = vmatprep.subr.bf16.mxu0 0
  %2143 = vmatpush1.bf16.msra.mxu0 0
  %2144 = vmatprep.subr.bf16.mxu0 0
  %2145 = vmatpush1.bf16.msra.mxu0 0
  %2146 = vmatprep.subr.bf16.mxu0 0
  %2147 = vmatpush1.bf16.msra.mxu0 0
  %2148 = vmatprep.subr.bf16.mxu0 0
  %2149 = vmatpush1.bf16.msra.mxu0 0
  %2150 = vmatprep.subr.bf16.mxu0 0
  %2151 = vmatpush1.bf16.msra.mxu0 0
  %2152 = vmatprep.subr.bf16.mxu0 0
  %2153 = vmatpush1.bf16.msra.mxu0 0
  %2154 = vmatprep.subr.bf16.mxu0 0
  %2155 = vmatpush1.bf16.msra.mxu0 0
  %2156 = vmatprep.subr.bf16.mxu0 0
  %2157 = vmatpush1.bf16.msra.mxu0 0
  %2158 = vmatprep.mubr.bf16.mxu0 0
  %2159 = vmatmul.mubr.bf16.gmra.mrb[0].mxu0 %v1657
  %v2160 = vpop.f32.mrb[0].mxu0
  %v2161 = vadd.f32 %v2120, %v2160
  %v2162 = vpop.f32.mrb[0].mxu0
  %v2163 = vpop.f32.mrb[0].mxu0
  %v2164 = vadd.f32 %v2123, %v2163
  %v2165 = vpop.f32.mrb[0].mxu0
  %2166 = vdwg.mxu0
  %v2167 = vmax.f32 %v1823, 0.0
  %v2168 = vmax.f32 %v1825, 0.0
  %v2169 = vmax.f32 %v1995, 0.0
  %v2170 = vmax.f32 %v1997, 0.0
  %v2171 = vmax.f32 %v2161, 0.0
  %v2172 = vmax.f32 %v1827, 0.0
  %v2173 = vmax.f32 %v1829, 0.0
  %v2174 = vmax.f32 %v1999, 0.0
  %v2175 = vmax.f32 %v2001, 0.0
  %v2176 = vmax.f32 %v2164, 0.0
  %v2177 = vpack.c.bf16 %v2172, %v2167
  %v2178 = vpack.c.bf16 %v2173, %v2168
  %v2179 = vpack.c.bf16 %v2174, %v2169
  %v2180 = vpack.c.bf16 %v2175, %v2170
  %v2181 = vpack.c.bf16 %v2176, %v2171
  %v2182 = vld [vmem:[%s3] sm:$0xff]
  %v2183 = vld [vmem:[%s3 + $0x8] sm:$0xf]
  %v2184 = vld [vmem:[%s3 + $0xc] sm:$0xff]
  %v2185 = vld [vmem:[%s3 + $0x14] sm:$0xf]
  %v2186 = vld [vmem:[%s3 + $0x18] sm:$0xff]
  %v2187 = vld [vmem:[%s3 + $0x20] sm:$0xf]
  %v2188 = vld [vmem:[%s3 + $0x24] sm:$0xff]
  %v2189 = vld [vmem:[%s3 + $0x2c] sm:$0xf]
  %v2190 = vld [vmem:[%s3 + $0x30] sm:$0xff]
  %v2191 = vld [vmem:[%s3 + $0x38] sm:$0xf]
  %v2192 = vld [vmem:[%s3 + $0x3c] sm:$0xff]
  %v2193 = vld [vmem:[%s3 + $0x44] sm:$0xf]
  %v2194 = vld [vmem:[%s3 + $0x48] sm:$0xff]
  %v2195 = vld [vmem:[%s3 + $0x50] sm:$0xf]
  %v2196 = vld [vmem:[%s3 + $0x54] sm:$0xff]
  %v2197 = vld [vmem:[%s3 + $0x5c] sm:$0xf]
  %v2198 = vld [vmem:[%s3 + $0x60] sm:$0xff]
  %v2199 = vld [vmem:[%s3 + $0x68] sm:$0xf]
  %v2200 = vld [vmem:[%s3 + $0x6c] sm:$0xff]
  %v2201 = vld [vmem:[%s3 + $0x74] sm:$0xf]
  %v2202 = vld [vmem:[%s3 + $0x78] sm:$0xff]
  %v2203 = vld [vmem:[%s3 + $0x80] sm:$0xf]
  %v2204 = vld [vmem:[%s3 + $0x84] sm:$0xff]
  %v2205 = vld [vmem:[%s3 + $0x8c] sm:$0xf]
  %v2206 = vld [vmem:[%s3 + $0x90] sm:$0xff]
  %v2207 = vld [vmem:[%s3 + $0x98] sm:$0xf]
  %v2208 = vld [vmem:[%s3 + $0x9c] sm:$0xff]
  %v2209 = vld [vmem:[%s3 + $0xa4] sm:$0xf]
  %v2210 = vld [vmem:[%s3 + $0xa8] sm:$0xff]
  %v2211 = vld [vmem:[%s3 + $0xb0] sm:$0xf]
  %v2212 = vld [vmem:[%s3 + $0xb4] sm:$0xff]
  %v2213 = vld [vmem:[%s3 + $0xbc] sm:$0xf]
  %v2214 = vld [vmem:[%s3 + $0xc0] sm:$0xff]
  %v2215 = vld [vmem:[%s3 + $0xc8] sm:$0xf]
  %v2216 = vld [vmem:[%s3 + $0xcc] sm:$0xff]
  %v2217 = vld [vmem:[%s3 + $0xd4] sm:$0xf]
  %v2218 = vld [vmem:[%s3 + $0xd8] sm:$0xff]
  %v2219 = vld [vmem:[%s3 + $0xe0] sm:$0xf]
  %v2220 = vld [vmem:[%s3 + $0xe4] sm:$0xff]
  %v2221 = vld [vmem:[%s3 + $0xec] sm:$0xf]
  %v2222 = vld [vmem:[%s3 + $0xf0] sm:$0xff]
  %v2223 = vld [vmem:[%s3 + $0xf8] sm:$0xf]
  %v2224 = vld [vmem:[%s3 + $0xfc] sm:$0xff]
  %v2225 = vld [vmem:[%s3 + $0x104] sm:$0xf]
  %v2226 = vld [vmem:[%s3 + $0x108] sm:$0xff]
  %v2227 = vld [vmem:[%s3 + $0x110] sm:$0xf]
  %v2228 = vld [vmem:[%s3 + $0x114] sm:$0xff]
  %v2229 = vld [vmem:[%s3 + $0x11c] sm:$0xf]
  %v2230 = vld [vmem:[%s3 + $0x120] sm:$0xff]
  %v2231 = vld [vmem:[%s3 + $0x128] sm:$0xf]
  %v2232 = vld [vmem:[%s3 + $0x12c] sm:$0xff]
  %v2233 = vld [vmem:[%s3 + $0x134] sm:$0xf]
  %v2234 = vld [vmem:[%s3 + $0x138] sm:$0xff]
  %v2235 = vld [vmem:[%s3 + $0x140] sm:$0xf]
  %v2236 = vld [vmem:[%s3 + $0x144] sm:$0xff]
  %v2237 = vld [vmem:[%s3 + $0x14c] sm:$0xf]
  %v2238 = vld [vmem:[%s3 + $0x150] sm:$0xff]
  %v2239 = vld [vmem:[%s3 + $0x158] sm:$0xf]
  %v2240 = vld [vmem:[%s3 + $0x15c] sm:$0xff]
  %v2241 = vld [vmem:[%s3 + $0x164] sm:$0xf]
  %v2242 = vld [vmem:[%s3 + $0x168] sm:$0xff]
  %v2243 = vld [vmem:[%s3 + $0x170] sm:$0xf]
  %v2244 = vld [vmem:[%s3 + $0x174] sm:$0xff]
  %v2245 = vld [vmem:[%s3 + $0x17c] sm:$0xf]
  %v2246 = vld [vmem:[%s3 + $0x180] sm:$0xff]
  %v2247 = vld [vmem:[%s3 + $0x188] sm:$0xf]
  %v2248 = vld [vmem:[%s3 + $0x18c] sm:$0xff]
  %v2249 = vld [vmem:[%s3 + $0x194] sm:$0xf]
  %v2250 = vld [vmem:[%s3 + $0x198] sm:$0xff]
  %v2251 = vld [vmem:[%s3 + $0x1a0] sm:$0xf]
  %v2252 = vld [vmem:[%s3 + $0x1a4] sm:$0xff]
  %v2253 = vld [vmem:[%s3 + $0x1ac] sm:$0xf]
  %v2254 = vld [vmem:[%s3 + $0x1b0] sm:$0xff]
  %v2255 = vld [vmem:[%s3 + $0x1b8] sm:$0xf]
  %v2256 = vld [vmem:[%s3 + $0x1bc] sm:$0xff]
  %v2257 = vld [vmem:[%s3 + $0x1c4] sm:$0xf]
  %v2258 = vld [vmem:[%s3 + $0x1c8] sm:$0xff]
  %v2259 = vld [vmem:[%s3 + $0x1d0] sm:$0xf]
  %v2260 = vld [vmem:[%s3 + $0x1d4] sm:$0xff]
  %v2261 = vld [vmem:[%s3 + $0x1dc] sm:$0xf]
  %v2262 = vld [vmem:[%s3 + $0x1e0] sm:$0xff]
  %v2263 = vld [vmem:[%s3 + $0x1e8] sm:$0xf]
  %v2264 = vld [vmem:[%s3 + $0x1ec] sm:$0xff]
  %v2265 = vld [vmem:[%s3 + $0x1f4] sm:$0xf]
  %v2266 = vld [vmem:[%s3 + $0x1f8] sm:$0xff]
  %v2267 = vld [vmem:[%s3 + $0x200] sm:$0xf]
  %v2268 = vld [vmem:[%s3 + $0x204] sm:$0xff]
  %v2269 = vld [vmem:[%s3 + $0x20c] sm:$0xf]
  %v2270 = vld [vmem:[%s3 + $0x210] sm:$0xff]
  %v2271 = vld [vmem:[%s3 + $0x218] sm:$0xf]
  %v2272 = vld [vmem:[%s3 + $0x21c] sm:$0xff]
  %v2273 = vld [vmem:[%s3 + $0x224] sm:$0xf]
  %v2274 = vld [vmem:[%s3 + $0x228] sm:$0xff]
  %v2275 = vld [vmem:[%s3 + $0x230] sm:$0xf]
  %v2276 = vld [vmem:[%s3 + $0x234] sm:$0xff]
  %v2277 = vld [vmem:[%s3 + $0x23c] sm:$0xf]
  %v2278 = vld [vmem:[%s3 + $0x240] sm:$0xff]
  %v2279 = vld [vmem:[%s3 + $0x248] sm:$0xf]
  %v2280 = vld [vmem:[%s3 + $0x24c] sm:$0xff]
  %v2281 = vld [vmem:[%s3 + $0x254] sm:$0xf]
  %v2282 = vld [vmem:[%s3 + $0x258] sm:$0xff]
  %v2283 = vld [vmem:[%s3 + $0x260] sm:$0xf]
  %v2284 = vld [vmem:[%s3 + $0x264] sm:$0xff]
  %v2285 = vld [vmem:[%s3 + $0x26c] sm:$0xf]
  %v2286 = vld [vmem:[%s3 + $0x270] sm:$0xff]
  %v2287 = vld [vmem:[%s3 + $0x278] sm:$0xf]
  %v2288 = vld [vmem:[%s3 + $0x27c] sm:$0xff]
  %v2289 = vld [vmem:[%s3 + $0x284] sm:$0xf]
  %v2290 = vld [vmem:[%s3 + $0x288] sm:$0xff]
  %v2291 = vld [vmem:[%s3 + $0x290] sm:$0xf]
  %v2292 = vld [vmem:[%s3 + $0x294] sm:$0xff]
  %v2293 = vld [vmem:[%s3 + $0x29c] sm:$0xf]
  %v2294 = vld [vmem:[%s3 + $0x2a0] sm:$0xff]
  %v2295 = vld [vmem:[%s3 + $0x2a8] sm:$0xf]
  %v2296 = vld [vmem:[%s3 + $0x2ac] sm:$0xff]
  %v2297 = vld [vmem:[%s3 + $0x2b4] sm:$0xf]
  %v2298 = vld [vmem:[%s3 + $0x2b8] sm:$0xff]
  %v2299 = vld [vmem:[%s3 + $0x2c0] sm:$0xf]
  %v2300 = vld [vmem:[%s3 + $0x2c4] sm:$0xff]
  %v2301 = vld [vmem:[%s3 + $0x2cc] sm:$0xf]
  %v2302 = vld [vmem:[%s3 + $0x2d0] sm:$0xff]
  %v2303 = vld [vmem:[%s3 + $0x2d8] sm:$0xf]
  %v2304 = vld [vmem:[%s3 + $0x2dc] sm:$0xff]
  %v2305 = vld [vmem:[%s3 + $0x2e4] sm:$0xf]
  %v2306 = vld [vmem:[%s3 + $0x2e8] sm:$0xff]
  %v2307 = vld [vmem:[%s3 + $0x2f0] sm:$0xf]
  %v2308 = vld [vmem:[%s3 + $0x2f4] sm:$0xff]
  %v2309 = vld [vmem:[%s3 + $0x2fc] sm:$0xf]
  %v2310 = vld [vmem:[%s3 + $0x300] sm:$0xff]
  %v2311 = vld [vmem:[%s3 + $0x308] sm:$0xf]
  %v2312 = vld [vmem:[%s3 + $0x30c] sm:$0xff]
  %v2313 = vld [vmem:[%s3 + $0x314] sm:$0xf]
  %v2314 = vld [vmem:[%s3 + $0x318] sm:$0xff]
  %v2315 = vld [vmem:[%s3 + $0x320] sm:$0xf]
  %v2316 = vld [vmem:[%s3 + $0x324] sm:$0xff]
  %v2317 = vld [vmem:[%s3 + $0x32c] sm:$0xf]
  %v2318 = vld [vmem:[%s3 + $0x330] sm:$0xff]
  %v2319 = vld [vmem:[%s3 + $0x338] sm:$0xf]
  %v2320 = vld [vmem:[%s3 + $0x33c] sm:$0xff]
  %v2321 = vld [vmem:[%s3 + $0x344] sm:$0xf]
  %v2322 = vld [vmem:[%s3 + $0x348] sm:$0xff]
  %v2323 = vld [vmem:[%s3 + $0x350] sm:$0xf]
  %v2324 = vld [vmem:[%s3 + $0x354] sm:$0xff]
  %v2325 = vld [vmem:[%s3 + $0x35c] sm:$0xf]
  %v2326 = vld [vmem:[%s3 + $0x360] sm:$0xff]
  %v2327 = vld [vmem:[%s3 + $0x368] sm:$0xf]
  %v2328 = vld [vmem:[%s3 + $0x36c] sm:$0xff]
  %v2329 = vld [vmem:[%s3 + $0x374] sm:$0xf]
  %v2330 = vld [vmem:[%s3 + $0x378] sm:$0xff]
  %v2331 = vld [vmem:[%s3 + $0x380] sm:$0xf]
  %v2332 = vld [vmem:[%s3 + $0x384] sm:$0xff]
  %v2333 = vld [vmem:[%s3 + $0x38c] sm:$0xf]
  %v2334 = vld [vmem:[%s3 + $0x390] sm:$0xff]
  %v2335 = vld [vmem:[%s3 + $0x398] sm:$0xf]
  %v2336 = vld [vmem:[%s3 + $0x39c] sm:$0xff]
  %v2337 = vld [vmem:[%s3 + $0x3a4] sm:$0xf]
  %v2338 = vld [vmem:[%s3 + $0x3a8] sm:$0xff]
  %v2339 = vld [vmem:[%s3 + $0x3b0] sm:$0xf]
  %v2340 = vld [vmem:[%s3 + $0x3b4] sm:$0xff]
  %v2341 = vld [vmem:[%s3 + $0x3bc] sm:$0xf]
  %v2342 = vld [vmem:[%s4] sm:$0x7]
  %v2344 = vlaneseq
  %v2345 = vshrl.u32 %v2344, 7
  %v2346 = vsub.s32 0, %v2345
  %v2347 = vrot.slane %v2342, %v2346
  %v2348 = vlaneseq
  %v2349 = vshrl.u32 %v2348, 7
  %v2350 = vsub.s32 1, %v2349
  %v2351 = vrot.slane %v2342, %v2350
  %v2352 = vlaneseq
  %v2353 = vshrl.u32 %v2352, 7
  %v2354 = vsub.s32 2, %v2353
  %v2355 = vrot.slane %v2342, %v2354
  %v2519 = vunpack.c.l.b16 %v2182
  %v2520 = vunpack.c.h.b16 %v2182
  %v2521 = vunpack.c.l.b16 %v2183
  %v2522 = vunpack.c.l.b16 %v2184
  %v2523 = vunpack.c.h.b16 %v2184
  %v2524 = vunpack.c.l.b16 %v2185
  %v2525 = vunpack.c.l.b16 %v2186
  %v2526 = vunpack.c.h.b16 %v2186
  %v2527 = vunpack.c.l.b16 %v2187
  %v2528 = vunpack.c.l.b16 %v2188
  %v2529 = vunpack.c.h.b16 %v2188
  %v2530 = vunpack.c.l.b16 %v2189
  %v2531 = vunpack.c.l.b16 %v2190
  %v2532 = vunpack.c.h.b16 %v2190
  %v2533 = vunpack.c.l.b16 %v2191
  %v2534 = vunpack.c.l.b16 %v2192
  %v2535 = vunpack.c.h.b16 %v2192
  %v2536 = vunpack.c.l.b16 %v2193
  %v2537 = vunpack.c.l.b16 %v2194
  %v2538 = vunpack.c.h.b16 %v2194
  %v2539 = vunpack.c.l.b16 %v2195
  %v2540 = vunpack.c.l.b16 %v2196
  %v2541 = vunpack.c.h.b16 %v2196
  %v2542 = vunpack.c.l.b16 %v2197
  %v2543 = vunpack.c.l.b16 %v2198
  %v2544 = vunpack.c.h.b16 %v2198
  %v2545 = vunpack.c.l.b16 %v2199
  %v2546 = vunpack.c.l.b16 %v2200
  %v2547 = vunpack.c.h.b16 %v2200
  %v2548 = vunpack.c.l.b16 %v2201
  %v2549 = vunpack.c.l.b16 %v2202
  %v2550 = vunpack.c.h.b16 %v2202
  %v2551 = vunpack.c.l.b16 %v2203
  %v2552 = vunpack.c.l.b16 %v2204
  %v2553 = vunpack.c.h.b16 %v2204
  %v2554 = vunpack.c.l.b16 %v2205
  %v2555 = vunpack.c.l.b16 %v2206
  %v2556 = vunpack.c.h.b16 %v2206
  %v2557 = vunpack.c.l.b16 %v2207
  %v2558 = vunpack.c.l.b16 %v2208
  %v2559 = vunpack.c.h.b16 %v2208
  %v2560 = vunpack.c.l.b16 %v2209
  %v2561 = vunpack.c.l.b16 %v2210
  %v2562 = vunpack.c.h.b16 %v2210
  %v2563 = vunpack.c.l.b16 %v2211
  %v2564 = vunpack.c.l.b16 %v2212
  %v2565 = vunpack.c.h.b16 %v2212
  %v2566 = vunpack.c.l.b16 %v2213
  %v2567 = vunpack.c.l.b16 %v2214
  %v2568 = vunpack.c.h.b16 %v2214
  %v2569 = vunpack.c.l.b16 %v2215
  %v2570 = vunpack.c.l.b16 %v2216
  %v2571 = vunpack.c.h.b16 %v2216
  %v2572 = vunpack.c.l.b16 %v2217
  %v2573 = vunpack.c.l.b16 %v2218
  %v2574 = vunpack.c.h.b16 %v2218
  %v2575 = vunpack.c.l.b16 %v2219
  %v2576 = vunpack.c.l.b16 %v2220
  %v2577 = vunpack.c.h.b16 %v2220
  %v2578 = vunpack.c.l.b16 %v2221
  %v2579 = vunpack.c.l.b16 %v2222
  %v2580 = vunpack.c.h.b16 %v2222
  %v2581 = vunpack.c.l.b16 %v2223
  %v2582 = vunpack.c.l.b16 %v2224
  %v2583 = vunpack.c.h.b16 %v2224
  %v2584 = vunpack.c.l.b16 %v2225
  %v2585 = vunpack.c.l.b16 %v2226
  %v2586 = vunpack.c.h.b16 %v2226
  %v2587 = vunpack.c.l.b16 %v2227
  %v2588 = vunpack.c.l.b16 %v2228
  %v2589 = vunpack.c.h.b16 %v2228
  %v2590 = vunpack.c.l.b16 %v2229
  %v2591 = vunpack.c.l.b16 %v2230
  %v2592 = vunpack.c.h.b16 %v2230
  %v2593 = vunpack.c.l.b16 %v2231
  %v2594 = vunpack.c.l.b16 %v2232
  %v2595 = vunpack.c.h.b16 %v2232
  %v2596 = vunpack.c.l.b16 %v2233
  %v2597 = vunpack.c.l.b16 %v2234
  %v2598 = vunpack.c.h.b16 %v2234
  %v2599 = vunpack.c.l.b16 %v2235
  %v2600 = vunpack.c.l.b16 %v2236
  %v2601 = vunpack.c.h.b16 %v2236
  %v2602 = vunpack.c.l.b16 %v2237
  %v2603 = vunpack.c.l.b16 %v2238
  %v2604 = vunpack.c.h.b16 %v2238
  %v2605 = vunpack.c.l.b16 %v2239
  %v2606 = vunpack.c.l.b16 %v2240
  %v2607 = vunpack.c.h.b16 %v2240
  %v2608 = vunpack.c.l.b16 %v2241
  %v2609 = vunpack.c.l.b16 %v2242
  %v2610 = vunpack.c.h.b16 %v2242
  %v2611 = vunpack.c.l.b16 %v2243
  %v2612 = vunpack.c.l.b16 %v2244
  %v2613 = vunpack.c.h.b16 %v2244
  %v2614 = vunpack.c.l.b16 %v2245
  %v2615 = vunpack.c.l.b16 %v2246
  %v2616 = vunpack.c.h.b16 %v2246
  %v2617 = vunpack.c.l.b16 %v2247
  %v2618 = vunpack.c.l.b16 %v2248
  %v2619 = vunpack.c.h.b16 %v2248
  %v2620 = vunpack.c.l.b16 %v2249
  %v2621 = vunpack.c.l.b16 %v2250
  %v2622 = vunpack.c.h.b16 %v2250
  %v2623 = vunpack.c.l.b16 %v2251
  %v2624 = vunpack.c.l.b16 %v2252
  %v2625 = vunpack.c.h.b16 %v2252
  %v2626 = vunpack.c.l.b16 %v2253
  %v2627 = vunpack.c.l.b16 %v2254
  %v2628 = vunpack.c.h.b16 %v2254
  %v2629 = vunpack.c.l.b16 %v2255
  %v2630 = vunpack.c.l.b16 %v2256
  %v2631 = vunpack.c.h.b16 %v2256
  %v2632 = vunpack.c.l.b16 %v2257
  %v2633 = vunpack.c.l.b16 %v2258
  %v2634 = vunpack.c.h.b16 %v2258
  %v2635 = vunpack.c.l.b16 %v2259
  %v2636 = vunpack.c.l.b16 %v2260
  %v2637 = vunpack.c.h.b16 %v2260
  %v2638 = vunpack.c.l.b16 %v2261
  %v2639 = vunpack.c.l.b16 %v2262
  %v2640 = vunpack.c.h.b16 %v2262
  %v2641 = vunpack.c.l.b16 %v2263
  %v2642 = vunpack.c.l.b16 %v2264
  %v2643 = vunpack.c.h.b16 %v2264
  %v2644 = vunpack.c.l.b16 %v2265
  %v2645 = vunpack.c.l.b16 %v2266
  %v2646 = vunpack.c.h.b16 %v2266
  %v2647 = vunpack.c.l.b16 %v2267
  %v2648 = vunpack.c.l.b16 %v2268
  %v2649 = vunpack.c.h.b16 %v2268
  %v2650 = vunpack.c.l.b16 %v2269
  %v2651 = vunpack.c.l.b16 %v2270
  %v2652 = vunpack.c.h.b16 %v2270
  %v2653 = vunpack.c.l.b16 %v2271
  %v2654 = vunpack.c.l.b16 %v2272
  %v2655 = vunpack.c.h.b16 %v2272
  %v2656 = vunpack.c.l.b16 %v2273
  %v2657 = vunpack.c.l.b16 %v2274
  %v2658 = vunpack.c.h.b16 %v2274
  %v2659 = vunpack.c.l.b16 %v2275
  %v2660 = vunpack.c.l.b16 %v2276
  %v2661 = vunpack.c.h.b16 %v2276
  %v2662 = vunpack.c.l.b16 %v2277
  %v2663 = vunpack.c.l.b16 %v2278
  %v2664 = vunpack.c.h.b16 %v2278
  %v2665 = vunpack.c.l.b16 %v2279
  %v2666 = vunpack.c.l.b16 %v2280
  %v2667 = vunpack.c.h.b16 %v2280
  %v2668 = vunpack.c.l.b16 %v2281
  %v2669 = vunpack.c.l.b16 %v2282
  %v2670 = vunpack.c.h.b16 %v2282
  %v2671 = vunpack.c.l.b16 %v2283
  %v2672 = vunpack.c.l.b16 %v2284
  %v2673 = vunpack.c.h.b16 %v2284
  %v2674 = vunpack.c.l.b16 %v2285
  %v2675 = vunpack.c.l.b16 %v2286
  %v2676 = vunpack.c.h.b16 %v2286
  %v2677 = vunpack.c.l.b16 %v2287
  %v2678 = vunpack.c.l.b16 %v2288
  %v2679 = vunpack.c.h.b16 %v2288
  %v2680 = vunpack.c.l.b16 %v2289
  %v2681 = vunpack.c.l.b16 %v2290
  %v2682 = vunpack.c.h.b16 %v2290
  %v2683 = vunpack.c.l.b16 %v2291
  %v2684 = vunpack.c.l.b16 %v2292
  %v2685 = vunpack.c.h.b16 %v2292
  %v2686 = vunpack.c.l.b16 %v2293
  %v2687 = vunpack.c.l.b16 %v2294
  %v2688 = vunpack.c.h.b16 %v2294
  %v2689 = vunpack.c.l.b16 %v2295
  %v2690 = vunpack.c.l.b16 %v2296
  %v2691 = vunpack.c.h.b16 %v2296
  %v2692 = vunpack.c.l.b16 %v2297
  %v2693 = vunpack.c.l.b16 %v2298
  %v2694 = vunpack.c.h.b16 %v2298
  %v2695 = vunpack.c.l.b16 %v2299
  %v2696 = vunpack.c.l.b16 %v2300
  %v2697 = vunpack.c.h.b16 %v2300
  %v2698 = vunpack.c.l.b16 %v2301
  %v2699 = vunpack.c.l.b16 %v2302
  %v2700 = vunpack.c.h.b16 %v2302
  %v2701 = vunpack.c.l.b16 %v2303
  %v2702 = vunpack.c.l.b16 %v2304
  %v2703 = vunpack.c.h.b16 %v2304
  %v2704 = vunpack.c.l.b16 %v2305
  %v2705 = vunpack.c.l.b16 %v2306
  %v2706 = vunpack.c.h.b16 %v2306
  %v2707 = vunpack.c.l.b16 %v2307
  %v2708 = vunpack.c.l.b16 %v2308
  %v2709 = vunpack.c.h.b16 %v2308
  %v2710 = vunpack.c.l.b16 %v2309
  %v2711 = vunpack.c.l.b16 %v2310
  %v2712 = vunpack.c.h.b16 %v2310
  %v2713 = vunpack.c.l.b16 %v2311
  %v2714 = vunpack.c.l.b16 %v2312
  %v2715 = vunpack.c.h.b16 %v2312
  %v2716 = vunpack.c.l.b16 %v2313
  %v2717 = vunpack.c.l.b16 %v2314
  %v2718 = vunpack.c.h.b16 %v2314
  %v2719 = vunpack.c.l.b16 %v2315
  %v2720 = vunpack.c.l.b16 %v2316
  %v2721 = vunpack.c.h.b16 %v2316
  %v2722 = vunpack.c.l.b16 %v2317
  %v2723 = vunpack.c.l.b16 %v2318
  %v2724 = vunpack.c.h.b16 %v2318
  %v2725 = vunpack.c.l.b16 %v2319
  %v2726 = vunpack.c.l.b16 %v2320
  %v2727 = vunpack.c.h.b16 %v2320
  %v2728 = vunpack.c.l.b16 %v2321
  %v2729 = vunpack.c.l.b16 %v2322
  %v2730 = vunpack.c.h.b16 %v2322
  %v2731 = vunpack.c.l.b16 %v2323
  %v2732 = vunpack.c.l.b16 %v2324
  %v2733 = vunpack.c.h.b16 %v2324
  %v2734 = vunpack.c.l.b16 %v2325
  %v2735 = vunpack.c.l.b16 %v2326
  %v2736 = vunpack.c.h.b16 %v2326
  %v2737 = vunpack.c.l.b16 %v2327
  %v2738 = vunpack.c.l.b16 %v2328
  %v2739 = vunpack.c.h.b16 %v2328
  %v2740 = vunpack.c.l.b16 %v2329
  %v2741 = vunpack.c.l.b16 %v2330
  %v2742 = vunpack.c.h.b16 %v2330
  %v2743 = vunpack.c.l.b16 %v2331
  %v2744 = vunpack.c.l.b16 %v2332
  %v2745 = vunpack.c.h.b16 %v2332
  %v2746 = vunpack.c.l.b16 %v2333
  %v2747 = vunpack.c.l.b16 %v2334
  %v2748 = vunpack.c.h.b16 %v2334
  %v2749 = vunpack.c.l.b16 %v2335
  %v2750 = vunpack.c.l.b16 %v2336
  %v2751 = vunpack.c.h.b16 %v2336
  %v2752 = vunpack.c.l.b16 %v2337
  %v2753 = vunpack.c.l.b16 %v2338
  %v2754 = vunpack.c.h.b16 %v2338
  %v2755 = vunpack.c.l.b16 %v2339
  %v2756 = vunpack.c.l.b16 %v2340
  %v2757 = vunpack.c.h.b16 %v2340
  %v2758 = vunpack.c.l.b16 %v2341
  %v2759 = vpack.c.b16 %v2522, %v2519
  %v2760 = vpack.c.b16 %v2523, %v2520
  %v2761 = vpack.c.b16 %v2524, %v2521
  %v2762 = vpack.c.b16 %v2528, %v2525
  %v2763 = vpack.c.b16 %v2529, %v2526
  %v2764 = vpack.c.b16 %v2530, %v2527
  %v2765 = vpack.c.b16 %v2534, %v2531
  %v2766 = vpack.c.b16 %v2535, %v2532
  %v2767 = vpack.c.b16 %v2536, %v2533
  %v2768 = vpack.c.b16 %v2540, %v2537
  %v2769 = vpack.c.b16 %v2541, %v2538
  %v2770 = vpack.c.b16 %v2542, %v2539
  %v2771 = vpack.c.b16 %v2546, %v2543
  %v2772 = vpack.c.b16 %v2547, %v2544
  %v2773 = vpack.c.b16 %v2548, %v2545
  %v2774 = vpack.c.b16 %v2552, %v2549
  %v2775 = vpack.c.b16 %v2553, %v2550
  %v2776 = vpack.c.b16 %v2554, %v2551
  %v2777 = vpack.c.b16 %v2558, %v2555
  %v2778 = vpack.c.b16 %v2559, %v2556
  %v2779 = vpack.c.b16 %v2560, %v2557
  %v2780 = vpack.c.b16 %v2564, %v2561
  %v2781 = vpack.c.b16 %v2565, %v2562
  %v2782 = vpack.c.b16 %v2566, %v2563
  %v2783 = vpack.c.b16 %v2570, %v2567
  %v2784 = vpack.c.b16 %v2571, %v2568
  %v2785 = vpack.c.b16 %v2572, %v2569
  %v2786 = vpack.c.b16 %v2576, %v2573
  %v2787 = vpack.c.b16 %v2577, %v2574
  %v2788 = vpack.c.b16 %v2578, %v2575
  %v2789 = vpack.c.b16 %v2582, %v2579
  %v2790 = vpack.c.b16 %v2583, %v2580
  %v2791 = vpack.c.b16 %v2584, %v2581
  %v2792 = vpack.c.b16 %v2588, %v2585
  %v2793 = vpack.c.b16 %v2589, %v2586
  %v2794 = vpack.c.b16 %v2590, %v2587
  %v2795 = vpack.c.b16 %v2594, %v2591
  %v2796 = vpack.c.b16 %v2595, %v2592
  %v2797 = vpack.c.b16 %v2596, %v2593
  %v2798 = vpack.c.b16 %v2600, %v2597
  %v2799 = vpack.c.b16 %v2601, %v2598
  %v2800 = vpack.c.b16 %v2602, %v2599
  %v2801 = vpack.c.b16 %v2606, %v2603
  %v2802 = vpack.c.b16 %v2607, %v2604
  %v2803 = vpack.c.b16 %v2608, %v2605
  %v2804 = vpack.c.b16 %v2612, %v2609
  %v2805 = vpack.c.b16 %v2613, %v2610
  %v2806 = vpack.c.b16 %v2614, %v2611
  %v2807 = vpack.c.b16 %v2618, %v2615
  %v2808 = vpack.c.b16 %v2619, %v2616
  %v2809 = vpack.c.b16 %v2620, %v2617
  %v2810 = vpack.c.b16 %v2624, %v2621
  %v2811 = vpack.c.b16 %v2625, %v2622
  %v2812 = vpack.c.b16 %v2626, %v2623
  %v2813 = vpack.c.b16 %v2630, %v2627
  %v2814 = vpack.c.b16 %v2631, %v2628
  %v2815 = vpack.c.b16 %v2632, %v2629
  %v2816 = vpack.c.b16 %v2636, %v2633
  %v2817 = vpack.c.b16 %v2637, %v2634
  %v2818 = vpack.c.b16 %v2638, %v2635
  %v2819 = vpack.c.b16 %v2642, %v2639
  %v2820 = vpack.c.b16 %v2643, %v2640
  %v2821 = vpack.c.b16 %v2644, %v2641
  %v2822 = vpack.c.b16 %v2648, %v2645
  %v2823 = vpack.c.b16 %v2649, %v2646
  %v2824 = vpack.c.b16 %v2650, %v2647
  %v2825 = vpack.c.b16 %v2654, %v2651
  %v2826 = vpack.c.b16 %v2655, %v2652
  %v2827 = vpack.c.b16 %v2656, %v2653
  %v2828 = vpack.c.b16 %v2660, %v2657
  %v2829 = vpack.c.b16 %v2661, %v2658
  %v2830 = vpack.c.b16 %v2662, %v2659
  %v2831 = vpack.c.b16 %v2666, %v2663
  %v2832 = vpack.c.b16 %v2667, %v2664
  %v2833 = vpack.c.b16 %v2668, %v2665
  %v2834 = vpack.c.b16 %v2672, %v2669
  %v2835 = vpack.c.b16 %v2673, %v2670
  %v2836 = vpack.c.b16 %v2674, %v2671
  %v2837 = vpack.c.b16 %v2678, %v2675
  %v2838 = vpack.c.b16 %v2679, %v2676
  %v2839 = vpack.c.b16 %v2680, %v2677
  %v2840 = vpack.c.b16 %v2684, %v2681
  %v2841 = vpack.c.b16 %v2685, %v2682
  %v2842 = vpack.c.b16 %v2686, %v2683
  %v2843 = vpack.c.b16 %v2690, %v2687
  %v2844 = vpack.c.b16 %v2691, %v2688
  %v2845 = vpack.c.b16 %v2692, %v2689
  %v2846 = vpack.c.b16 %v2696, %v2693
  %v2847 = vpack.c.b16 %v2697, %v2694
  %v2848 = vpack.c.b16 %v2698, %v2695
  %v2849 = vpack.c.b16 %v2702, %v2699
  %v2850 = vpack.c.b16 %v2703, %v2700
  %v2851 = vpack.c.b16 %v2704, %v2701
  %v2852 = vpack.c.b16 %v2708, %v2705
  %v2853 = vpack.c.b16 %v2709, %v2706
  %v2854 = vpack.c.b16 %v2710, %v2707
  %v2855 = vpack.c.b16 %v2714, %v2711
  %v2856 = vpack.c.b16 %v2715, %v2712
  %v2857 = vpack.c.b16 %v2716, %v2713
  %v2858 = vpack.c.b16 %v2720, %v2717
  %v2859 = vpack.c.b16 %v2721, %v2718
  %v2860 = vpack.c.b16 %v2722, %v2719
  %v2861 = vpack.c.b16 %v2726, %v2723
  %v2862 = vpack.c.b16 %v2727, %v2724
  %v2863 = vpack.c.b16 %v2728, %v2725
  %v2864 = vpack.c.b16 %v2732, %v2729
  %v2865 = vpack.c.b16 %v2733, %v2730
  %v2866 = vpack.c.b16 %v2734, %v2731
  %v2867 = vpack.c.b16 %v2738, %v2735
  %v2868 = vpack.c.b16 %v2739, %v2736
  %v2869 = vpack.c.b16 %v2740, %v2737
  %v2870 = vpack.c.b16 %v2744, %v2741
  %v2871 = vpack.c.b16 %v2745, %v2742
  %v2872 = vpack.c.b16 %v2746, %v2743
  %v2873 = vpack.c.b16 %v2750, %v2747
  %v2874 = vpack.c.b16 %v2751, %v2748
  %v2875 = vpack.c.b16 %v2752, %v2749
  %v2876 = vpack.c.b16 %v2756, %v2753
  %v2877 = vpack.c.b16 %v2757, %v2754
  %v2878 = vpack.c.b16 %v2758, %v2755
  %2999 = vmatprep.subr.bf16.mxu0 %v2760
  %3000 = vmatpush1.bf16.msra.mxu0 %v2759
  %3001 = vmatprep.subr.bf16.mxu0 %v2763
  %3002 = vmatpush1.bf16.msra.mxu0 %v2762
  %3003 = vmatprep.subr.bf16.mxu0 %v2766
  %3004 = vmatpush1.bf16.msra.mxu0 %v2765
  %3005 = vmatprep.subr.bf16.mxu0 %v2769
  %3006 = vmatpush1.bf16.msra.mxu0 %v2768
  %3007 = vmatprep.subr.bf16.mxu0 %v2772
  %3008 = vmatpush1.bf16.msra.mxu0 %v2771
  %3009 = vmatprep.subr.bf16.mxu0 %v2775
  %3010 = vmatpush1.bf16.msra.mxu0 %v2774
  %3011 = vmatprep.subr.bf16.mxu0 %v2778
  %3012 = vmatpush1.bf16.msra.mxu0 %v2777
  %3013 = vmatprep.subr.bf16.mxu0 %v2781
  %3014 = vmatpush1.bf16.msra.mxu0 %v2780
  %3015 = vmatprep.subr.bf16.mxu0 %v2784
  %3016 = vmatpush1.bf16.msra.mxu0 %v2783
  %3017 = vmatprep.subr.bf16.mxu0 %v2787
  %3018 = vmatpush1.bf16.msra.mxu0 %v2786
  %3019 = vmatprep.subr.bf16.mxu0 %v2790
  %3020 = vmatpush1.bf16.msra.mxu0 %v2789
  %3021 = vmatprep.subr.bf16.mxu0 %v2793
  %3022 = vmatpush1.bf16.msra.mxu0 %v2792
  %3023 = vmatprep.subr.bf16.mxu0 %v2796
  %3024 = vmatpush1.bf16.msra.mxu0 %v2795
  %3025 = vmatprep.subr.bf16.mxu0 %v2799
  %3026 = vmatpush1.bf16.msra.mxu0 %v2798
  %3027 = vmatprep.subr.bf16.mxu0 %v2802
  %3028 = vmatpush1.bf16.msra.mxu0 %v2801
  %3029 = vmatprep.subr.bf16.mxu0 %v2805
  %3030 = vmatpush1.bf16.msra.mxu0 %v2804
  %3031 = vmatprep.mubr.bf16.mxu0 %v2178
  %3032 = vmatmul.mubr.bf16.gmra.mrb[0].mxu0 %v2177
  %v3033 = vpop.f32.mrb[0].mxu0
  %v3034 = vadd.f32 %v2347, %v3033
  %v3035 = vpop.f32.mrb[0].mxu0
  %v3036 = vadd.f32 %v2351, %v3035
  %v3037 = vpop.f32.mrb[0].mxu0
  %v3038 = vadd.f32 %v2347, %v3037
  %v3039 = vpop.f32.mrb[0].mxu0
  %v3040 = vadd.f32 %v2351, %v3039
  %3041 = vdwg.mxu0
  %3042 = vmatprep.subr.bf16.mxu0 %v2808
  %3043 = vmatpush1.bf16.msra.mxu0 %v2807
  %3044 = vmatprep.subr.bf16.mxu0 %v2811
  %3045 = vmatpush1.bf16.msra.mxu0 %v2810
  %3046 = vmatprep.subr.bf16.mxu0 %v2814
  %3047 = vmatpush1.bf16.msra.mxu0 %v2813
  %3048 = vmatprep.subr.bf16.mxu0 %v2817
  %3049 = vmatpush1.bf16.msra.mxu0 %v2816
  %3050 = vmatprep.subr.bf16.mxu0 %v2820
  %3051 = vmatpush1.bf16.msra.mxu0 %v2819
  %3052 = vmatprep.subr.bf16.mxu0 %v2823
  %3053 = vmatpush1.bf16.msra.mxu0 %v2822
  %3054 = vmatprep.subr.bf16.mxu0 %v2826
  %3055 = vmatpush1.bf16.msra.mxu0 %v2825
  %3056 = vmatprep.subr.bf16.mxu0 %v2829
  %3057 = vmatpush1.bf16.msra.mxu0 %v2828
  %3058 = vmatprep.subr.bf16.mxu0 %v2832
  %3059 = vmatpush1.bf16.msra.mxu0 %v2831
  %3060 = vmatprep.subr.bf16.mxu0 %v2835
  %3061 = vmatpush1.bf16.msra.mxu0 %v2834
  %3062 = vmatprep.subr.bf16.mxu0 %v2838
  %3063 = vmatpush1.bf16.msra.mxu0 %v2837
  %3064 = vmatprep.subr.bf16.mxu0 %v2841
  %3065 = vmatpush1.bf16.msra.mxu0 %v2840
  %3066 = vmatprep.subr.bf16.mxu0 %v2844
  %3067 = vmatpush1.bf16.msra.mxu0 %v2843
  %3068 = vmatprep.subr.bf16.mxu0 %v2847
  %3069 = vmatpush1.bf16.msra.mxu0 %v2846
  %3070 = vmatprep.subr.bf16.mxu0 %v2850
  %3071 = vmatpush1.bf16.msra.mxu0 %v2849
  %3072 = vmatprep.subr.bf16.mxu0 %v2853
  %3073 = vmatpush1.bf16.msra.mxu0 %v2852
  %3074 = vmatprep.mubr.bf16.mxu0 %v2180
  %3075 = vmatmul.mubr.bf16.gmra.mrb[0].mxu0 %v2179
  %v3076 = vpop.f32.mrb[0].mxu0
  %v3077 = vadd.f32 %v3034, %v3076
  %v3078 = vpop.f32.mrb[0].mxu0
  %v3079 = vadd.f32 %v3036, %v3078
  %v3080 = vpop.f32.mrb[0].mxu0
  %v3081 = vadd.f32 %v3038, %v3080
  %v3082 = vpop.f32.mrb[0].mxu0
  %v3083 = vadd.f32 %v3040, %v3082
  %3084 = vdwg.mxu0
  %3085 = vmatprep.subr.bf16.mxu0 %v2856
  %3086 = vmatpush1.bf16.msra.mxu0 %v2855
  %3087 = vmatprep.subr.bf16.mxu0 %v2859
  %3088 = vmatpush1.bf16.msra.mxu0 %v2858
  %3089 = vmatprep.subr.bf16.mxu0 %v2862
  %3090 = vmatpush1.bf16.msra.mxu0 %v2861
  %3091 = vmatprep.subr.bf16.mxu0 %v2865
  %3092 = vmatpush1.bf16.msra.mxu0 %v2864
  %3093 = vmatprep.subr.bf16.mxu0 %v2868
  %3094 = vmatpush1.bf16.msra.mxu0 %v2867
  %3095 = vmatprep.subr.bf16.mxu0 %v2871
  %3096 = vmatpush1.bf16.msra.mxu0 %v2870
  %3097 = vmatprep.subr.bf16.mxu0 %v2874
  %3098 = vmatpush1.bf16.msra.mxu0 %v2873
  %3099 = vmatprep.subr.bf16.mxu0 %v2877
  %3100 = vmatpush1.bf16.msra.mxu0 %v2876
  %3101 = vmatprep.subr.bf16.mxu0 0
  %3102 = vmatpush1.bf16.msra.mxu0 0
  %3103 = vmatprep.subr.bf16.mxu0 0
  %3104 = vmatpush1.bf16.msra.mxu0 0
  %3105 = vmatprep.subr.bf16.mxu0 0
  %3106 = vmatpush1.bf16.msra.mxu0 0
  %3107 = vmatprep.subr.bf16.mxu0 0
  %3108 = vmatpush1.bf16.msra.mxu0 0
  %3109 = vmatprep.subr.bf16.mxu0 0
  %3110 = vmatpush1.bf16.msra.mxu0 0
  %3111 = vmatprep.subr.bf16.mxu0 0
  %3112 = vmatpush1.bf16.msra.mxu0 0
  %3113 = vmatprep.subr.bf16.mxu0 0
  %3114 = vmatpush1.bf16.msra.mxu0 0
  %3115 = vmatprep.subr.bf16.mxu0 0
  %3116 = vmatpush1.bf16.msra.mxu0 0
  %3117 = vmatprep.mubr.bf16.mxu0 0
  %3118 = vmatmul.mubr.bf16.gmra.mrb[0].mxu0 %v2181
  %v3119 = vpop.f32.mrb[0].mxu0
  %v3120 = vadd.f32 %v3077, %v3119
  %v3121 = vpop.f32.mrb[0].mxu0
  %v3122 = vadd.f32 %v3079, %v3121
  %v3123 = vpop.f32.mrb[0].mxu0
  %v3124 = vadd.f32 %v3081, %v3123
  %v3125 = vpop.f32.mrb[0].mxu0
  %v3126 = vadd.f32 %v3083, %v3125
  %3127 = vdwg.mxu0
  %3128 = vmatprep.subr.bf16.mxu0 0
  %3129 = vmatpush1.bf16.msra.mxu0 %v2761
  %3130 = vmatprep.subr.bf16.mxu0 0
  %3131 = vmatpush1.bf16.msra.mxu0 %v2764
  %3132 = vmatprep.subr.bf16.mxu0 0
  %3133 = vmatpush1.bf16.msra.mxu0 %v2767
  %3134 = vmatprep.subr.bf16.mxu0 0
  %3135 = vmatpush1.bf16.msra.mxu0 %v2770
  %3136 = vmatprep.subr.bf16.mxu0 0
  %3137 = vmatpush1.bf16.msra.mxu0 %v2773
  %3138 = vmatprep.subr.bf16.mxu0 0
  %3139 = vmatpush1.bf16.msra.mxu0 %v2776
  %3140 = vmatprep.subr.bf16.mxu0 0
  %3141 = vmatpush1.bf16.msra.mxu0 %v2779
  %3142 = vmatprep.subr.bf16.mxu0 0
  %3143 = vmatpush1.bf16.msra.mxu0 %v2782
  %3144 = vmatprep.subr.bf16.mxu0 0
  %3145 = vmatpush1.bf16.msra.mxu0 %v2785
  %3146 = vmatprep.subr.bf16.mxu0 0
  %3147 = vmatpush1.bf16.msra.mxu0 %v2788
  %3148 = vmatprep.subr.bf16.mxu0 0
  %3149 = vmatpush1.bf16.msra.mxu0 %v2791
  %3150 = vmatprep.subr.bf16.mxu0 0
  %3151 = vmatpush1.bf16.msra.mxu0 %v2794
  %3152 = vmatprep.subr.bf16.mxu0 0
  %3153 = vmatpush1.bf16.msra.mxu0 %v2797
  %3154 = vmatprep.subr.bf16.mxu0 0
  %3155 = vmatpush1.bf16.msra.mxu0 %v2800
  %3156 = vmatprep.subr.bf16.mxu0 0
  %3157 = vmatpush1.bf16.msra.mxu0 %v2803
  %3158 = vmatprep.subr.bf16.mxu0 0
  %3159 = vmatpush1.bf16.msra.mxu0 %v2806
  %3160 = vmatprep.mubr.bf16.mxu0 %v2178
  %3161 = vmatmul.mubr.bf16.gmra.mrb[0].mxu0 %v2177
  %v3162 = vpop.f32.mrb[0].mxu0
  %v3163 = vadd.f32 %v2355, %v3162
  %v3164 = vpop.f32.mrb[0].mxu0
  %v3165 = vpop.f32.mrb[0].mxu0
  %v3166 = vadd.f32 %v2355, %v3165
  %v3167 = vpop.f32.mrb[0].mxu0
  %3168 = vdwg.mxu0
  %3169 = vmatprep.subr.bf16.mxu0 0
  %3170 = vmatpush1.bf16.msra.mxu0 %v2809
  %3171 = vmatprep.subr.bf16.mxu0 0
  %3172 = vmatpush1.bf16.msra.mxu0 %v2812
  %3173 = vmatprep.subr.bf16.mxu0 0
  %3174 = vmatpush1.bf16.msra.mxu0 %v2815
  %3175 = vmatprep.subr.bf16.mxu0 0
  %3176 = vmatpush1.bf16.msra.mxu0 %v2818
  %3177 = vmatprep.subr.bf16.mxu0 0
  %3178 = vmatpush1.bf16.msra.mxu0 %v2821
  %3179 = vmatprep.subr.bf16.mxu0 0
  %3180 = vmatpush1.bf16.msra.mxu0 %v2824
  %3181 = vmatprep.subr.bf16.mxu0 0
  %3182 = vmatpush1.bf16.msra.mxu0 %v2827
  %3183 = vmatprep.subr.bf16.mxu0 0
  %3184 = vmatpush1.bf16.msra.mxu0 %v2830
  %3185 = vmatprep.subr.bf16.mxu0 0
  %3186 = vmatpush1.bf16.msra.mxu0 %v2833
  %3187 = vmatprep.subr.bf16.mxu0 0
  %3188 = vmatpush1.bf16.msra.mxu0 %v2836
  %3189 = vmatprep.subr.bf16.mxu0 0
  %3190 = vmatpush1.bf16.msra.mxu0 %v2839
  %3191 = vmatprep.subr.bf16.mxu0 0
  %3192 = vmatpush1.bf16.msra.mxu0 %v2842
  %3193 = vmatprep.subr.bf16.mxu0 0
  %3194 = vmatpush1.bf16.msra.mxu0 %v2845
  %3195 = vmatprep.subr.bf16.mxu0 0
  %3196 = vmatpush1.bf16.msra.mxu0 %v2848
  %3197 = vmatprep.subr.bf16.mxu0 0
  %3198 = vmatpush1.bf16.msra.mxu0 %v2851
  %3199 = vmatprep.subr.bf16.mxu0 0
  %3200 = vmatpush1.bf16.msra.mxu0 %v2854
  %3201 = vmatprep.mubr.bf16.mxu0 %v2180
  %3202 = vmatmul.mubr.bf16.gmra.mrb[0].mxu0 %v2179
  %v3203 = vpop.f32.mrb[0].mxu0
  %v3204 = vadd.f32 %v3163, %v3203
  %v3205 = vpop.f32.mrb[0].mxu0
  %v3206 = vpop.f32.mrb[0].mxu0
  %v3207 = vadd.f32 %v3166, %v3206
  %v3208 = vpop.f32.mrb[0].mxu0
  %3209 = vdwg.mxu0
  %3210 = vmatprep.subr.bf16.mxu0 0
  %3211 = vmatpush1.bf16.msra.mxu0 %v2857
  %3212 = vmatprep.subr.bf16.mxu0 0
  %3213 = vmatpush1.bf16.msra.mxu0 %v2860
  %3214 = vmatprep.subr.bf16.mxu0 0
  %3215 = vmatpush1.bf16.msra.mxu0 %v2863
  %3216 = vmatprep.subr.bf16.mxu0 0
  %3217 = vmatpush1.bf16.msra.mxu0 %v2866
  %3218 = vmatprep.subr.bf16.mxu0 0
  %3219 = vmatpush1.bf16.msra.mxu0 %v2869
  %3220 = vmatprep.subr.bf16.mxu0 0
  %3221 = vmatpush1.bf16.msra.mxu0 %v2872
  %3222 = vmatprep.subr.bf16.mxu0 0
  %3223 = vmatpush1.bf16.msra.mxu0 %v2875
  %3224 = vmatprep.subr.bf16.mxu0 0
  %3225 = vmatpush1.bf16.msra.mxu0 %v2878
  %3226 = vmatprep.subr.bf16.mxu0 0
  %3227 = vmatpush1.bf16.msra.mxu0 0
  %3228 = vmatprep.subr.bf16.mxu0 0
  %3229 = vmatpush1.bf16.msra.mxu0 0
  %3230 = vmatprep.subr.bf16.mxu0 0
  %3231 = vmatpush1.bf16.msra.mxu0 0
  %3232 = vmatprep.subr.bf16.mxu0 0
  %3233 = vmatpush1.bf16.msra.mxu0 0
  %3234 = vmatprep.subr.bf16.mxu0 0
  %3235 = vmatpush1.bf16.msra.mxu0 0
  %3236 = vmatprep.subr.bf16.mxu0 0
  %3237 = vmatpush1.bf16.msra.mxu0 0
  %3238 = vmatprep.subr.bf16.mxu0 0
  %3239 = vmatpush1.bf16.msra.mxu0 0
  %3240 = vmatprep.subr.bf16.mxu0 0
  %3241 = vmatpush1.bf16.msra.mxu0 0
  %3242 = vmatprep.mubr.bf16.mxu0 0
  %3243 = vmatmul.mubr.bf16.gmra.mrb[0].mxu0 %v2181
  %v3244 = vpop.f32.mrb[0].mxu0
  %v3245 = vadd.f32 %v3204, %v3244
  %v3246 = vpop.f32.mrb[0].mxu0
  %v3247 = vpop.f32.mrb[0].mxu0
  %v3248 = vadd.f32 %v3207, %v3247
  %v3249 = vpop.f32.mrb[0].mxu0
  %3250 = vdwg.mxu0
  %v3251 = vmax.f32 %v3120, 0.0
  %v3252 = vmax.f32 %v3122, 0.0
  %v3253 = vmax.f32 %v3245, 0.0
  %v3254 = vmax.f32 %v3124, 0.0
  %v3255 = vmax.f32 %v3126, 0.0
  %v3256 = vmax.f32 %v3248, 0.0
  %v3257 = vpack.c.bf16 %v3254, %v3251
  %v3258 = vpack.c.bf16 %v3255, %v3252
  %v3259 = vpack.c.bf16 %v3256, %v3253
  %v3260 = vld [vmem:[%s5] sm:$0xff]
  %v3261 = vld [vmem:[%s5 + $0x8] sm:$0xff]
  %v3262 = vld [vmem:[%s5 + $0x10] sm:$0xff]
  %v3263 = vld [vmem:[%s5 + $0x18] sm:$0xff]
  %v3264 = vld [vmem:[%s5 + $0x20] sm:$0xff]
  %v3265 = vld [vmem:[%s5 + $0x28] sm:$0xff]
  %v3266 = vld [vmem:[%s5 + $0x30] sm:$0xff]
  %v3267 = vld [vmem:[%s5 + $0x38] sm:$0xff]
  %v3268 = vld [vmem:[%s5 + $0x40] sm:$0xff]
  %v3269 = vld [vmem:[%s5 + $0x48] sm:$0xff]
  %v3270 = vld [vmem:[%s5 + $0x50] sm:$0xff]
  %v3271 = vld [vmem:[%s5 + $0x58] sm:$0xff]
  %v3272 = vld [vmem:[%s5 + $0x60] sm:$0xff]
  %v3273 = vld [vmem:[%s5 + $0x68] sm:$0xff]
  %v3274 = vld [vmem:[%s5 + $0x70] sm:$0xff]
  %v3275 = vld [vmem:[%s5 + $0x78] sm:$0xff]
  %v3276 = vld [vmem:[%s5 + $0x80] sm:$0xff]
  %v3277 = vld [vmem:[%s5 + $0x88] sm:$0xff]
  %v3278 = vld [vmem:[%s5 + $0x90] sm:$0xff]
  %v3279 = vld [vmem:[%s5 + $0x98] sm:$0xff]
  %v3280 = vld [vmem:[%s5 + $0xa0] sm:$0xff]
  %v3281 = vld [vmem:[%s5 + $0xa8] sm:$0xff]
  %v3282 = vld [vmem:[%s5 + $0xb0] sm:$0xff]
  %v3283 = vld [vmem:[%s5 + $0xb8] sm:$0xff]
  %v3284 = vld [vmem:[%s5 + $0xc0] sm:$0xff]
  %v3285 = vld [vmem:[%s5 + $0xc8] sm:$0xff]
  %v3286 = vld [vmem:[%s5 + $0xd0] sm:$0xff]
  %v3287 = vld [vmem:[%s5 + $0xd8] sm:$0xff]
  %v3288 = vld [vmem:[%s5 + $0xe0] sm:$0xff]
  %v3289 = vld [vmem:[%s5 + $0xe8] sm:$0xff]
  %v3290 = vld [vmem:[%s5 + $0xf0] sm:$0xff]
  %v3291 = vld [vmem:[%s5 + $0xf8] sm:$0xff]
  %v3292 = vld [vmem:[%s5 + $0x100] sm:$0xff]
  %v3293 = vld [vmem:[%s5 + $0x108] sm:$0xff]
  %v3294 = vld [vmem:[%s5 + $0x110] sm:$0xff]
  %v3295 = vld [vmem:[%s5 + $0x118] sm:$0xff]
  %v3296 = vld [vmem:[%s5 + $0x120] sm:$0xff]
  %v3297 = vld [vmem:[%s5 + $0x128] sm:$0xff]
  %v3298 = vld [vmem:[%s5 + $0x130] sm:$0xff]
  %v3299 = vld [vmem:[%s5 + $0x138] sm:$0xff]
  %v3300 = vld [vmem:[%s5 + $0x140] sm:$0xff]
  %v3301 = vld [vmem:[%s5 + $0x148] sm:$0xff]
  %v3302 = vld [vmem:[%s5 + $0x150] sm:$0xff]
  %v3303 = vld [vmem:[%s5 + $0x158] sm:$0xff]
  %v3304 = vld [vmem:[%s5 + $0x160] sm:$0xff]
  %v3305 = vld [vmem:[%s5 + $0x168] sm:$0xff]
  %v3306 = vld [vmem:[%s5 + $0x170] sm:$0xff]
  %v3307 = vld [vmem:[%s5 + $0x178] sm:$0xff]
  %v3308 = vld [vmem:[%s6] sm:$0x3]
  %v3310 = vlaneseq
  %v3311 = vshrl.u32 %v3310, 7
  %v3312 = vsub.s32 0, %v3311
  %v3313 = vrot.slane %v3308, %v3312
  %v3314 = vlaneseq
  %v3315 = vshrl.u32 %v3314, 7
  %v3316 = vsub.s32 1, %v3315
  %v3317 = vrot.slane %v3308, %v3316
  %v3368 = vunpack.c.l.b16 %v3260
  %v3369 = vunpack.c.h.b16 %v3260
  %v3370 = vunpack.c.l.b16 %v3261
  %v3371 = vunpack.c.h.b16 %v3261
  %v3372 = vunpack.c.l.b16 %v3262
  %v3373 = vunpack.c.h.b16 %v3262
  %v3374 = vunpack.c.l.b16 %v3263
  %v3375 = vunpack.c.h.b16 %v3263
  %v3376 = vunpack.c.l.b16 %v3264
  %v3377 = vunpack.c.h.b16 %v3264
  %v3378 = vunpack.c.l.b16 %v3265
  %v3379 = vunpack.c.h.b16 %v3265
  %v3380 = vunpack.c.l.b16 %v3266
  %v3381 = vunpack.c.h.b16 %v3266
  %v3382 = vunpack.c.l.b16 %v3267
  %v3383 = vunpack.c.h.b16 %v3267
  %v3384 = vunpack.c.l.b16 %v3268
  %v3385 = vunpack.c.h.b16 %v3268
  %v3386 = vunpack.c.l.b16 %v3269
  %v3387 = vunpack.c.h.b16 %v3269
  %v3388 = vunpack.c.l.b16 %v3270
  %v3389 = vunpack.c.h.b16 %v3270
  %v3390 = vunpack.c.l.b16 %v3271
  %v3391 = vunpack.c.h.b16 %v3271
  %v3392 = vunpack.c.l.b16 %v3272
  %v3393 = vunpack.c.h.b16 %v3272
  %v3394 = vunpack.c.l.b16 %v3273
  %v3395 = vunpack.c.h.b16 %v3273
  %v3396 = vunpack.c.l.b16 %v3274
  %v3397 = vunpack.c.h.b16 %v3274
  %v3398 = vunpack.c.l.b16 %v3275
  %v3399 = vunpack.c.h.b16 %v3275
  %v3400 = vunpack.c.l.b16 %v3276
  %v3401 = vunpack.c.h.b16 %v3276
  %v3402 = vunpack.c.l.b16 %v3277
  %v3403 = vunpack.c.h.b16 %v3277
  %v3404 = vunpack.c.l.b16 %v3278
  %v3405 = vunpack.c.h.b16 %v3278
  %v3406 = vunpack.c.l.b16 %v3279
  %v3407 = vunpack.c.h.b16 %v3279
  %v3408 = vunpack.c.l.b16 %v3280
  %v3409 = vunpack.c.h.b16 %v3280
  %v3410 = vunpack.c.l.b16 %v3281
  %v3411 = vunpack.c.h.b16 %v3281
  %v3412 = vunpack.c.l.b16 %v3282
  %v3413 = vunpack.c.h.b16 %v3282
  %v3414 = vunpack.c.l.b16 %v3283
  %v3415 = vunpack.c.h.b16 %v3283
  %v3416 = vunpack.c.l.b16 %v3284
  %v3417 = vunpack.c.h.b16 %v3284
  %v3418 = vunpack.c.l.b16 %v3285
  %v3419 = vunpack.c.h.b16 %v3285
  %v3420 = vunpack.c.l.b16 %v3286
  %v3421 = vunpack.c.h.b16 %v3286
  %v3422 = vunpack.c.l.b16 %v3287
  %v3423 = vunpack.c.h.b16 %v3287
  %v3424 = vunpack.c.l.b16 %v3288
  %v3425 = vunpack.c.h.b16 %v3288
  %v3426 = vunpack.c.l.b16 %v3289
  %v3427 = vunpack.c.h.b16 %v3289
  %v3428 = vunpack.c.l.b16 %v3290
  %v3429 = vunpack.c.h.b16 %v3290
  %v3430 = vunpack.c.l.b16 %v3291
  %v3431 = vunpack.c.h.b16 %v3291
  %v3432 = vunpack.c.l.b16 %v3292
  %v3433 = vunpack.c.h.b16 %v3292
  %v3434 = vunpack.c.l.b16 %v3293
  %v3435 = vunpack.c.h.b16 %v3293
  %v3436 = vunpack.c.l.b16 %v3294
  %v3437 = vunpack.c.h.b16 %v3294
  %v3438 = vunpack.c.l.b16 %v3295
  %v3439 = vunpack.c.h.b16 %v3295
  %v3440 = vunpack.c.l.b16 %v3296
  %v3441 = vunpack.c.h.b16 %v3296
  %v3442 = vunpack.c.l.b16 %v3297
  %v3443 = vunpack.c.h.b16 %v3297
  %v3444 = vunpack.c.l.b16 %v3298
  %v3445 = vunpack.c.h.b16 %v3298
  %v3446 = vunpack.c.l.b16 %v3299
  %v3447 = vunpack.c.h.b16 %v3299
  %v3448 = vunpack.c.l.b16 %v3300
  %v3449 = vunpack.c.h.b16 %v3300
  %v3450 = vunpack.c.l.b16 %v3301
  %v3451 = vunpack.c.h.b16 %v3301
  %v3452 = vunpack.c.l.b16 %v3302
  %v3453 = vunpack.c.h.b16 %v3302
  %v3454 = vunpack.c.l.b16 %v3303
  %v3455 = vunpack.c.h.b16 %v3303
  %v3456 = vunpack.c.l.b16 %v3304
  %v3457 = vunpack.c.h.b16 %v3304
  %v3458 = vunpack.c.l.b16 %v3305
  %v3459 = vunpack.c.h.b16 %v3305
  %v3460 = vunpack.c.l.b16 %v3306
  %v3461 = vunpack.c.h.b16 %v3306
  %v3462 = vunpack.c.l.b16 %v3307
  %v3463 = vunpack.c.h.b16 %v3307
  %v3464 = vpack.c.b16 %v3370, %v3368
  %v3465 = vpack.c.b16 %v3371, %v3369
  %v3466 = vpack.c.b16 %v3374, %v3372
  %v3467 = vpack.c.b16 %v3375, %v3373
  %v3468 = vpack.c.b16 %v3378, %v3376
  %v3469 = vpack.c.b16 %v3379, %v3377
  %v3470 = vpack.c.b16 %v3382, %v3380
  %v3471 = vpack.c.b16 %v3383, %v3381
  %v3472 = vpack.c.b16 %v3386, %v3384
  %v3473 = vpack.c.b16 %v3387, %v3385
  %v3474 = vpack.c.b16 %v3390, %v3388
  %v3475 = vpack.c.b16 %v3391, %v3389
  %v3476 = vpack.c.b16 %v3394, %v3392
  %v3477 = vpack.c.b16 %v3395, %v3393
  %v3478 = vpack.c.b16 %v3398, %v3396
  %v3479 = vpack.c.b16 %v3399, %v3397
  %v3480 = vpack.c.b16 %v3402, %v3400
  %v3481 = vpack.c.b16 %v3403, %v3401
  %v3482 = vpack.c.b16 %v3406, %v3404
  %v3483 = vpack.c.b16 %v3407, %v3405
  %v3484 = vpack.c.b16 %v3410, %v3408
  %v3485 = vpack.c.b16 %v3411, %v3409
  %v3486 = vpack.c.b16 %v3414, %v3412
  %v3487 = vpack.c.b16 %v3415, %v3413
  %v3488 = vpack.c.b16 %v3418, %v3416
  %v3489 = vpack.c.b16 %v3419, %v3417
  %v3490 = vpack.c.b16 %v3422, %v3420
  %v3491 = vpack.c.b16 %v3423, %v3421
  %v3492 = vpack.c.b16 %v3426, %v3424
  %v3493 = vpack.c.b16 %v3427, %v3425
  %v3494 = vpack.c.b16 %v3430, %v3428
  %v3495 = vpack.c.b16 %v3431, %v3429
  %v3496 = vpack.c.b16 %v3434, %v3432
  %v3497 = vpack.c.b16 %v3435, %v3433
  %v3498 = vpack.c.b16 %v3438, %v3436
  %v3499 = vpack.c.b16 %v3439, %v3437
  %v3500 = vpack.c.b16 %v3442, %v3440
  %v3501 = vpack.c.b16 %v3443, %v3441
  %v3502 = vpack.c.b16 %v3446, %v3444
  %v3503 = vpack.c.b16 %v3447, %v3445
  %v3504 = vpack.c.b16 %v3450, %v3448
  %v3505 = vpack.c.b16 %v3451, %v3449
  %v3506 = vpack.c.b16 %v3454, %v3452
  %v3507 = vpack.c.b16 %v3455, %v3453
  %v3508 = vpack.c.b16 %v3458, %v3456
  %v3509 = vpack.c.b16 %v3459, %v3457
  %v3510 = vpack.c.b16 %v3462, %v3460
  %v3511 = vpack.c.b16 %v3463, %v3461
  %3560 = vmatprep.subr.bf16.mxu0 %v3465
  %3561 = vmatpush1.bf16.msra.mxu0 %v3464
  %3562 = vmatprep.subr.bf16.mxu0 %v3467
  %3563 = vmatpush1.bf16.msra.mxu0 %v3466
  %3564 = vmatprep.subr.bf16.mxu0 %v3469
  %3565 = vmatpush1.bf16.msra.mxu0 %v3468
  %3566 = vmatprep.subr.bf16.mxu0 %v3471
  %3567 = vmatpush1.bf16.msra.mxu0 %v3470
  %3568 = vmatprep.subr.bf16.mxu0 %v3473
  %3569 = vmatpush1.bf16.msra.mxu0 %v3472
  %3570 = vmatprep.subr.bf16.mxu0 %v3475
  %3571 = vmatpush1.bf16.msra.mxu0 %v3474
  %3572 = vmatprep.subr.bf16.mxu0 %v3477
  %3573 = vmatpush1.bf16.msra.mxu0 %v3476
  %3574 = vmatprep.subr.bf16.mxu0 %v3479
  %3575 = vmatpush1.bf16.msra.mxu0 %v3478
  %3576 = vmatprep.subr.bf16.mxu0 %v3481
  %3577 = vmatpush1.bf16.msra.mxu0 %v3480
  %3578 = vmatprep.subr.bf16.mxu0 %v3483
  %3579 = vmatpush1.bf16.msra.mxu0 %v3482
  %3580 = vmatprep.subr.bf16.mxu0 %v3485
  %3581 = vmatpush1.bf16.msra.mxu0 %v3484
  %3582 = vmatprep.subr.bf16.mxu0 %v3487
  %3583 = vmatpush1.bf16.msra.mxu0 %v3486
  %3584 = vmatprep.subr.bf16.mxu0 %v3489
  %3585 = vmatpush1.bf16.msra.mxu0 %v3488
  %3586 = vmatprep.subr.bf16.mxu0 %v3491
  %3587 = vmatpush1.bf16.msra.mxu0 %v3490
  %3588 = vmatprep.subr.bf16.mxu0 %v3493
  %3589 = vmatpush1.bf16.msra.mxu0 %v3492
  %3590 = vmatprep.subr.bf16.mxu0 %v3495
  %3591 = vmatpush1.bf16.msra.mxu0 %v3494
  %3592 = vmatprep.mubr.bf16.mxu0 %v3258
  %3593 = vmatmul.mubr.bf16.gmra.mrb[0].mxu0 %v3257
  %v3594 = vpop.f32.mrb[0].mxu0
  %v3595 = vadd.f32 %v3313, %v3594
  %v3596 = vpop.f32.mrb[0].mxu0
  %v3597 = vadd.f32 %v3317, %v3596
  %v3598 = vpop.f32.mrb[0].mxu0
  %v3599 = vadd.f32 %v3313, %v3598
  %v3600 = vpop.f32.mrb[0].mxu0
  %v3601 = vadd.f32 %v3317, %v3600
  %3602 = vdwg.mxu0
  %3603 = vmatprep.subr.bf16.mxu0 %v3497
  %3604 = vmatpush1.bf16.msra.mxu0 %v3496
  %3605 = vmatprep.subr.bf16.mxu0 %v3499
  %3606 = vmatpush1.bf16.msra.mxu0 %v3498
  %3607 = vmatprep.subr.bf16.mxu0 %v3501
  %3608 = vmatpush1.bf16.msra.mxu0 %v3500
  %3609 = vmatprep.subr.bf16.mxu0 %v3503
  %3610 = vmatpush1.bf16.msra.mxu0 %v3502
  %3611 = vmatprep.subr.bf16.mxu0 %v3505
  %3612 = vmatpush1.bf16.msra.mxu0 %v3504
  %3613 = vmatprep.subr.bf16.mxu0 %v3507
  %3614 = vmatpush1.bf16.msra.mxu0 %v3506
  %3615 = vmatprep.subr.bf16.mxu0 %v3509
  %3616 = vmatpush1.bf16.msra.mxu0 %v3508
  %3617 = vmatprep.subr.bf16.mxu0 %v3511
  %3618 = vmatpush1.bf16.msra.mxu0 %v3510
  %3619 = vmatprep.subr.bf16.mxu0 0
  %3620 = vmatpush1.bf16.msra.mxu0 0
  %3621 = vmatprep.subr.bf16.mxu0 0
  %3622 = vmatpush1.bf16.msra.mxu0 0
  %3623 = vmatprep.subr.bf16.mxu0 0
  %3624 = vmatpush1.bf16.msra.mxu0 0
  %3625 = vmatprep.subr.bf16.mxu0 0
  %3626 = vmatpush1.bf16.msra.mxu0 0
  %3627 = vmatprep.subr.bf16.mxu0 0
  %3628 = vmatpush1.bf16.msra.mxu0 0
  %3629 = vmatprep.subr.bf16.mxu0 0
  %3630 = vmatpush1.bf16.msra.mxu0 0
  %3631 = vmatprep.subr.bf16.mxu0 0
  %3632 = vmatpush1.bf16.msra.mxu0 0
  %3633 = vmatprep.subr.bf16.mxu0 0
  %3634 = vmatpush1.bf16.msra.mxu0 0
  %3635 = vmatprep.mubr.bf16.mxu0 0
  %3636 = vmatmul.mubr.bf16.gmra.mrb[0].mxu0 %v3259
  %v3637 = vpop.f32.mrb[0].mxu0
  %v3638 = vadd.f32 %v3595, %v3637
  %v3639 = vpop.f32.mrb[0].mxu0
  %v3640 = vadd.f32 %v3597, %v3639
  %v3641 = vpop.f32.mrb[0].mxu0
  %v3642 = vadd.f32 %v3599, %v3641
  %v3643 = vpop.f32.mrb[0].mxu0
  %v3644 = vadd.f32 %v3601, %v3643
  %3645 = vdwg.mxu0
  %v3646 = vmax.f32 %v3638, 0.0
  %v3647 = vmax.f32 %v3640, 0.0
  %v3648 = vmax.f32 %v3642, 0.0
  %v3649 = vmax.f32 %v3644, 0.0
  %v3650 = vpack.c.bf16 %v3648, %v3646
  %v3651 = vpack.c.bf16 %v3649, %v3647
  %v3652 = vld [vmem:[%s7] sm:$0xf]
  %v3653 = vld [vmem:[%s7 + $0x4] sm:$0xf]
  %v3654 = vld [vmem:[%s7 + $0x8] sm:$0xf]
  %v3655 = vld [vmem:[%s7 + $0xc] sm:$0xf]
  %v3656 = vld [vmem:[%s7 + $0x10] sm:$0xf]
  %v3657 = vld [vmem:[%s7 + $0x14] sm:$0xf]
  %v3658 = vld [vmem:[%s7 + $0x18] sm:$0xf]
  %v3659 = vld [vmem:[%s7 + $0x1c] sm:$0xf]
  %v3660 = vld [vmem:[%s7 + $0x20] sm:$0xf]
  %v3661 = vld [vmem:[%s7 + $0x24] sm:$0xf]
  %v3662 = vld [vmem:[%s7 + $0x28] sm:$0xf]
  %v3663 = vld [vmem:[%s7 + $0x2c] sm:$0xf]
  %v3664 = vld [vmem:[%s7 + $0x30] sm:$0xf]
  %v3665 = vld [vmem:[%s7 + $0x34] sm:$0xf]
  %v3666 = vld [vmem:[%s7 + $0x38] sm:$0xf]
  %v3667 = vld [vmem:[%s7 + $0x3c] sm:$0xf]
  %v3668 = vld [vmem:[%s7 + $0x40] sm:$0xf]
  %v3669 = vld [vmem:[%s7 + $0x44] sm:$0xf]
  %v3670 = vld [vmem:[%s7 + $0x48] sm:$0xf]
  %v3671 = vld [vmem:[%s7 + $0x4c] sm:$0xf]
  %v3672 = vld [vmem:[%s7 + $0x50] sm:$0xf]
  %v3673 = vld [vmem:[%s7 + $0x54] sm:$0xf]
  %v3674 = vld [vmem:[%s7 + $0x58] sm:$0xf]
  %v3675 = vld [vmem:[%s7 + $0x5c] sm:$0xf]
  %v3676 = vld [vmem:[%s7 + $0x60] sm:$0xf]
  %v3677 = vld [vmem:[%s7 + $0x64] sm:$0xf]
  %v3678 = vld [vmem:[%s7 + $0x68] sm:$0xf]
  %v3679 = vld [vmem:[%s7 + $0x6c] sm:$0xf]
  %v3680 = vld [vmem:[%s7 + $0x70] sm:$0xf]
  %v3681 = vld [vmem:[%s7 + $0x74] sm:$0xf]
  %v3682 = vld [vmem:[%s7 + $0x78] sm:$0xf]
  %v3683 = vld [vmem:[%s7 + $0x7c] sm:$0xf]
  %v3684 = vld [vmem:[%s8] sm:$0x1]
  %v3686 = vlaneseq
  %v3687 = vshrl.u32 %v3686, 7
  %v3688 = vsub.s32 0, %v3687
  %v3689 = vrot.slane %v3684, %v3688
  %v3723 = vunpack.c.l.b16 %v3652
  %v3724 = vunpack.c.l.b16 %v3653
  %v3725 = vunpack.c.l.b16 %v3654
  %v3726 = vunpack.c.l.b16 %v3655
  %v3727 = vunpack.c.l.b16 %v3656
  %v3728 = vunpack.c.l.b16 %v3657
  %v3729 = vunpack.c.l.b16 %v3658
  %v3730 = vunpack.c.l.b16 %v3659
  %v3731 = vunpack.c.l.b16 %v3660
  %v3732 = vunpack.c.l.b16 %v3661
  %v3733 = vunpack.c.l.b16 %v3662
  %v3734 = vunpack.c.l.b16 %v3663
  %v3735 = vunpack.c.l.b16 %v3664
  %v3736 = vunpack.c.l.b16 %v3665
  %v3737 = vunpack.c.l.b16 %v3666
  %v3738 = vunpack.c.l.b16 %v3667
  %v3739 = vunpack.c.l.b16 %v3668
  %v3740 = vunpack.c.l.b16 %v3669
  %v3741 = vunpack.c.l.b16 %v3670
  %v3742 = vunpack.c.l.b16 %v3671
  %v3743 = vunpack.c.l.b16 %v3672
  %v3744 = vunpack.c.l.b16 %v3673
  %v3745 = vunpack.c.l.b16 %v3674
  %v3746 = vunpack.c.l.b16 %v3675
  %v3747 = vunpack.c.l.b16 %v3676
  %v3748 = vunpack.c.l.b16 %v3677
  %v3749 = vunpack.c.l.b16 %v3678
  %v3750 = vunpack.c.l.b16 %v3679
  %v3751 = vunpack.c.l.b16 %v3680
  %v3752 = vunpack.c.l.b16 %v3681
  %v3753 = vunpack.c.l.b16 %v3682
  %v3754 = vunpack.c.l.b16 %v3683
  %v3755 = vpack.c.b16 %v3724, %v3723
  %v3756 = vpack.c.b16 %v3726, %v3725
  %v3757 = vpack.c.b16 %v3728, %v3727
  %v3758 = vpack.c.b16 %v3730, %v3729
  %v3759 = vpack.c.b16 %v3732, %v3731
  %v3760 = vpack.c.b16 %v3734, %v3733
  %v3761 = vpack.c.b16 %v3736, %v3735
  %v3762 = vpack.c.b16 %v3738, %v3737
  %v3763 = vpack.c.b16 %v3740, %v3739
  %v3764 = vpack.c.b16 %v3742, %v3741
  %v3765 = vpack.c.b16 %v3744, %v3743
  %v3766 = vpack.c.b16 %v3746, %v3745
  %v3767 = vpack.c.b16 %v3748, %v3747
  %v3768 = vpack.c.b16 %v3750, %v3749
  %v3769 = vpack.c.b16 %v3752, %v3751
  %v3770 = vpack.c.b16 %v3754, %v3753
  %3787 = vmatprep.subr.bf16.mxu0 0
  %3788 = vmatpush1.bf16.msra.mxu0 %v3755
  %3789 = vmatprep.subr.bf16.mxu0 0
  %3790 = vmatpush1.bf16.msra.mxu0 %v3756
  %3791 = vmatprep.subr.bf16.mxu0 0
  %3792 = vmatpush1.bf16.msra.mxu0 %v3757
  %3793 = vmatprep.subr.bf16.mxu0 0
  %3794 = vmatpush1.bf16.msra.mxu0 %v3758
  %3795 = vmatprep.subr.bf16.mxu0 0
  %3796 = vmatpush1.bf16.msra.mxu0 %v3759
  %3797 = vmatprep.subr.bf16.mxu0 0
  %3798 = vmatpush1.bf16.msra.mxu0 %v3760
  %3799 = vmatprep.subr.bf16.mxu0 0
  %3800 = vmatpush1.bf16.msra.mxu0 %v3761
  %3801 = vmatprep.subr.bf16.mxu0 0
  %3802 = vmatpush1.bf16.msra.mxu0 %v3762
  %3803 = vmatprep.subr.bf16.mxu0 0
  %3804 = vmatpush1.bf16.msra.mxu0 %v3763
  %3805 = vmatprep.subr.bf16.mxu0 0
  %3806 = vmatpush1.bf16.msra.mxu0 %v3764
  %3807 = vmatprep.subr.bf16.mxu0 0
  %3808 = vmatpush1.bf16.msra.mxu0 %v3765
  %3809 = vmatprep.subr.bf16.mxu0 0
  %3810 = vmatpush1.bf16.msra.mxu0 %v3766
  %3811 = vmatprep.subr.bf16.mxu0 0
  %3812 = vmatpush1.bf16.msra.mxu0 %v3767
  %3813 = vmatprep.subr.bf16.mxu0 0
  %3814 = vmatpush1.bf16.msra.mxu0 %v3768
  %3815 = vmatprep.subr.bf16.mxu0 0
  %3816 = vmatpush1.bf16.msra.mxu0 %v3769
  %3817 = vmatprep.subr.bf16.mxu0 0
  %3818 = vmatpush1.bf16.msra.mxu0 %v3770
  %3819 = vmatprep.mubr.bf16.mxu0 %v3651
  %3820 = vmatmul.mubr.bf16.gmra.mrb[0].mxu0 %v3650
  %v3821 = vpop.f32.mrb[0].mxu0
  %v3822 = vadd.f32 %v3689, %v3821
  %v3823 = vpop.f32.mrb[0].mxu0
  %v3824 = vpop.f32.mrb[0].mxu0
  %v3825 = vadd.f32 %v3689, %v3824
  %v3826 = vpop.f32.mrb[0].mxu0
  %3827 = vdwg.mxu0
  %v3828 = vmax.f32 %v3822, 0.0
  %v3829 = vmax.f32 %v3825, 0.0
  %v3830 = vpack.c.bf16 %v3829, %v3828
  %v3831 = vld [vmem:[%s9] sm:$0xf]
  %v3832 = vld [vmem:[%s9 + $0x4] sm:$0xf]
  %v3833 = vld [vmem:[%s9 + $0x8] sm:$0xf]
  %v3834 = vld [vmem:[%s9 + $0xc] sm:$0xf]
  %v3835 = vld [vmem:[%s9 + $0x10] sm:$0xf]
  %v3836 = vld [vmem:[%s9 + $0x14] sm:$0xf]
  %v3837 = vld [vmem:[%s9 + $0x18] sm:$0xf]
  %v3838 = vld [vmem:[%s9 + $0x1c] sm:$0xf]
  %v3839 = vld [vmem:[%s9 + $0x20] sm:$0xf]
  %v3840 = vld [vmem:[%s9 + $0x24] sm:$0xf]
  %v3841 = vld [vmem:[%s9 + $0x28] sm:$0xf]
  %v3842 = vld [vmem:[%s9 + $0x2c] sm:$0xf]
  %v3843 = vld [vmem:[%s9 + $0x30] sm:$0xf]
  %v3844 = vld [vmem:[%s9 + $0x34] sm:$0xf]
  %v3845 = vld [vmem:[%s9 + $0x38] sm:$0xf]
  %v3846 = vld [vmem:[%s9 + $0x3c] sm:$0xf]
  %v3847 = vld [vmem:[%s10] sm:$0x1]
  %v3849 = vlaneseq
  %v3850 = vshrl.u32 %v3849, 7
  %v3851 = vsub.s32 0, %v3850
  %v3852 = vrot.slane %v3847, %v3851
  %v3870 = vunpack.c.l.b16 %v3831
  %v3871 = vunpack.c.l.b16 %v3832
  %v3872 = vunpack.c.l.b16 %v3833
  %v3873 = vunpack.c.l.b16 %v3834
  %v3874 = vunpack.c.l.b16 %v3835
  %v3875 = vunpack.c.l.b16 %v3836
  %v3876 = vunpack.c.l.b16 %v3837
  %v3877 = vunpack.c.l.b16 %v3838
  %v3878 = vunpack.c.l.b16 %v3839
  %v3879 = vunpack.c.l.b16 %v3840
  %v3880 = vunpack.c.l.b16 %v3841
  %v3881 = vunpack.c.l.b16 %v3842
  %v3882 = vunpack.c.l.b16 %v3843
  %v3883 = vunpack.c.l.b16 %v3844
  %v3884 = vunpack.c.l.b16 %v3845
  %v3885 = vunpack.c.l.b16 %v3846
  %v3886 = vpack.c.b16 %v3871, %v3870
  %v3887 = vpack.c.b16 %v3873, %v3872
  %v3888 = vpack.c.b16 %v3875, %v3874
  %v3889 = vpack.c.b16 %v3877, %v3876
  %v3890 = vpack.c.b16 %v3879, %v3878
  %v3891 = vpack.c.b16 %v3881, %v3880
  %v3892 = vpack.c.b16 %v3883, %v3882
  %v3893 = vpack.c.b16 %v3885, %v3884
  %3902 = vmatprep.subr.bf16.mxu0 0
  %3903 = vmatpush1.bf16.msra.mxu0 %v3886
  %3904 = vmatprep.subr.bf16.mxu0 0
  %3905 = vmatpush1.bf16.msra.mxu0 %v3887
  %3906 = vmatprep.subr.bf16.mxu0 0
  %3907 = vmatpush1.bf16.msra.mxu0 %v3888
  %3908 = vmatprep.subr.bf16.mxu0 0
  %3909 = vmatpush1.bf16.msra.mxu0 %v3889
  %3910 = vmatprep.subr.bf16.mxu0 0
  %3911 = vmatpush1.bf16.msra.mxu0 %v3890
  %3912 = vmatprep.subr.bf16.mxu0 0
  %3913 = vmatpush1.bf16.msra.mxu0 %v3891
  %3914 = vmatprep.subr.bf16.mxu0 0
  %3915 = vmatpush1.bf16.msra.mxu0 %v3892
  %3916 = vmatprep.subr.bf16.mxu0 0
  %3917 = vmatpush1.bf16.msra.mxu0 %v3893
  %3918 = vmatprep.subr.bf16.mxu0 0
  %3919 = vmatpush1.bf16.msra.mxu0 0
  %3920 = vmatprep.subr.bf16.mxu0 0
  %3921 = vmatpush1.bf16.msra.mxu0 0
  %3922 = vmatprep.subr.bf16.mxu0 0
  %3923 = vmatpush1.bf16.msra.mxu0 0
  %3924 = vmatprep.subr.bf16.mxu0 0
  %3925 = vmatpush1.bf16.msra.mxu0 0
  %3926 = vmatprep.subr.bf16.mxu0 0
  %3927 = vmatpush1.bf16.msra.mxu0 0
  %3928 = vmatprep.subr.bf16.mxu0 0
  %3929 = vmatpush1.bf16.msra.mxu0 0
  %3930 = vmatprep.subr.bf16.mxu0 0
  %3931 = vmatpush1.bf16.msra.mxu0 0
  %3932 = vmatprep.subr.bf16.mxu0 0
  %3933 = vmatpush1.bf16.msra.mxu0 0
  %3934 = vmatprep.mubr.bf16.mxu0 0
  %3935 = vmatmul.mubr.bf16.gmra.mrb[0].mxu0 %v3830
  %v3936 = vpop.f32.mrb[0].mxu0
  %v3937 = vadd.f32 %v3852, %v3936
  %v3938 = vpop.f32.mrb[0].mxu0
  %v3939 = vpop.f32.mrb[0].mxu0
  %v3940 = vadd.f32 %v3852, %v3939
  %v3941 = vpop.f32.mrb[0].mxu0
  %3942 = vdwg.mxu0
  %3943 = vmax.xlane.f32.xlu0 %v3937
  %v3944 = vpop.xlane.xlu0 %3943
  %3945 = vmax.xlane.f32.xlu0 %v3940
  %v3946 = vpop.xlane.xlu0 %3945
  %v3947 = vsub.f32 %v3937, %v3944
  %v3948 = vsub.f32 %v3940, %v3946
  %v3949 = vmul.f32 %v3947, 1.442695
  %v3950 = vpow.pop %v3949
  %v3951 = vmul.f32 %v3948, 1.442695
  %v3952 = vpow.pop %v3951
  %3953 = vadd.xlane.f32.xlu0 %v3950
  %v3954 = vpop.xlane.xlu0 %3953
  %3955 = vadd.xlane.f32.xlu0 %v3952
  %v3956 = vpop.xlane.xlu0 %3955
  %v3957 = vlog2.pop %v3954
  %v3958 = vmul.f32 %v3957, 0.6931472
  %v3959 = vlog2.pop %v3956
  %v3960 = vmul.f32 %v3959, 0.6931472
  %v3961 = vsub.f32 %v3947, %v3958
  %v3962 = vsub.f32 %v3948, %v3960
  %3963 = vst [vmem:[%s11] sm:$0xff] %v3961
  %3964 = vst [vmem:[%s11 + $0x8] sm:$0xff] %v3962
  // Predicated region
  $region46: #{neural_net_forward.1} parent=0 // pred_check
    _
  $region47: #{neural_net_forward.1} parent=0 // pred_check_branch
    %3966 = sbr.rel (0) target = $region49
  $region48: #{neural_net_forward.1} parent=0 // pred_region
    _
  $region49: #{neural_net_forward.1} parent=0 // pred_fallthru
    _
  // Predicated region
  $region50: #{neural_net_forward.1} parent=0 // pred_check
    _
  $region51: #{neural_net_forward.1} parent=0 // pred_check_branch
    %3968 = sbr.rel (0) target = $region53
  $region52: #{neural_net_forward.1} parent=0 // pred_region
    _
  $region53: #{neural_net_forward.1} parent=0 // pred_fallthru
    _

</llo_original>
